<compile_context>
chip_gen: v6e
topology: v6e:2x2x1
jax: 0.10.0
libtpu: 0.0.40
codegen_flags: <defaults>
</compile_context>

<pallas_src>
import functools

import numpy as np
import jax
import jax.numpy as jnp
from jax import lax
from jax.experimental import pallas as pl
from jax.experimental.pallas import tpu as pltpu


# ---------------------------------------------------------------------------
# Small-shape config (stands in for: 44100->32000 resample, n_mels=128, 998 frames,
# patch 16x16, embed dim 768, 12 heads, depth 12).
# ---------------------------------------------------------------------------
ORIG_FS = 64000          # constructor arg `original_fs` (integer multiple of PASST_FS here)
PASST_FS = 32000         # Passt.PASST_FS
DECIM = ORIG_FS // PASST_FS   # integer decimation factor (2)
RS_P = 128               # resample outputs per block -> lane-dense (.., 128) output tiles
RS_PAD = 32              # framing halo, >= windowed-sinc support (~25 samples)
LOWPASS_WIDTH = 6

N_FFT = 32
WIN = 32
HOP = 16
N_FREQ = N_FFT // 2 + 1  # 17 real DFT bins
N_FREQ_PAD = 64          # [cos | sin] -> exactly 128 lanes out of the DFT matmul
N_MELS = 16              # stands in for 128 mel bins
MAX_FRAMES = 120         # stands in for the specs[..., :998] crop

PATCH_H, PATCH_W = 8, 8
EMB = 128                # stands in for Passt.PASST_EMB_DIM = 768 (lane-dense)
HEADS = 4
HEAD_DIM = EMB // HEADS
DEPTH = 2
MLP_HIDDEN = 2 * EMB


# ---------------------------------------------------------------------------
# Pallas kernels
# ---------------------------------------------------------------------------
def resample_kernel(x_ref, filt_ref, o_ref):
    # x:    (B, C, NBLK, DECIM*RS_P) f32   raw audio, pre-split into output blocks
    # filt: (DECIM*RS_P + 2*RS_PAD, RS_P)  bf16 banded polyphase FIR matrix
    # o:    (B, NBLK, RS_P)           f32  resampled audio, lane-dense 128-wide blocks
    #
    # Channel mean is computed ONCE (single kernel invocation), then each output block of
    # RS_P samples is produced by framing its DECIM*RS_P input samples plus a +/-RS_PAD halo
    # (melspec-style static concat in VMEM) and one (NBLK, 320) @ (320, 128) bf16 matmul,
    # i.e. M = NBLK MXU rows instead of M = B with a dense (T_in, T_out) matrix.
    # TODO(synk): at real lengths tile NBLK over a grid with a halo-aware index_map.
    bsz = x_ref.shape[0]
    zpad = jnp.zeros((1, RS_PAD), jnp.bfloat16)
    for b in range(bsz):
        rows = jnp.mean(x_ref[b], axis=0).astype(jnp.bfloat16)      # (NBLK, DECIM*RS_P)
        left = jnp.concatenate([zpad, rows[:-1, -RS_PAD:]], axis=0)  # halo from block p-1
        right = jnp.concatenate([rows[1:, :RS_PAD], zpad], axis=0)   # halo from block p+1
        frames = jnp.concatenate([left, rows, right], axis=-1)       # (NBLK, 2P + 2*PAD)
        o_ref[b] = jnp.dot(frames, filt_ref[...],
                           preferred_element_type=jnp.float32)


def melspec_kernel(y_ref, dft_ref, mel_ref, o_ref):
    # y:   (B, T_out//HOP, HOP) f32     resampled audio, pre-reshaped by hop
    # dft: (WIN, 2*N_FREQ_PAD)  bf16    combined [cos | sin] windowed DFT matrix (128 lanes)
    # mel: (N_FREQ_PAD, N_MELS) bf16    mel filterbank (zero-padded rows)
    # o:   (B, MAX_FRAMES, N_MELS) f32  log-mel, frame-major (transpose folded into the
    #                                   XLA patch rearrange downstream)
    bsz = y_ref.shape[0]
    frames = []
    for b in range(bsz):
        rows = y_ref[b]                                              # (n_hops, HOP)
        # overlapped framing in VMEM (requires WIN == 2*HOP): frame i = [rows[i], rows[i+1]]
        frames.append(jnp.concatenate([rows[0:MAX_FRAMES],
                                       rows[1:MAX_FRAMES + 1]], axis=-1))
    frames = jnp.concatenate(frames, axis=0).astype(jnp.bfloat16)    # (B*MAX_FRAMES, WIN)
    spec = jnp.dot(frames, dft_ref[...],
                   preferred_element_type=jnp.float32)               # one MXU pass: [re | im]
    re = spec[:, :N_FREQ_PAD]
    im = spec[:, N_FREQ_PAD:]
    power = (re * re + im * im).astype(jnp.bfloat16)                 # bf16 for the mel matmul
    mel = jnp.dot(power, mel_ref[...], preferred_element_type=jnp.float32)
    logmel = jnp.log(mel + 1e-5)                                     # (B*MAX_FRAMES, N_MELS)
    for b in range(bsz):
        o_ref[b] = logmel[b * MAX_FRAMES:(b + 1) * MAX_FRAMES, :]


def _layernorm(x, g, b):
    mu = jnp.mean(x, axis=-1, keepdims=True)
    var = jnp.mean((x - mu) ** 2, axis=-1, keepdims=True)
    return (x - mu) * lax.rsqrt(var + 1e-6) * g + b


def _gelu(x):
    # TODO(synk): timm/PaSST uses erf-based GELU; tanh approximation kept here (f32 on VPU/EUP).
    return 0.5 * x * (1.0 + jnp.tanh(0.7978845608028654 * (x + 0.044715 * x * x * x)))


def vit_kernel(patches_ref, pw_ref, pb_ref, tok01_ref, posp_ref,
               ln1g_ref, ln1b_ref, wqkv_ref, bqkv_ref, wo_ref, bo_ref,
               ln2g_ref, ln2b_ref, w1_ref, b1_ref, w2_ref, b2_ref,
               fng_ref, fnb_ref, z_ref, xact, attn_sc):
    # Whole ViT in one pallas_call, grid=(DEPTH,) 'arbitrary'.
    #   - per-block weights arrive as (1, ...) slices of stacked (DEPTH, ...) arrays, so the
    #     auto-pipeline prefetches block d+1's weight slab under block d's MXU work
    #   - xact (VMEM scratch) holds the (B*N, D) activations across depth: no HBM round trips
    #   - d==0: patch embedding + cls/dist/pos assembly; d==DEPTH-1: final 2-token LN + head
    #   - batch folded into M for every position-wise matmul (M = B*N); attention runs per
    #     (batch, head) on static slices, head outputs stored to attn_sc at static lane offsets
    bf16, f32 = jnp.bfloat16, jnp.float32
    d = pl.program_id(0)
    bsz = z_ref.shape[0]
    ntok = xact.shape[0] // bsz
    npatch = ntok - 2
    dim = xact.shape[1]
    dh = dim // HEADS
    scale = 1.0 / float(np.sqrt(dh))

    @pl.when(d == 0)
    def _():
        emb = jnp.dot(patches_ref[...].astype(bf16), pw_ref[...],
                      preferred_element_type=f32) + pb_ref[...]      # (B*NP, D)
        parts = []
        for b in range(bsz):
            parts.append(tok01_ref[0])                               # cls/dist (+pos[0:2])
            parts.append(emb[b * npatch:(b + 1) * npatch, :] + posp_ref[0])
        xact[...] = jnp.concatenate(parts, axis=0)                   # (B*NTOK, D)

    x = xact[...]                                                    # (B*NTOK, D) f32

    # LN1 -> fused QKV projection (M = B*NTOK rows)
    h = _layernorm(x, ln1g_ref[0], ln1b_ref[0])
    qkv = jnp.dot(h.astype(bf16), wqkv_ref[0],
                  preferred_element_type=f32) + bqkv_ref[0]          # (B*NTOK, 3D)

    # Multi-head attention: per-(batch, head) static slices of qkv, softmax denominator on the
    # EUP via approx reciprocal, head outputs written straight into the attn scratch (no concat).
    for b in range(bsz):
        base = b * ntok
        for hh in range(HEADS):
            q = qkv[base:base + ntok, hh * dh:(hh + 1) * dh]
            k = qkv[base:base + ntok, dim + hh * dh:dim + (hh + 1) * dh]
            v = qkv[base:base + ntok, 2 * dim + hh * dh:2 * dim + (hh + 1) * dh]
            s = lax.dot_general(q.astype(bf16), k.astype(bf16),
                                (((1,), (1,)), ((), ())),
                                preferred_element_type=f32) * scale  # (NTOK, NTOK)
            s = s - jnp.max(s, axis=-1, keepdims=True)
            p = jnp.exp(s)
            p = p * pl.reciprocal(jnp.sum(p, axis=-1, keepdims=True), approx=True)
            attn_sc[base:base + ntok, hh * dh:(hh + 1) * dh] = jnp.dot(
                p.astype(bf16), v.astype(bf16), preferred_element_type=f32)

    # output projection + residual
    x1 = jnp.dot(attn_sc[...].astype(bf16), wo_ref[0],
                 preferred_element_type=f32) + bo_ref[0] + x

    # LN2 -> GELU MLP + residual
    h2 = _layernorm(x1, ln2g_ref[0], ln2b_ref[0])
    m = _gelu(jnp.dot(h2.astype(bf16), w1_ref[0],
                      preferred_element_type=f32) + b1_ref[0])
    xn = jnp.dot(m.astype(bf16), w2_ref[0],
                 preferred_element_type=f32) + b2_ref[0] + x1
    xact[...] = xn

    @pl.when(d == pl.num_programs(0) - 1)
    def _():
        # Final LN restricted to the cls/dist tokens, fused with z = (cls + dist) / 2.
        cls_rows = jnp.concatenate([xn[b * ntok:b * ntok + 1, :] for b in range(bsz)], axis=0)
        dst_rows = jnp.concatenate([xn[b * ntok + 1:b * ntok + 2, :] for b in range(bsz)],
                                   axis=0)
        ncls = _layernorm(cls_rows, fng_ref[...], fnb_ref[...])
        ndst = _layernorm(dst_rows, fng_ref[...], fnb_ref[...])
        z_ref[...] = 0.5 * (ncls + ndst)


# ---------------------------------------------------------------------------
# pallas_call wrappers
# ---------------------------------------------------------------------------
def _zero_index(nd, *_):
    return (0,) * nd


def _full_spec(shape):
    return pl.BlockSpec(tuple(shape), functools.partial(_zero_index, len(shape)))


def _depth_index(nd_rest, d):
    return (d,) + (0,) * nd_rest


def _depth_spec(shape):
    # shape = (DEPTH, ...): block is one depth slice, indexed by the depth grid coordinate.
    return pl.BlockSpec((1,) + tuple(shape[1:]),
                        functools.partial(_depth_index, len(shape) - 1))


def _fullblock_call(kernel, out_struct, *args):
    """Single-invocation pallas_call: every operand is one full-array VMEM block."""
    return pl.pallas_call(
        kernel, out_shape=out_struct,
        in_specs=[_full_spec(a.shape) for a in args],
        out_specs=_full_spec(out_struct.shape),
    )(*args)


def vit_encoder(params, patches, tok01, pos_patch, batch):
    ntok = pos_patch.shape[1] + 2
    blk = params["blk"]
    const_inputs = [patches, params["patch_w"], params["patch_b"], tok01, pos_patch]
    depth_inputs = [blk["ln1_g"], blk["ln1_b"], blk["w_qkv"], blk["b_qkv"],
                    blk["w_o"], blk["b_o"], blk["ln2_g"], blk["ln2_b"],
                    blk["w_mlp1"], blk["b_mlp1"], blk["w_mlp2"], blk["b_mlp2"]]
    tail_inputs = [params["final_ln_g"], params["final_ln_b"]]
    in_specs = ([_full_spec(a.shape) for a in const_inputs]
                + [_depth_spec(a.shape) for a in depth_inputs]
                + [_full_spec(a.shape) for a in tail_inputs])
    return pl.pallas_call(
        vit_kernel,
        out_shape=jax.ShapeDtypeStruct((batch, EMB), jnp.float32),
        grid=(DEPTH,),
        in_specs=in_specs,
        out_specs=_full_spec((batch, EMB)),
        scratch_shapes=[pltpu.VMEM((batch * ntok, EMB), jnp.float32),   # resident activations
                        pltpu.VMEM((batch * ntok, EMB), jnp.float32)],  # attention head slab
        compiler_params=pltpu.CompilerParams(
            dimension_semantics=("arbitrary",),
            vmem_limit_bytes=32 * 1024 * 1024),
    )(*const_inputs, *depth_inputs, *tail_inputs)


# ---------------------------------------------------------------------------
# Fixed (non-learned) transform matrices, built deterministically in numpy
# ---------------------------------------------------------------------------
def build_polyphase_filter(decim, p_out, pad, orig_fs, new_fs, lowpass_width=6):
    # Banded windowed-sinc decimation filter: W[i, j] = h(i - pad - decim*j), nonzero only on a
    # +/- support band, so the whole resample is frames(NBLK, decim*p_out+2*pad) @ W.
    cutoff = 0.99 * 0.5 * min(orig_fs, new_fs)
    support = lowpass_width * orig_fs / cutoff
    assert pad >= int(np.ceil(support)), "framing halo smaller than sinc support"
    i = np.arange(decim * p_out + 2 * pad)[:, None].astype(np.float64)
    j = np.arange(p_out)[None, :].astype(np.float64)
    t = (i - pad - decim * j) * cutoff / orig_fs
    window = np.where(np.abs(t) < lowpass_width,
                      np.cos(np.pi * t / (2.0 * lowpass_width)) ** 2, 0.0)
    w = np.sinc(t) * window * (cutoff / orig_fs)
    return w.astype(np.float32)  # (decim*p_out + 2*pad, p_out)


def _hz_to_mel(f):
    return 2595.0 * np.log10(1.0 + f / 700.0)


def _mel_to_hz(m):
    return 700.0 * (10.0 ** (m / 2595.0) - 1.0)


def build_mel_fb(n_freq, n_mels, sr):
    freqs = np.linspace(0.0, sr / 2.0, n_freq)
    mel_pts = np.linspace(_hz_to_mel(0.0), _hz_to_mel(sr / 2.0), n_mels + 2)
    hz = _mel_to_hz(mel_pts)
    fb = np.zeros((n_freq, n_mels), dtype=np.float32)
    for m in range(n_mels):
        fl, fc, fr = hz[m], hz[m + 1], hz[m + 2]
        left = (freqs - fl) / max(fc - fl, 1e-6)
        right = (fr - freqs) / max(fr - fc, 1e-6)
        fb[:, m] = np.maximum(0.0, np.minimum(left, right))
    return fb


def build_dft_matrices(win, n_fft, n_freq):
    n = np.arange(win)[:, None].astype(np.float64)
    k = np.arange(n_freq)[None, :].astype(np.float64)
    hann = 0.5 - 0.5 * np.cos(2.0 * np.pi * np.arange(win) / win)
    ang = 2.0 * np.pi * n * k / n_fft
    c = (hann[:, None] * np.cos(ang)).astype(np.float32)
    s = (-hann[:, None] * np.sin(ang)).astype(np.float32)
    return c, s


# ---------------------------------------------------------------------------
# Parameter init (synthetic, deterministic; matmul weights stored as bfloat16,
# per-block transformer weights stacked along a leading DEPTH axis)
# ---------------------------------------------------------------------------
def init_params(key, t_in):
    assert ORIG_FS % PASST_FS == 0, "integer-decimation polyphase path only"
    assert WIN == 2 * HOP, "overlapped framing assumes WIN == 2*HOP"
    t_out = t_in * PASST_FS // ORIG_FS
    assert t_in % (DECIM * RS_P) == 0 and t_out % HOP == 0
    assert MAX_FRAMES <= t_out // HOP - 1
    assert N_MELS % PATCH_H == 0 and MAX_FRAMES % PATCH_W == 0
    gh, gw = N_MELS // PATCH_H, MAX_FRAMES // PATCH_W
    n_tokens = gh * gw + 2

    keys = iter(jax.random.split(key, 16))

    def nrm(shape, dtype=jnp.bfloat16, std=0.02):
        return (std * jax.random.normal(next(keys), shape, dtype=jnp.float32)).astype(dtype)

    dft_c, dft_s = build_dft_matrices(WIN, N_FFT, N_FREQ)
    dft = np.zeros((WIN, 2 * N_FREQ_PAD), np.float32)   # combined [cos | sin], 128 lanes
    dft[:, :N_FREQ] = dft_c
    dft[:, N_FREQ_PAD:N_FREQ_PAD + N_FREQ] = dft_s
    mel = np.zeros((N_FREQ_PAD, N_MELS), np.float32)
    mel[:N_FREQ] = build_mel_fb(N_FREQ, N_MELS, PASST_FS)

    params = {
        "resample_filt": jnp.asarray(
            build_polyphase_filter(DECIM, RS_P, RS_PAD, ORIG_FS, PASST_FS, LOWPASS_WIDTH),
            dtype=jnp.bfloat16),
        "dft_comb": jnp.asarray(dft, dtype=jnp.bfloat16),
        "mel_fb": jnp.asarray(mel, dtype=jnp.bfloat16),
        "patch_w": nrm((PATCH_H * PATCH_W, EMB)),
        "patch_b": jnp.zeros((1, EMB), jnp.float32),
        "cls_token": nrm((1, 1, EMB), jnp.float32),
        "dist_token": nrm((1, 1, EMB), jnp.float32),
        "pos_emb": nrm((1, n_tokens, EMB), jnp.float32),
        "final_ln_g": jnp.ones((1, EMB), jnp.float32),
        "final_ln_b": jnp.zeros((1, EMB), jnp.float32),
        "blk": {
            "ln1_g": jnp.ones((DEPTH, 1, EMB), jnp.float32),
            "ln1_b": jnp.zeros((DEPTH, 1, EMB), jnp.float32),
            "w_qkv": nrm((DEPTH, EMB, 3 * EMB)),
            "b_qkv": jnp.zeros((DEPTH, 1, 3 * EMB), jnp.float32),
            "w_o": nrm((DEPTH, EMB, EMB)),
            "b_o": jnp.zeros((DEPTH, 1, EMB), jnp.float32),
            "ln2_g": jnp.ones((DEPTH, 1, EMB), jnp.float32),
            "ln2_b": jnp.zeros((DEPTH, 1, EMB), jnp.float32),
            "w_mlp1": nrm((DEPTH, EMB, MLP_HIDDEN)),
            "b_mlp1": jnp.zeros((DEPTH, 1, MLP_HIDDEN), jnp.float32),
            "w_mlp2": nrm((DEPTH, MLP_HIDDEN, EMB)),
            "b_mlp2": jnp.zeros((DEPTH, 1, EMB), jnp.float32),
        },
    }
    return params


# ---------------------------------------------------------------------------
# Forward pass (3 pallas_calls total: resample, melspec, full ViT)
# ---------------------------------------------------------------------------
def passt_forward(params, x):
    B, C, T_in = x.shape
    T_out = T_in * PASST_FS // ORIG_FS
    nblk = T_out // RS_P

    # (1)+(2): channel mean (once) + banded polyphase FIR resample, lane-dense output blocks.
    x4 = x.reshape(B, C, nblk, DECIM * RS_P)                     # contiguous, free in XLA
    y = _fullblock_call(resample_kernel,
                        jax.ShapeDtypeStruct((B, nblk, RS_P), jnp.float32),
                        x4, params["resample_filt"])

    # (3): fused framing + 128-lane [cos|sin] DFT power + mel + log; only the MAX_FRAMES kept
    # by the specs[..., :998] crop are computed; output is frame-major (transpose folded into
    # the patch rearrange below).
    y3 = y.reshape(B, T_out // HOP, HOP)                         # contiguous reshape
    specs_fm = _fullblock_call(melspec_kernel,
                               jax.ShapeDtypeStruct((B, MAX_FRAMES, N_MELS), jnp.float32),
                               y3, params["dft_comb"], params["mel_fb"])

    # (4)+(5): NCHW specs[:, None] -> ViT. Patch rearrange is tiny XLA glue (~15 KiB); the
    # patch-embed projection, all DEPTH transformer blocks and the cls/dist head run in ONE
    # depth-gridded Pallas kernel with VMEM-resident activations.
    gh, gw = N_MELS // PATCH_H, MAX_FRAMES // PATCH_W
    patches = specs_fm.reshape(B, gw, PATCH_W, gh, PATCH_H)
    patches = patches.transpose(0, 3, 1, 4, 2).reshape(B * gh * gw, PATCH_H * PATCH_W)

    tok01 = (jnp.concatenate([params["cls_token"], params["dist_token"]], axis=1)
             + params["pos_emb"][:, :2, :])                      # (1, 2, EMB)
    pos_patch = params["pos_emb"][:, 2:, :]                      # (1, gh*gw, EMB)

    z = vit_encoder(params, patches, tok01, pos_patch, B)        # (B, EMB)
    return z


# ---------------------------------------------------------------------------
if __name__ == "__main__":
    B, C, T_IN = 2, 2, 4096
    key = jax.random.PRNGKey(0)
    kx, kp = jax.random.split(key)
    x = jax.random.normal(kx, (B, C, T_IN), dtype=jnp.float32)
    params = init_params(kp, T_IN)

    z = jax.jit(passt_forward)(params, x)
    z = jax.block_until_ready(z)

    assert z.shape == (B, EMB), z.shape
    assert bool(jnp.all(jnp.isfinite(z)))
    print("KERNEL_OK")
</pallas_src>

<mosaic_0001>
module attributes {stable_mosaic.version = 11 : i64} {
  func.func @resample_kernel(%arg0: memref<2x2x16x256xf32, #tpu.memory_space<vmem>>, %arg1: memref<320x128xbf16, #tpu.memory_space<vmem>>, %arg2: memref<2x16x128xf32, #tpu.memory_space<vmem>>) attributes {dimension_semantics = [], scalar_prefetch = 0 : i64, scratch_operands = 0 : i64, tpu.core_type = #tpu.core_type<tc>} {
    %cst = arith.constant 0.000000e+00 : bf16
    %0 = vector.broadcast %cst : bf16 to vector<1x32xbf16>
    %c0 = arith.constant 0 : index
    %c0_0 = arith.constant 0 : index
    %c0_1 = arith.constant 0 : index
    %c0_2 = arith.constant 0 : index
    %1 = vector.load %arg0[%c0, %c0_0, %c0_1, %c0_2] : memref<2x2x16x256xf32, #tpu.memory_space<vmem>>, vector<1x2x16x256xf32>
    %2 = vector.shape_cast %1 : vector<1x2x16x256xf32> to vector<2x16x256xf32>
    %cst_3 = arith.constant dense<0.000000e+00> : vector<16x256xf32>
    %3 = vector.multi_reduction <add>, %2, %cst_3 [0] : vector<2x16x256xf32> to vector<16x256xf32>
    %cst_4 = arith.constant 2.000000e+00 : f32
    %4 = vector.broadcast %cst_4 : f32 to vector<16x256xf32>
    %5 = arith.divf %3, %4 : vector<16x256xf32>
    %6 = arith.truncf %5 : vector<16x256xf32> to vector<16x256xbf16>
    %7 = vector.extract_strided_slice %6 {offsets = [0, 224], sizes = [15, 32], strides = [1, 1]} : vector<16x256xbf16> to vector<15x32xbf16>
    %8 = tpu.concatenate %0, %7 in 0 : vector<1x32xbf16>, vector<15x32xbf16> -> vector<16x32xbf16>
    %9 = vector.extract_strided_slice %6 {offsets = [1, 0], sizes = [15, 32], strides = [1, 1]} : vector<16x256xbf16> to vector<15x32xbf16>
    %10 = tpu.concatenate %9, %0 in 0 : vector<15x32xbf16>, vector<1x32xbf16> -> vector<16x32xbf16>
    %11 = tpu.concatenate %8, %6, %10 in 1 : vector<16x32xbf16>, vector<16x256xbf16>, vector<16x32xbf16> -> vector<16x320xbf16>
    %c0_5 = arith.constant 0 : index
    %c0_6 = arith.constant 0 : index
    %12 = vector.load %arg1[%c0_5, %c0_6] : memref<320x128xbf16, #tpu.memory_space<vmem>>, vector<320x128xbf16>
    %cst_7 = arith.constant dense<0.000000e+00> : vector<16x128xf32>
    %13 = tpu.matmul %11, %12, %cst_7 {dimension_numbers = #tpu.dot_dimension_numbers<[1], [0], [0], [1], [0, 0, 1, 1], [], []>} : vector<16x320xbf16>, vector<320x128xbf16>, vector<16x128xf32> -> vector<16x128xf32>
    %c0_8 = arith.constant 0 : index
    %c0_9 = arith.constant 0 : index
    %c0_10 = arith.constant 0 : index
    %14 = vector.load %arg2[%c0_8, %c0_9, %c0_10] : memref<2x16x128xf32, #tpu.memory_space<vmem>>, vector<1x16x128xf32>
    %15 = vector.shape_cast %14 : vector<1x16x128xf32> to vector<16x128xf32>
    %16 = vector.shape_cast %13 : vector<16x128xf32> to vector<1x16x128xf32>
    tpu.vector_store %arg2[%c0_8, %c0_9, %c0_10], %16 {strides = array<i32>} : memref<2x16x128xf32, #tpu.memory_space<vmem>>, vector<1x16x128xf32>,
    %c1 = arith.constant 1 : index
    %c0_11 = arith.constant 0 : index
    %c0_12 = arith.constant 0 : index
    %c0_13 = arith.constant 0 : index
    %17 = vector.load %arg0[%c1, %c0_11, %c0_12, %c0_13] : memref<2x2x16x256xf32, #tpu.memory_space<vmem>>, vector<1x2x16x256xf32>
    %18 = vector.shape_cast %17 : vector<1x2x16x256xf32> to vector<2x16x256xf32>
    %cst_14 = arith.constant dense<0.000000e+00> : vector<16x256xf32>
    %19 = vector.multi_reduction <add>, %18, %cst_14 [0] : vector<2x16x256xf32> to vector<16x256xf32>
    %cst_15 = arith.constant 2.000000e+00 : f32
    %20 = vector.broadcast %cst_15 : f32 to vector<16x256xf32>
    %21 = arith.divf %19, %20 : vector<16x256xf32>
    %22 = arith.truncf %21 : vector<16x256xf32> to vector<16x256xbf16>
    %23 = vector.extract_strided_slice %22 {offsets = [0, 224], sizes = [15, 32], strides = [1, 1]} : vector<16x256xbf16> to vector<15x32xbf16>
    %24 = tpu.concatenate %0, %23 in 0 : vector<1x32xbf16>, vector<15x32xbf16> -> vector<16x32xbf16>
    %25 = vector.extract_strided_slice %22 {offsets = [1, 0], sizes = [15, 32], strides = [1, 1]} : vector<16x256xbf16> to vector<15x32xbf16>
    %26 = tpu.concatenate %25, %0 in 0 : vector<15x32xbf16>, vector<1x32xbf16> -> vector<16x32xbf16>
    %27 = tpu.concatenate %24, %22, %26 in 1 : vector<16x32xbf16>, vector<16x256xbf16>, vector<16x32xbf16> -> vector<16x320xbf16>
    %c0_16 = arith.constant 0 : index
    %c0_17 = arith.constant 0 : index
    %28 = vector.load %arg1[%c0_16, %c0_17] : memref<320x128xbf16, #tpu.memory_space<vmem>>, vector<320x128xbf16>
    %cst_18 = arith.constant dense<0.000000e+00> : vector<16x128xf32>
    %29 = tpu.matmul %27, %28, %cst_18 {dimension_numbers = #tpu.dot_dimension_numbers<[1], [0], [0], [1], [0, 0, 1, 1], [], []>} : vector<16x320xbf16>, vector<320x128xbf16>, vector<16x128xf32> -> vector<16x128xf32>
    %c1_19 = arith.constant 1 : index
    %c0_20 = arith.constant 0 : index
    %c0_21 = arith.constant 0 : index
    %30 = vector.load %arg2[%c1_19, %c0_20, %c0_21] : memref<2x16x128xf32, #tpu.memory_space<vmem>>, vector<1x16x128xf32>
    %31 = vector.shape_cast %30 : vector<1x16x128xf32> to vector<16x128xf32>
    %32 = vector.shape_cast %29 : vector<16x128xf32> to vector<1x16x128xf32>
    tpu.vector_store %arg2[%c1_19, %c0_20, %c0_21], %32 {strides = array<i32>} : memref<2x16x128xf32, #tpu.memory_space<vmem>>, vector<1x16x128xf32>,
    return
  }
}

module attributes {stable_mosaic.version = 11 : i64} {
  func.func @melspec_kernel(%arg0: memref<2x128x16xf32, #tpu.memory_space<vmem>>, %arg1: memref<32x128xbf16, #tpu.memory_space<vmem>>, %arg2: memref<64x16xbf16, #tpu.memory_space<vmem>>, %arg3: memref<2x120x16xf32, #tpu.memory_space<vmem>>) attributes {dimension_semantics = [], scalar_prefetch = 0 : i64, scratch_operands = 0 : i64, tpu.core_type = #tpu.core_type<tc>} {
    %c0 = arith.constant 0 : index
    %c0_0 = arith.constant 0 : index
    %c0_1 = arith.constant 0 : index
    %0 = vector.load %arg0[%c0, %c0_0, %c0_1] : memref<2x128x16xf32, #tpu.memory_space<vmem>>, vector<1x128x16xf32>
    %1 = vector.shape_cast %0 : vector<1x128x16xf32> to vector<128x16xf32>
    %2 = vector.extract_strided_slice %1 {offsets = [0, 0], sizes = [120, 16], strides = [1, 1]} : vector<128x16xf32> to vector<120x16xf32>
    %3 = vector.extract_strided_slice %1 {offsets = [1, 0], sizes = [120, 16], strides = [1, 1]} : vector<128x16xf32> to vector<120x16xf32>
    %4 = tpu.concatenate %2, %3 in 1 : vector<120x16xf32>, vector<120x16xf32> -> vector<120x32xf32>
    %c1 = arith.constant 1 : index
    %c0_2 = arith.constant 0 : index
    %c0_3 = arith.constant 0 : index
    %5 = vector.load %arg0[%c1, %c0_2, %c0_3] : memref<2x128x16xf32, #tpu.memory_space<vmem>>, vector<1x128x16xf32>
    %6 = vector.shape_cast %5 : vector<1x128x16xf32> to vector<128x16xf32>
    %7 = vector.extract_strided_slice %6 {offsets = [0, 0], sizes = [120, 16], strides = [1, 1]} : vector<128x16xf32> to vector<120x16xf32>
    %8 = vector.extract_strided_slice %6 {offsets = [1, 0], sizes = [120, 16], strides = [1, 1]} : vector<128x16xf32> to vector<120x16xf32>
    %9 = tpu.concatenate %7, %8 in 1 : vector<120x16xf32>, vector<120x16xf32> -> vector<120x32xf32>
    %10 = tpu.concatenate %4, %9 in 0 : vector<120x32xf32>, vector<120x32xf32> -> vector<240x32xf32>
    %11 = arith.truncf %10 : vector<240x32xf32> to vector<240x32xbf16>
    %c0_4 = arith.constant 0 : index
    %c0_5 = arith.constant 0 : index
    %12 = vector.load %arg1[%c0_4, %c0_5] : memref<32x128xbf16, #tpu.memory_space<vmem>>, vector<32x128xbf16>
    %cst = arith.constant dense<0.000000e+00> : vector<240x128xf32>
    %13 = tpu.matmul %11, %12, %cst {dimension_numbers = #tpu.dot_dimension_numbers<[1], [0], [0], [1], [0, 0, 1, 1], [], []>} : vector<240x32xbf16>, vector<32x128xbf16>, vector<240x128xf32> -> vector<240x128xf32>
    %14 = vector.extract_strided_slice %13 {offsets = [0, 0], sizes = [240, 64], strides = [1, 1]} : vector<240x128xf32> to vector<240x64xf32>
    %15 = vector.extract_strided_slice %13 {offsets = [0, 64], sizes = [240, 64], strides = [1, 1]} : vector<240x128xf32> to vector<240x64xf32>
    %16 = arith.mulf %14, %14 : vector<240x64xf32>
    %17 = arith.mulf %15, %15 : vector<240x64xf32>
    %18 = arith.addf %16, %17 : vector<240x64xf32>
    %19 = arith.truncf %18 : vector<240x64xf32> to vector<240x64xbf16>
    %c0_6 = arith.constant 0 : index
    %c0_7 = arith.constant 0 : index
    %20 = vector.load %arg2[%c0_6, %c0_7] : memref<64x16xbf16, #tpu.memory_space<vmem>>, vector<64x16xbf16>
    %cst_8 = arith.constant dense<0.000000e+00> : vector<240x16xf32>
    %21 = tpu.matmul %19, %20, %cst_8 {dimension_numbers = #tpu.dot_dimension_numbers<[1], [0], [0], [1], [0, 0, 1, 1], [], []>} : vector<240x64xbf16>, vector<64x16xbf16>, vector<240x16xf32> -> vector<240x16xf32>
    %cst_9 = arith.constant 9.99999974E-6 : f32
    %22 = vector.broadcast %cst_9 : f32 to vector<240x16xf32>
    %23 = arith.addf %21, %22 : vector<240x16xf32>
    %24 = math.log %23 : vector<240x16xf32>
    %25 = vector.extract_strided_slice %24 {offsets = [0, 0], sizes = [120, 16], strides = [1, 1]} : vector<240x16xf32> to vector<120x16xf32>
    %c0_10 = arith.constant 0 : index
    %c0_11 = arith.constant 0 : index
    %c0_12 = arith.constant 0 : index
    %26 = vector.load %arg3[%c0_10, %c0_11, %c0_12] : memref<2x120x16xf32, #tpu.memory_space<vmem>>, vector<1x120x16xf32>
    %27 = vector.shape_cast %26 : vector<1x120x16xf32> to vector<120x16xf32>
    %28 = vector.shape_cast %25 : vector<120x16xf32> to vector<1x120x16xf32>
    tpu.vector_store %arg3[%c0_10, %c0_11, %c0_12], %28 {strides = array<i32>} : memref<2x120x16xf32, #tpu.memory_space<vmem>>, vector<1x120x16xf32>,
    %29 = vector.extract_strided_slice %24 {offsets = [120, 0], sizes = [120, 16], strides = [1, 1]} : vector<240x16xf32> to vector<120x16xf32>
    %c1_13 = arith.constant 1 : index
    %c0_14 = arith.constant 0 : index
    %c0_15 = arith.constant 0 : index
    %30 = vector.load %arg3[%c1_13, %c0_14, %c0_15] : memref<2x120x16xf32, #tpu.memory_space<vmem>>, vector<1x120x16xf32>
    %31 = vector.shape_cast %30 : vector<1x120x16xf32> to vector<120x16xf32>
    %32 = vector.shape_cast %29 : vector<120x16xf32> to vector<1x120x16xf32>
    tpu.vector_store %arg3[%c1_13, %c0_14, %c0_15], %32 {strides = array<i32>} : memref<2x120x16xf32, #tpu.memory_space<vmem>>, vector<1x120x16xf32>,
    return
  }
}

module attributes {stable_mosaic.version = 11 : i64} {
  func.func @vit_kernel(%arg0: i32, %arg1: memref<60x64xf32, #tpu.memory_space<vmem>>, %arg2: memref<64x128xbf16, #tpu.memory_space<vmem>>, %arg3: memref<1x128xf32, #tpu.memory_space<vmem>>, %arg4: memref<1x2x128xf32, #tpu.memory_space<vmem>>, %arg5: memref<1x30x128xf32, #tpu.memory_space<vmem>>, %arg6: memref<1x1x128xf32, #tpu.memory_space<vmem>>, %arg7: memref<1x1x128xf32, #tpu.memory_space<vmem>>, %arg8: memref<1x128x384xbf16, #tpu.memory_space<vmem>>, %arg9: memref<1x1x384xf32, #tpu.memory_space<vmem>>, %arg10: memref<1x128x128xbf16, #tpu.memory_space<vmem>>, %arg11: memref<1x1x128xf32, #tpu.memory_space<vmem>>, %arg12: memref<1x1x128xf32, #tpu.memory_space<vmem>>, %arg13: memref<1x1x128xf32, #tpu.memory_space<vmem>>, %arg14: memref<1x128x256xbf16, #tpu.memory_space<vmem>>, %arg15: memref<1x1x256xf32, #tpu.memory_space<vmem>>, %arg16: memref<1x256x128xbf16, #tpu.memory_space<vmem>>, %arg17: memref<1x1x128xf32, #tpu.memory_space<vmem>>, %arg18: memref<1x128xf32, #tpu.memory_space<vmem>>, %arg19: memref<1x128xf32, #tpu.memory_space<vmem>>, %arg20: memref<2x128xf32, #tpu.memory_space<vmem>>, %arg21: memref<64x128xf32, #tpu.memory_space<vmem>>, %arg22: memref<64x128xf32, #tpu.memory_space<vmem>>) attributes {dimension_semantics = [#tpu.dimension_semantics<arbitrary>], iteration_bounds = array<i64: 2>, scalar_prefetch = 0 : i64, scratch_operands = 2 : i64, tpu.core_type = #tpu.core_type<tc>, window_params = [{pipeline_mode = #tpu.pipeline_mode<synchronous>, transform_indices = @transform_0, window_bounds = array<i64: 60, 64>}, {pipeline_mode = #tpu.pipeline_mode<synchronous>, transform_indices = @transform_1, window_bounds = array<i64: 64, 128>}, {pipeline_mode = #tpu.pipeline_mode<synchronous>, transform_indices = @transform_2, window_bounds = array<i64: 1, 128>}, {pipeline_mode = #tpu.pipeline_mode<synchronous>, transform_indices = @transform_3, window_bounds = array<i64: 1, 2, 128>}, {pipeline_mode = #tpu.pipeline_mode<synchronous>, transform_indices = @transform_4, window_bounds = array<i64: 1, 30, 128>}, {transform_indices = @transform_5, window_bounds = array<i64: 1, 1, 128>}, {transform_indices = @transform_6, window_bounds = array<i64: 1, 1, 128>}, {transform_indices = @transform_7, window_bounds = array<i64: 1, 128, 384>}, {transform_indices = @transform_8, window_bounds = array<i64: 1, 1, 384>}, {transform_indices = @transform_9, window_bounds = array<i64: 1, 128, 128>}, {transform_indices = @transform_10, window_bounds = array<i64: 1, 1, 128>}, {transform_indices = @transform_11, window_bounds = array<i64: 1, 1, 128>}, {transform_indices = @transform_12, window_bounds = array<i64: 1, 1, 128>}, {transform_indices = @transform_13, window_bounds = array<i64: 1, 128, 256>}, {transform_indices = @transform_14, window_bounds = array<i64: 1, 1, 256>}, {transform_indices = @transform_15, window_bounds = array<i64: 1, 256, 128>}, {transform_indices = @transform_16, window_bounds = array<i64: 1, 1, 128>}, {pipeline_mode = #tpu.pipeline_mode<synchronous>, transform_indices = @transform_17, window_bounds = array<i64: 1, 128>}, {pipeline_mode = #tpu.pipeline_mode<synchronous>, transform_indices = @transform_18, window_bounds = array<i64: 1, 128>}, {pipeline_mode = #tpu.pipeline_mode<synchronous>, transform_indices = @transform_19, window_bounds = array<i64: 2, 128>}]} {
    %c0_i32 = arith.constant 0 : i32
    %0 = arith.cmpi eq, %arg0, %c0_i32 : i32
    %1 = arith.extui %0 : i1 to i32
    %c0_i32_0 = arith.constant 0 : i32
    %2 = arith.cmpi ne, %1, %c0_i32_0 : i32
    scf.if %2 {
      %c0_113 = arith.constant 0 : index
      %c0_114 = arith.constant 0 : index
      %284 = vector.load %arg1[%c0_113, %c0_114] : memref<60x64xf32, #tpu.memory_space<vmem>>, vector<60x64xf32>
      %285 = arith.truncf %284 : vector<60x64xf32> to vector<60x64xbf16>
      %c0_115 = arith.constant 0 : index
      %c0_116 = arith.constant 0 : index
      %286 = vector.load %arg2[%c0_115, %c0_116] : memref<64x128xbf16, #tpu.memory_space<vmem>>, vector<64x128xbf16>
      %cst_117 = arith.constant dense<0.000000e+00> : vector<60x128xf32>
      %287 = tpu.matmul %285, %286, %cst_117 {dimension_numbers = #tpu.dot_dimension_numbers<[1], [0], [0], [1], [0, 0, 1, 1], [], []>} : vector<60x64xbf16>, vector<64x128xbf16>, vector<60x128xf32> -> vector<60x128xf32>
      %c0_118 = arith.constant 0 : index
      %c0_119 = arith.constant 0 : index
      %288 = vector.load %arg3[%c0_118, %c0_119] : memref<1x128xf32, #tpu.memory_space<vmem>>, vector<1x128xf32>
      %289 = vector.broadcast %288 : vector<1x128xf32> to vector<60x128xf32>
      %290 = arith.addf %287, %289 : vector<60x128xf32>
      %c0_120 = arith.constant 0 : index
      %c0_121 = arith.constant 0 : index
      %c0_122 = arith.constant 0 : index
      %291 = vector.load %arg4[%c0_120, %c0_121, %c0_122] : memref<1x2x128xf32, #tpu.memory_space<vmem>>, vector<1x2x128xf32>
      %292 = vector.shape_cast %291 : vector<1x2x128xf32> to vector<2x128xf32>
      %293 = vector.extract_strided_slice %290 {offsets = [0, 0], sizes = [30, 128], strides = [1, 1]} : vector<60x128xf32> to vector<30x128xf32>
      %c0_123 = arith.constant 0 : index
      %c0_124 = arith.constant 0 : index
      %c0_125 = arith.constant 0 : index
      %294 = vector.load %arg5[%c0_123, %c0_124, %c0_125] : memref<1x30x128xf32, #tpu.memory_space<vmem>>, vector<1x30x128xf32>
      %295 = vector.shape_cast %294 : vector<1x30x128xf32> to vector<30x128xf32>
      %296 = arith.addf %293, %295 : vector<30x128xf32>
      %c0_126 = arith.constant 0 : index
      %c0_127 = arith.constant 0 : index
      %c0_128 = arith.constant 0 : index
      %297 = vector.load %arg4[%c0_126, %c0_127, %c0_128] : memref<1x2x128xf32, #tpu.memory_space<vmem>>, vector<1x2x128xf32>
      %298 = vector.shape_cast %297 : vector<1x2x128xf32> to vector<2x128xf32>
      %299 = vector.extract_strided_slice %290 {offsets = [30, 0], sizes = [30, 128], strides = [1, 1]} : vector<60x128xf32> to vector<30x128xf32>
      %c0_129 = arith.constant 0 : index
      %c0_130 = arith.constant 0 : index
      %c0_131 = arith.constant 0 : index
      %300 = vector.load %arg5[%c0_129, %c0_130, %c0_131] : memref<1x30x128xf32, #tpu.memory_space<vmem>>, vector<1x30x128xf32>
      %301 = vector.shape_cast %300 : vector<1x30x128xf32> to vector<30x128xf32>
      %302 = arith.addf %299, %301 : vector<30x128xf32>
      %303 = tpu.concatenate %292, %296, %298, %302 in 0 : vector<2x128xf32>, vector<30x128xf32>, vector<2x128xf32>, vector<30x128xf32> -> vector<64x128xf32>
      %c0_132 = arith.constant 0 : index
      %c0_133 = arith.constant 0 : index
      %304 = vector.load %arg21[%c0_132, %c0_133] : memref<64x128xf32, #tpu.memory_space<vmem>>, vector<64x128xf32>
      tpu.vector_store %arg21[%c0_132, %c0_133], %303 {strides = array<i32>} : memref<64x128xf32, #tpu.memory_space<vmem>>, vector<64x128xf32>,
    } else {
    }
    %c0 = arith.constant 0 : index
    %c0_1 = arith.constant 0 : index
    %3 = vector.load %arg21[%c0, %c0_1] : memref<64x128xf32, #tpu.memory_space<vmem>>, vector<64x128xf32>
    %c0_2 = arith.constant 0 : index
    %c0_3 = arith.constant 0 : index
    %c0_4 = arith.constant 0 : index
    %4 = vector.load %arg6[%c0_2, %c0_3, %c0_4] : memref<1x1x128xf32, #tpu.memory_space<vmem>>, vector<1x1x128xf32>
    %5 = vector.shape_cast %4 : vector<1x1x128xf32> to vector<1x128xf32>
    %c0_5 = arith.constant 0 : index
    %c0_6 = arith.constant 0 : index
    %c0_7 = arith.constant 0 : index
    %6 = vector.load %arg7[%c0_5, %c0_6, %c0_7] : memref<1x1x128xf32, #tpu.memory_space<vmem>>, vector<1x1x128xf32>
    %7 = vector.shape_cast %6 : vector<1x1x128xf32> to vector<1x128xf32>
    %cst = arith.constant dense<0.000000e+00> : vector<64xf32>
    %8 = vector.multi_reduction <add>, %3, %cst [1] : vector<64x128xf32> to vector<64xf32>
    %9 = vector.shape_cast %8 : vector<64xf32> to vector<64x1xf32>
    %cst_8 = arith.constant 1.280000e+02 : f32
    %10 = vector.broadcast %cst_8 : f32 to vector<64x1xf32>
    %11 = arith.divf %9, %10 : vector<64x1xf32>
    %12 = vector.broadcast %11 : vector<64x1xf32> to vector<64x128xf32>
    %13 = arith.subf %3, %12 : vector<64x128xf32>
    %14 = arith.mulf %13, %13 : vector<64x128xf32>
    %cst_9 = arith.constant dense<0.000000e+00> : vector<64xf32>
    %15 = vector.multi_reduction <add>, %14, %cst_9 [1] : vector<64x128xf32> to vector<64xf32>
    %16 = vector.shape_cast %15 : vector<64xf32> to vector<64x1xf32>
    %cst_10 = arith.constant 1.280000e+02 : f32
    %17 = vector.broadcast %cst_10 : f32 to vector<64x1xf32>
    %18 = arith.divf %16, %17 : vector<64x1xf32>
    %19 = vector.broadcast %11 : vector<64x1xf32> to vector<64x128xf32>
    %20 = arith.subf %3, %19 : vector<64x128xf32>
    %cst_11 = arith.constant 9.99999997E-7 : f32
    %21 = vector.broadcast %cst_11 : f32 to vector<64x1xf32>
    %22 = arith.addf %18, %21 : vector<64x1xf32>
    %23 = math.rsqrt %22 : vector<64x1xf32>
    %24 = vector.broadcast %23 : vector<64x1xf32> to vector<64x128xf32>
    %25 = arith.mulf %20, %24 : vector<64x128xf32>
    %26 = vector.broadcast %5 : vector<1x128xf32> to vector<64x128xf32>
    %27 = arith.mulf %25, %26 : vector<64x128xf32>
    %28 = vector.broadcast %7 : vector<1x128xf32> to vector<64x128xf32>
    %29 = arith.addf %27, %28 : vector<64x128xf32>
    %30 = arith.truncf %29 : vector<64x128xf32> to vector<64x128xbf16>
    %c0_12 = arith.constant 0 : index
    %c0_13 = arith.constant 0 : index
    %c0_14 = arith.constant 0 : index
    %31 = vector.load %arg8[%c0_12, %c0_13, %c0_14] : memref<1x128x384xbf16, #tpu.memory_space<vmem>>, vector<1x128x384xbf16>
    %32 = vector.shape_cast %31 : vector<1x128x384xbf16> to vector<128x384xbf16>
    %cst_15 = arith.constant dense<0.000000e+00> : vector<64x384xf32>
    %33 = tpu.matmul %30, %32, %cst_15 {dimension_numbers = #tpu.dot_dimension_numbers<[1], [0], [0], [1], [0, 0, 1, 1], [], []>} : vector<64x128xbf16>, vector<128x384xbf16>, vector<64x384xf32> -> vector<64x384xf32>
    %c0_16 = arith.constant 0 : index
    %c0_17 = arith.constant 0 : index
    %c0_18 = arith.constant 0 : index
    %34 = vector.load %arg9[%c0_16, %c0_17, %c0_18] : memref<1x1x384xf32, #tpu.memory_space<vmem>>, vector<1x1x384xf32>
    %35 = vector.shape_cast %34 : vector<1x1x384xf32> to vector<1x384xf32>
    %36 = vector.broadcast %35 : vector<1x384xf32> to vector<64x384xf32>
    %37 = arith.addf %33, %36 : vector<64x384xf32>
    %38 = vector.extract_strided_slice %37 {offsets = [0, 0], sizes = [32, 32], strides = [1, 1]} : vector<64x384xf32> to vector<32x32xf32>
    %39 = vector.extract_strided_slice %37 {offsets = [0, 128], sizes = [32, 32], strides = [1, 1]} : vector<64x384xf32> to vector<32x32xf32>
    %40 = vector.extract_strided_slice %37 {offsets = [0, 256], sizes = [32, 32], strides = [1, 1]} : vector<64x384xf32> to vector<32x32xf32>
    %41 = arith.truncf %38 : vector<32x32xf32> to vector<32x32xbf16>
    %42 = arith.truncf %39 : vector<32x32xf32> to vector<32x32xbf16>
    %cst_19 = arith.constant dense<0.000000e+00> : vector<32x32xf32>
    %43 = tpu.matmul %41, %42, %cst_19 {dimension_numbers = #tpu.dot_dimension_numbers<[1], [1], [0], [0], [0, 0, 1, 0], [], []>} : vector<32x32xbf16>, vector<32x32xbf16>, vector<32x32xf32> -> vector<32x32xf32>
    %cst_20 = arith.constant 0.176776692 : f32
    %44 = vector.broadcast %cst_20 : f32 to vector<32x32xf32>
    %45 = arith.mulf %43, %44 : vector<32x32xf32>
    %cst_21 = arith.constant dense<0xFF800000> : vector<32xf32>
    %46 = vector.multi_reduction <maximumf>, %45, %cst_21 [1] : vector<32x32xf32> to vector<32xf32>
    %47 = vector.shape_cast %46 : vector<32xf32> to vector<32x1xf32>
    %48 = vector.broadcast %47 : vector<32x1xf32> to vector<32x32xf32>
    %49 = arith.subf %45, %48 : vector<32x32xf32>
    %50 = math.exp %49 : vector<32x32xf32>
    %cst_22 = arith.constant dense<0.000000e+00> : vector<32xf32>
    %51 = vector.multi_reduction <add>, %50, %cst_22 [1] : vector<32x32xf32> to vector<32xf32>
    %52 = vector.shape_cast %51 : vector<32xf32> to vector<32x1xf32>
    %53 = tpu.reciprocal %52 {approx = true} : vector<32x1xf32> -> vector<32x1xf32>
    %54 = vector.broadcast %53 : vector<32x1xf32> to vector<32x32xf32>
    %55 = arith.mulf %50, %54 : vector<32x32xf32>
    %56 = arith.truncf %55 : vector<32x32xf32> to vector<32x32xbf16>
    %57 = arith.truncf %40 : vector<32x32xf32> to vector<32x32xbf16>
    %cst_23 = arith.constant dense<0.000000e+00> : vector<32x32xf32>
    %58 = tpu.matmul %56, %57, %cst_23 {dimension_numbers = #tpu.dot_dimension_numbers<[1], [0], [0], [1], [0, 0, 1, 1], [], []>} : vector<32x32xbf16>, vector<32x32xbf16>, vector<32x32xf32> -> vector<32x32xf32>
    %c0_24 = arith.constant 0 : index
    %c0_25 = arith.constant 0 : index
    %59 = vector.load %arg22[%c0_24, %c0_25] : memref<64x128xf32, #tpu.memory_space<vmem>>, vector<32x32xf32>
    tpu.vector_store %arg22[%c0_24, %c0_25], %58 {strides = array<i32>} : memref<64x128xf32, #tpu.memory_space<vmem>>, vector<32x32xf32>,
    %60 = vector.extract_strided_slice %37 {offsets = [0, 32], sizes = [32, 32], strides = [1, 1]} : vector<64x384xf32> to vector<32x32xf32>
    %61 = vector.extract_strided_slice %37 {offsets = [0, 160], sizes = [32, 32], strides = [1, 1]} : vector<64x384xf32> to vector<32x32xf32>
    %62 = vector.extract_strided_slice %37 {offsets = [0, 288], sizes = [32, 32], strides = [1, 1]} : vector<64x384xf32> to vector<32x32xf32>
    %63 = arith.truncf %60 : vector<32x32xf32> to vector<32x32xbf16>
    %64 = arith.truncf %61 : vector<32x32xf32> to vector<32x32xbf16>
    %cst_26 = arith.constant dense<0.000000e+00> : vector<32x32xf32>
    %65 = tpu.matmul %63, %64, %cst_26 {dimension_numbers = #tpu.dot_dimension_numbers<[1], [1], [0], [0], [0, 0, 1, 0], [], []>} : vector<32x32xbf16>, vector<32x32xbf16>, vector<32x32xf32> -> vector<32x32xf32>
    %cst_27 = arith.constant 0.176776692 : f32
    %66 = vector.broadcast %cst_27 : f32 to vector<32x32xf32>
    %67 = arith.mulf %65, %66 : vector<32x32xf32>
    %cst_28 = arith.constant dense<0xFF800000> : vector<32xf32>
    %68 = vector.multi_reduction <maximumf>, %67, %cst_28 [1] : vector<32x32xf32> to vector<32xf32>
    %69 = vector.shape_cast %68 : vector<32xf32> to vector<32x1xf32>
    %70 = vector.broadcast %69 : vector<32x1xf32> to vector<32x32xf32>
    %71 = arith.subf %67, %70 : vector<32x32xf32>
    %72 = math.exp %71 : vector<32x32xf32>
    %cst_29 = arith.constant dense<0.000000e+00> : vector<32xf32>
    %73 = vector.multi_reduction <add>, %72, %cst_29 [1] : vector<32x32xf32> to vector<32xf32>
    %74 = vector.shape_cast %73 : vector<32xf32> to vector<32x1xf32>
    %75 = tpu.reciprocal %74 {approx = true} : vector<32x1xf32> -> vector<32x1xf32>
    %76 = vector.broadcast %75 : vector<32x1xf32> to vector<32x32xf32>
    %77 = arith.mulf %72, %76 : vector<32x32xf32>
    %78 = arith.truncf %77 : vector<32x32xf32> to vector<32x32xbf16>
    %79 = arith.truncf %62 : vector<32x32xf32> to vector<32x32xbf16>
    %cst_30 = arith.constant dense<0.000000e+00> : vector<32x32xf32>
    %80 = tpu.matmul %78, %79, %cst_30 {dimension_numbers = #tpu.dot_dimension_numbers<[1], [0], [0], [1], [0, 0, 1, 1], [], []>} : vector<32x32xbf16>, vector<32x32xbf16>, vector<32x32xf32> -> vector<32x32xf32>
    %c0_31 = arith.constant 0 : index
    %c32 = arith.constant 32 : index
    %81 = vector.load %arg22[%c0_31, %c32] : memref<64x128xf32, #tpu.memory_space<vmem>>, vector<32x32xf32>
    tpu.vector_store %arg22[%c0_31, %c32], %80 {strides = array<i32>} : memref<64x128xf32, #tpu.memory_space<vmem>>, vector<32x32xf32>,
    %82 = vector.extract_strided_slice %37 {offsets = [0, 64], sizes = [32, 32], strides = [1, 1]} : vector<64x384xf32> to vector<32x32xf32>
    %83 = vector.extract_strided_slice %37 {offsets = [0, 192], sizes = [32, 32], strides = [1, 1]} : vector<64x384xf32> to vector<32x32xf32>
    %84 = vector.extract_strided_slice %37 {offsets = [0, 320], sizes = [32, 32], strides = [1, 1]} : vector<64x384xf32> to vector<32x32xf32>
    %85 = arith.truncf %82 : vector<32x32xf32> to vector<32x32xbf16>
    %86 = arith.truncf %83 : vector<32x32xf32> to vector<32x32xbf16>
    %cst_32 = arith.constant dense<0.000000e+00> : vector<32x32xf32>
    %87 = tpu.matmul %85, %86, %cst_32 {dimension_numbers = #tpu.dot_dimension_numbers<[1], [1], [0], [0], [0, 0, 1, 0], [], []>} : vector<32x32xbf16>, vector<32x32xbf16>, vector<32x32xf32> -> vector<32x32xf32>
    %cst_33 = arith.constant 0.176776692 : f32
    %88 = vector.broadcast %cst_33 : f32 to vector<32x32xf32>
    %89 = arith.mulf %87, %88 : vector<32x32xf32>
    %cst_34 = arith.constant dense<0xFF800000> : vector<32xf32>
    %90 = vector.multi_reduction <maximumf>, %89, %cst_34 [1] : vector<32x32xf32> to vector<32xf32>
    %91 = vector.shape_cast %90 : vector<32xf32> to vector<32x1xf32>
    %92 = vector.broadcast %91 : vector<32x1xf32> to vector<32x32xf32>
    %93 = arith.subf %89, %92 : vector<32x32xf32>
    %94 = math.exp %93 : vector<32x32xf32>
    %cst_35 = arith.constant dense<0.000000e+00> : vector<32xf32>
    %95 = vector.multi_reduction <add>, %94, %cst_35 [1] : vector<32x32xf32> to vector<32xf32>
    %96 = vector.shape_cast %95 : vector<32xf32> to vector<32x1xf32>
    %97 = tpu.reciprocal %96 {approx = true} : vector<32x1xf32> -> vector<32x1xf32>
    %98 = vector.broadcast %97 : vector<32x1xf32> to vector<32x32xf32>
    %99 = arith.mulf %94, %98 : vector<32x32xf32>
    %100 = arith.truncf %99 : vector<32x32xf32> to vector<32x32xbf16>
    %101 = arith.truncf %84 : vector<32x32xf32> to vector<32x32xbf16>
    %cst_36 = arith.constant dense<0.000000e+00> : vector<32x32xf32>
    %102 = tpu.matmul %100, %101, %cst_36 {dimension_numbers = #tpu.dot_dimension_numbers<[1], [0], [0], [1], [0, 0, 1, 1], [], []>} : vector<32x32xbf16>, vector<32x32xbf16>, vector<32x32xf32> -> vector<32x32xf32>
    %c0_37 = arith.constant 0 : index
    %c64 = arith.constant 64 : index
    %103 = vector.load %arg22[%c0_37, %c64] : memref<64x128xf32, #tpu.memory_space<vmem>>, vector<32x32xf32>
    tpu.vector_store %arg22[%c0_37, %c64], %102 {strides = array<i32>} : memref<64x128xf32, #tpu.memory_space<vmem>>, vector<32x32xf32>,
    %104 = vector.extract_strided_slice %37 {offsets = [0, 96], sizes = [32, 32], strides = [1, 1]} : vector<64x384xf32> to vector<32x32xf32>
    %105 = vector.extract_strided_slice %37 {offsets = [0, 224], sizes = [32, 32], strides = [1, 1]} : vector<64x384xf32> to vector<32x32xf32>
    %106 = vector.extract_strided_slice %37 {offsets = [0, 352], sizes = [32, 32], strides = [1, 1]} : vector<64x384xf32> to vector<32x32xf32>
    %107 = arith.truncf %104 : vector<32x32xf32> to vector<32x32xbf16>
    %108 = arith.truncf %105 : vector<32x32xf32> to vector<32x32xbf16>
    %cst_38 = arith.constant dense<0.000000e+00> : vector<32x32xf32>
    %109 = tpu.matmul %107, %108, %cst_38 {dimension_numbers = #tpu.dot_dimension_numbers<[1], [1], [0], [0], [0, 0, 1, 0], [], []>} : vector<32x32xbf16>, vector<32x32xbf16>, vector<32x32xf32> -> vector<32x32xf32>
    %cst_39 = arith.constant 0.176776692 : f32
    %110 = vector.broadcast %cst_39 : f32 to vector<32x32xf32>
    %111 = arith.mulf %109, %110 : vector<32x32xf32>
    %cst_40 = arith.constant dense<0xFF800000> : vector<32xf32>
    %112 = vector.multi_reduction <maximumf>, %111, %cst_40 [1] : vector<32x32xf32> to vector<32xf32>
    %113 = vector.shape_cast %112 : vector<32xf32> to vector<32x1xf32>
    %114 = vector.broadcast %113 : vector<32x1xf32> to vector<32x32xf32>
    %115 = arith.subf %111, %114 : vector<32x32xf32>
    %116 = math.exp %115 : vector<32x32xf32>
    %cst_41 = arith.constant dense<0.000000e+00> : vector<32xf32>
    %117 = vector.multi_reduction <add>, %116, %cst_41 [1] : vector<32x32xf32> to vector<32xf32>
    %118 = vector.shape_cast %117 : vector<32xf32> to vector<32x1xf32>
    %119 = tpu.reciprocal %118 {approx = true} : vector<32x1xf32> -> vector<32x1xf32>
    %120 = vector.broadcast %119 : vector<32x1xf32> to vector<32x32xf32>
    %121 = arith.mulf %116, %120 : vector<32x32xf32>
    %122 = arith.truncf %121 : vector<32x32xf32> to vector<32x32xbf16>
    %123 = arith.truncf %106 : vector<32x32xf32> to vector<32x32xbf16>
    %cst_42 = arith.constant dense<0.000000e+00> : vector<32x32xf32>
    %124 = tpu.matmul %122, %123, %cst_42 {dimension_numbers = #tpu.dot_dimension_numbers<[1], [0], [0], [1], [0, 0, 1, 1], [], []>} : vector<32x32xbf16>, vector<32x32xbf16>, vector<32x32xf32> -> vector<32x32xf32>
    %c0_43 = arith.constant 0 : index
    %c96 = arith.constant 96 : index
    %125 = vector.load %arg22[%c0_43, %c96] : memref<64x128xf32, #tpu.memory_space<vmem>>, vector<32x32xf32>
    tpu.vector_store %arg22[%c0_43, %c96], %124 {strides = array<i32>} : memref<64x128xf32, #tpu.memory_space<vmem>>, vector<32x32xf32>,
    %126 = vector.extract_strided_slice %37 {offsets = [32, 0], sizes = [32, 32], strides = [1, 1]} : vector<64x384xf32> to vector<32x32xf32>
    %127 = vector.extract_strided_slice %37 {offsets = [32, 128], sizes = [32, 32], strides = [1, 1]} : vector<64x384xf32> to vector<32x32xf32>
    %128 = vector.extract_strided_slice %37 {offsets = [32, 256], sizes = [32, 32], strides = [1, 1]} : vector<64x384xf32> to vector<32x32xf32>
    %129 = arith.truncf %126 : vector<32x32xf32> to vector<32x32xbf16>
    %130 = arith.truncf %127 : vector<32x32xf32> to vector<32x32xbf16>
    %cst_44 = arith.constant dense<0.000000e+00> : vector<32x32xf32>
    %131 = tpu.matmul %129, %130, %cst_44 {dimension_numbers = #tpu.dot_dimension_numbers<[1], [1], [0], [0], [0, 0, 1, 0], [], []>} : vector<32x32xbf16>, vector<32x32xbf16>, vector<32x32xf32> -> vector<32x32xf32>
    %cst_45 = arith.constant 0.176776692 : f32
    %132 = vector.broadcast %cst_45 : f32 to vector<32x32xf32>
    %133 = arith.mulf %131, %132 : vector<32x32xf32>
    %cst_46 = arith.constant dense<0xFF800000> : vector<32xf32>
    %134 = vector.multi_reduction <maximumf>, %133, %cst_46 [1] : vector<32x32xf32> to vector<32xf32>
    %135 = vector.shape_cast %134 : vector<32xf32> to vector<32x1xf32>
    %136 = vector.broadcast %135 : vector<32x1xf32> to vector<32x32xf32>
    %137 = arith.subf %133, %136 : vector<32x32xf32>
    %138 = math.exp %137 : vector<32x32xf32>
    %cst_47 = arith.constant dense<0.000000e+00> : vector<32xf32>
    %139 = vector.multi_reduction <add>, %138, %cst_47 [1] : vector<32x32xf32> to vector<32xf32>
    %140 = vector.shape_cast %139 : vector<32xf32> to vector<32x1xf32>
    %141 = tpu.reciprocal %140 {approx = true} : vector<32x1xf32> -> vector<32x1xf32>
    %142 = vector.broadcast %141 : vector<32x1xf32> to vector<32x32xf32>
    %143 = arith.mulf %138, %142 : vector<32x32xf32>
    %144 = arith.truncf %143 : vector<32x32xf32> to vector<32x32xbf16>
    %145 = arith.truncf %128 : vector<32x32xf32> to vector<32x32xbf16>
    %cst_48 = arith.constant dense<0.000000e+00> : vector<32x32xf32>
    %146 = tpu.matmul %144, %145, %cst_48 {dimension_numbers = #tpu.dot_dimension_numbers<[1], [0], [0], [1], [0, 0, 1, 1], [], []>} : vector<32x32xbf16>, vector<32x32xbf16>, vector<32x32xf32> -> vector<32x32xf32>
    %c32_49 = arith.constant 32 : index
    %c0_50 = arith.constant 0 : index
    %147 = vector.load %arg22[%c32_49, %c0_50] : memref<64x128xf32, #tpu.memory_space<vmem>>, vector<32x32xf32>
    tpu.vector_store %arg22[%c32_49, %c0_50], %146 {strides = array<i32>} : memref<64x128xf32, #tpu.memory_space<vmem>>, vector<32x32xf32>,
    %148 = vector.extract_strided_slice %37 {offsets = [32, 32], sizes = [32, 32], strides = [1, 1]} : vector<64x384xf32> to vector<32x32xf32>
    %149 = vector.extract_strided_slice %37 {offsets = [32, 160], sizes = [32, 32], strides = [1, 1]} : vector<64x384xf32> to vector<32x32xf32>
    %150 = vector.extract_strided_slice %37 {offsets = [32, 288], sizes = [32, 32], strides = [1, 1]} : vector<64x384xf32> to vector<32x32xf32>
    %151 = arith.truncf %148 : vector<32x32xf32> to vector<32x32xbf16>
    %152 = arith.truncf %149 : vector<32x32xf32> to vector<32x32xbf16>
    %cst_51 = arith.constant dense<0.000000e+00> : vector<32x32xf32>
    %153 = tpu.matmul %151, %152, %cst_51 {dimension_numbers = #tpu.dot_dimension_numbers<[1], [1], [0], [0], [0, 0, 1, 0], [], []>} : vector<32x32xbf16>, vector<32x32xbf16>, vector<32x32xf32> -> vector<32x32xf32>
    %cst_52 = arith.constant 0.176776692 : f32
    %154 = vector.broadcast %cst_52 : f32 to vector<32x32xf32>
    %155 = arith.mulf %153, %154 : vector<32x32xf32>
    %cst_53 = arith.constant dense<0xFF800000> : vector<32xf32>
    %156 = vector.multi_reduction <maximumf>, %155, %cst_53 [1] : vector<32x32xf32> to vector<32xf32>
    %157 = vector.shape_cast %156 : vector<32xf32> to vector<32x1xf32>
    %158 = vector.broadcast %157 : vector<32x1xf32> to vector<32x32xf32>
    %159 = arith.subf %155, %158 : vector<32x32xf32>
    %160 = math.exp %159 : vector<32x32xf32>
    %cst_54 = arith.constant dense<0.000000e+00> : vector<32xf32>
    %161 = vector.multi_reduction <add>, %160, %cst_54 [1] : vector<32x32xf32> to vector<32xf32>
    %162 = vector.shape_cast %161 : vector<32xf32> to vector<32x1xf32>
    %163 = tpu.reciprocal %162 {approx = true} : vector<32x1xf32> -> vector<32x1xf32>
    %164 = vector.broadcast %163 : vector<32x1xf32> to vector<32x32xf32>
    %165 = arith.mulf %160, %164 : vector<32x32xf32>
    %166 = arith.truncf %165 : vector<32x32xf32> to vector<32x32xbf16>
    %167 = arith.truncf %150 : vector<32x32xf32> to vector<32x32xbf16>
    %cst_55 = arith.constant dense<0.000000e+00> : vector<32x32xf32>
    %168 = tpu.matmul %166, %167, %cst_55 {dimension_numbers = #tpu.dot_dimension_numbers<[1], [0], [0], [1], [0, 0, 1, 1], [], []>} : vector<32x32xbf16>, vector<32x32xbf16>, vector<32x32xf32> -> vector<32x32xf32>
    %c32_56 = arith.constant 32 : index
    %c32_57 = arith.constant 32 : index
    %169 = vector.load %arg22[%c32_56, %c32_57] : memref<64x128xf32, #tpu.memory_space<vmem>>, vector<32x32xf32>
    tpu.vector_store %arg22[%c32_56, %c32_57], %168 {strides = array<i32>} : memref<64x128xf32, #tpu.memory_space<vmem>>, vector<32x32xf32>,
    %170 = vector.extract_strided_slice %37 {offsets = [32, 64], sizes = [32, 32], strides = [1, 1]} : vector<64x384xf32> to vector<32x32xf32>
    %171 = vector.extract_strided_slice %37 {offsets = [32, 192], sizes = [32, 32], strides = [1, 1]} : vector<64x384xf32> to vector<32x32xf32>
    %172 = vector.extract_strided_slice %37 {offsets = [32, 320], sizes = [32, 32], strides = [1, 1]} : vector<64x384xf32> to vector<32x32xf32>
    %173 = arith.truncf %170 : vector<32x32xf32> to vector<32x32xbf16>
    %174 = arith.truncf %171 : vector<32x32xf32> to vector<32x32xbf16>
    %cst_58 = arith.constant dense<0.000000e+00> : vector<32x32xf32>
    %175 = tpu.matmul %173, %174, %cst_58 {dimension_numbers = #tpu.dot_dimension_numbers<[1], [1], [0], [0], [0, 0, 1, 0], [], []>} : vector<32x32xbf16>, vector<32x32xbf16>, vector<32x32xf32> -> vector<32x32xf32>
    %cst_59 = arith.constant 0.176776692 : f32
    %176 = vector.broadcast %cst_59 : f32 to vector<32x32xf32>
    %177 = arith.mulf %175, %176 : vector<32x32xf32>
    %cst_60 = arith.constant dense<0xFF800000> : vector<32xf32>
    %178 = vector.multi_reduction <maximumf>, %177, %cst_60 [1] : vector<32x32xf32> to vector<32xf32>
    %179 = vector.shape_cast %178 : vector<32xf32> to vector<32x1xf32>
    %180 = vector.broadcast %179 : vector<32x1xf32> to vector<32x32xf32>
    %181 = arith.subf %177, %180 : vector<32x32xf32>
    %182 = math.exp %181 : vector<32x32xf32>
    %cst_61 = arith.constant dense<0.000000e+00> : vector<32xf32>
    %183 = vector.multi_reduction <add>, %182, %cst_61 [1] : vector<32x32xf32> to vector<32xf32>
    %184 = vector.shape_cast %183 : vector<32xf32> to vector<32x1xf32>
    %185 = tpu.reciprocal %184 {approx = true} : vector<32x1xf32> -> vector<32x1xf32>
    %186 = vector.broadcast %185 : vector<32x1xf32> to vector<32x32xf32>
    %187 = arith.mulf %182, %186 : vector<32x32xf32>
    %188 = arith.truncf %187 : vector<32x32xf32> to vector<32x32xbf16>
    %189 = arith.truncf %172 : vector<32x32xf32> to vector<32x32xbf16>
    %cst_62 = arith.constant dense<0.000000e+00> : vector<32x32xf32>
    %190 = tpu.matmul %188, %189, %cst_62 {dimension_numbers = #tpu.dot_dimension_numbers<[1], [0], [0], [1], [0, 0, 1, 1], [], []>} : vector<32x32xbf16>, vector<32x32xbf16>, vector<32x32xf32> -> vector<32x32xf32>
    %c32_63 = arith.constant 32 : index
    %c64_64 = arith.constant 64 : index
    %191 = vector.load %arg22[%c32_63, %c64_64] : memref<64x128xf32, #tpu.memory_space<vmem>>, vector<32x32xf32>
    tpu.vector_store %arg22[%c32_63, %c64_64], %190 {strides = array<i32>} : memref<64x128xf32, #tpu.memory_space<vmem>>, vector<32x32xf32>,
    %192 = vector.extract_strided_slice %37 {offsets = [32, 96], sizes = [32, 32], strides = [1, 1]} : vector<64x384xf32> to vector<32x32xf32>
    %193 = vector.extract_strided_slice %37 {offsets = [32, 224], sizes = [32, 32], strides = [1, 1]} : vector<64x384xf32> to vector<32x32xf32>
    %194 = vector.extract_strided_slice %37 {offsets = [32, 352], sizes = [32, 32], strides = [1, 1]} : vector<64x384xf32> to vector<32x32xf32>
    %195 = arith.truncf %192 : vector<32x32xf32> to vector<32x32xbf16>
    %196 = arith.truncf %193 : vector<32x32xf32> to vector<32x32xbf16>
    %cst_65 = arith.constant dense<0.000000e+00> : vector<32x32xf32>
    %197 = tpu.matmul %195, %196, %cst_65 {dimension_numbers = #tpu.dot_dimension_numbers<[1], [1], [0], [0], [0, 0, 1, 0], [], []>} : vector<32x32xbf16>, vector<32x32xbf16>, vector<32x32xf32> -> vector<32x32xf32>
    %cst_66 = arith.constant 0.176776692 : f32
    %198 = vector.broadcast %cst_66 : f32 to vector<32x32xf32>
    %199 = arith.mulf %197, %198 : vector<32x32xf32>
    %cst_67 = arith.constant dense<0xFF800000> : vector<32xf32>
    %200 = vector.multi_reduction <maximumf>, %199, %cst_67 [1] : vector<32x32xf32> to vector<32xf32>
    %201 = vector.shape_cast %200 : vector<32xf32> to vector<32x1xf32>
    %202 = vector.broadcast %201 : vector<32x1xf32> to vector<32x32xf32>
    %203 = arith.subf %199, %202 : vector<32x32xf32>
    %204 = math.exp %203 : vector<32x32xf32>
    %cst_68 = arith.constant dense<0.000000e+00> : vector<32xf32>
    %205 = vector.multi_reduction <add>, %204, %cst_68 [1] : vector<32x32xf32> to vector<32xf32>
    %206 = vector.shape_cast %205 : vector<32xf32> to vector<32x1xf32>
    %207 = tpu.reciprocal %206 {approx = true} : vector<32x1xf32> -> vector<32x1xf32>
    %208 = vector.broadcast %207 : vector<32x1xf32> to vector<32x32xf32>
    %209 = arith.mulf %204, %208 : vector<32x32xf32>
    %210 = arith.truncf %209 : vector<32x32xf32> to vector<32x32xbf16>
    %211 = arith.truncf %194 : vector<32x32xf32> to vector<32x32xbf16>
    %cst_69 = arith.constant dense<0.000000e+00> : vector<32x32xf32>
    %212 = tpu.matmul %210, %211, %cst_69 {dimension_numbers = #tpu.dot_dimension_numbers<[1], [0], [0], [1], [0, 0, 1, 1], [], []>} : vector<32x32xbf16>, vector<32x32xbf16>, vector<32x32xf32> -> vector<32x32xf32>
    %c32_70 = arith.constant 32 : index
    %c96_71 = arith.constant 96 : index
    %213 = vector.load %arg22[%c32_70, %c96_71] : memref<64x128xf32, #tpu.memory_space<vmem>>, vector<32x32xf32>
    tpu.vector_store %arg22[%c32_70, %c96_71], %212 {strides = array<i32>} : memref<64x128xf32, #tpu.memory_space<vmem>>, vector<32x32xf32>,
    %c0_72 = arith.constant 0 : index
    %c0_73 = arith.constant 0 : index
    %214 = vector.load %arg22[%c0_72, %c0_73] : memref<64x128xf32, #tpu.memory_space<vmem>>, vector<64x128xf32>
    %215 = arith.truncf %214 : vector<64x128xf32> to vector<64x128xbf16>
    %c0_74 = arith.constant 0 : index
    %c0_75 = arith.constant 0 : index
    %c0_76 = arith.constant 0 : index
    %216 = vector.load %arg10[%c0_74, %c0_75, %c0_76] : memref<1x128x128xbf16, #tpu.memory_space<vmem>>, vector<1x128x128xbf16>
    %217 = vector.shape_cast %216 : vector<1x128x128xbf16> to vector<128x128xbf16>
    %cst_77 = arith.constant dense<0.000000e+00> : vector<64x128xf32>
    %218 = tpu.matmul %215, %217, %cst_77 {dimension_numbers = #tpu.dot_dimension_numbers<[1], [0], [0], [1], [0, 0, 1, 1], [], []>} : vector<64x128xbf16>, vector<128x128xbf16>, vector<64x128xf32> -> vector<64x128xf32>
    %c0_78 = arith.constant 0 : index
    %c0_79 = arith.constant 0 : index
    %c0_80 = arith.constant 0 : index
    %219 = vector.load %arg11[%c0_78, %c0_79, %c0_80] : memref<1x1x128xf32, #tpu.memory_space<vmem>>, vector<1x1x128xf32>
    %220 = vector.shape_cast %219 : vector<1x1x128xf32> to vector<1x128xf32>
    %221 = vector.broadcast %220 : vector<1x128xf32> to vector<64x128xf32>
    %222 = arith.addf %218, %221 : vector<64x128xf32>
    %223 = arith.addf %222, %3 : vector<64x128xf32>
    %c0_81 = arith.constant 0 : index
    %c0_82 = arith.constant 0 : index
    %c0_83 = arith.constant 0 : index
    %224 = vector.load %arg12[%c0_81, %c0_82, %c0_83] : memref<1x1x128xf32, #tpu.memory_space<vmem>>, vector<1x1x128xf32>
    %225 = vector.shape_cast %224 : vector<1x1x128xf32> to vector<1x128xf32>
    %c0_84 = arith.constant 0 : index
    %c0_85 = arith.constant 0 : index
    %c0_86 = arith.constant 0 : index
    %226 = vector.load %arg13[%c0_84, %c0_85, %c0_86] : memref<1x1x128xf32, #tpu.memory_space<vmem>>, vector<1x1x128xf32>
    %227 = vector.shape_cast %226 : vector<1x1x128xf32> to vector<1x128xf32>
    %cst_87 = arith.constant dense<0.000000e+00> : vector<64xf32>
    %228 = vector.multi_reduction <add>, %223, %cst_87 [1] : vector<64x128xf32> to vector<64xf32>
    %229 = vector.shape_cast %228 : vector<64xf32> to vector<64x1xf32>
    %cst_88 = arith.constant 1.280000e+02 : f32
    %230 = vector.broadcast %cst_88 : f32 to vector<64x1xf32>
    %231 = arith.divf %229, %230 : vector<64x1xf32>
    %232 = vector.broadcast %231 : vector<64x1xf32> to vector<64x128xf32>
    %233 = arith.subf %223, %232 : vector<64x128xf32>
    %234 = arith.mulf %233, %233 : vector<64x128xf32>
    %cst_89 = arith.constant dense<0.000000e+00> : vector<64xf32>
    %235 = vector.multi_reduction <add>, %234, %cst_89 [1] : vector<64x128xf32> to vector<64xf32>
    %236 = vector.shape_cast %235 : vector<64xf32> to vector<64x1xf32>
    %cst_90 = arith.constant 1.280000e+02 : f32
    %237 = vector.broadcast %cst_90 : f32 to vector<64x1xf32>
    %238 = arith.divf %236, %237 : vector<64x1xf32>
    %239 = vector.broadcast %231 : vector<64x1xf32> to vector<64x128xf32>
    %240 = arith.subf %223, %239 : vector<64x128xf32>
    %cst_91 = arith.constant 9.99999997E-7 : f32
    %241 = vector.broadcast %cst_91 : f32 to vector<64x1xf32>
    %242 = arith.addf %238, %241 : vector<64x1xf32>
    %243 = math.rsqrt %242 : vector<64x1xf32>
    %244 = vector.broadcast %243 : vector<64x1xf32> to vector<64x128xf32>
    %245 = arith.mulf %240, %244 : vector<64x128xf32>
    %246 = vector.broadcast %225 : vector<1x128xf32> to vector<64x128xf32>
    %247 = arith.mulf %245, %246 : vector<64x128xf32>
    %248 = vector.broadcast %227 : vector<1x128xf32> to vector<64x128xf32>
    %249 = arith.addf %247, %248 : vector<64x128xf32>
    %250 = arith.truncf %249 : vector<64x128xf32> to vector<64x128xbf16>
    %c0_92 = arith.constant 0 : index
    %c0_93 = arith.constant 0 : index
    %c0_94 = arith.constant 0 : index
    %251 = vector.load %arg14[%c0_92, %c0_93, %c0_94] : memref<1x128x256xbf16, #tpu.memory_space<vmem>>, vector<1x128x256xbf16>
    %252 = vector.shape_cast %251 : vector<1x128x256xbf16> to vector<128x256xbf16>
    %cst_95 = arith.constant dense<0.000000e+00> : vector<64x256xf32>
    %253 = tpu.matmul %250, %252, %cst_95 {dimension_numbers = #tpu.dot_dimension_numbers<[1], [0], [0], [1], [0, 0, 1, 1], [], []>} : vector<64x128xbf16>, vector<128x256xbf16>, vector<64x256xf32> -> vector<64x256xf32>
    %c0_96 = arith.constant 0 : index
    %c0_97 = arith.constant 0 : index
    %c0_98 = arith.constant 0 : index
    %254 = vector.load %arg15[%c0_96, %c0_97, %c0_98] : memref<1x1x256xf32, #tpu.memory_space<vmem>>, vector<1x1x256xf32>
    %255 = vector.shape_cast %254 : vector<1x1x256xf32> to vector<1x256xf32>
    %256 = vector.broadcast %255 : vector<1x256xf32> to vector<64x256xf32>
    %257 = arith.addf %253, %256 : vector<64x256xf32>
    %cst_99 = arith.constant 5.000000e-01 : f32
    %258 = vector.broadcast %cst_99 : f32 to vector<64x256xf32>
    %259 = arith.mulf %258, %257 : vector<64x256xf32>
    %cst_100 = arith.constant 4.471500e-02 : f32
    %260 = vector.broadcast %cst_100 : f32 to vector<64x256xf32>
    %261 = arith.mulf %260, %257 : vector<64x256xf32>
    %262 = arith.mulf %261, %257 : vector<64x256xf32>
    %263 = arith.mulf %262, %257 : vector<64x256xf32>
    %264 = arith.addf %257, %263 : vector<64x256xf32>
    %cst_101 = arith.constant 0.797884583 : f32
    %265 = vector.broadcast %cst_101 : f32 to vector<64x256xf32>
    %266 = arith.mulf %265, %264 : vector<64x256xf32>
    %267 = math.tanh %266 : vector<64x256xf32>
    %cst_102 = arith.constant 1.000000e+00 : f32
    %268 = vector.broadcast %cst_102 : f32 to vector<64x256xf32>
    %269 = arith.addf %268, %267 : vector<64x256xf32>
    %270 = arith.mulf %259, %269 : vector<64x256xf32>
    %271 = arith.truncf %270 : vector<64x256xf32> to vector<64x256xbf16>
    %c0_103 = arith.constant 0 : index
    %c0_104 = arith.constant 0 : index
    %c0_105 = arith.constant 0 : index
    %272 = vector.load %arg16[%c0_103, %c0_104, %c0_105] : memref<1x256x128xbf16, #tpu.memory_space<vmem>>, vector<1x256x128xbf16>
    %273 = vector.shape_cast %272 : vector<1x256x128xbf16> to vector<256x128xbf16>
    %cst_106 = arith.constant dense<0.000000e+00> : vector<64x128xf32>
    %274 = tpu.matmul %271, %273, %cst_106 {dimension_numbers = #tpu.dot_dimension_numbers<[1], [0], [0], [1], [0, 0, 1, 1], [], []>} : vector<64x256xbf16>, vector<256x128xbf16>, vector<64x128xf32> -> vector<64x128xf32>
    %c0_107 = arith.constant 0 : index
    %c0_108 = arith.constant 0 : index
    %c0_109 = arith.constant 0 : index
    %275 = vector.load %arg17[%c0_107, %c0_108, %c0_109] : memref<1x1x128xf32, #tpu.memory_space<vmem>>, vector<1x1x128xf32>
    %276 = vector.shape_cast %275 : vector<1x1x128xf32> to vector<1x128xf32>
    %277 = vector.broadcast %276 : vector<1x128xf32> to vector<64x128xf32>
    %278 = arith.addf %274, %277 : vector<64x128xf32>
    %279 = arith.addf %278, %223 : vector<64x128xf32>
    %c0_110 = arith.constant 0 : index
    %c0_111 = arith.constant 0 : index
    %280 = vector.load %arg21[%c0_110, %c0_111] : memref<64x128xf32, #tpu.memory_space<vmem>>, vector<64x128xf32>
    tpu.vector_store %arg21[%c0_110, %c0_111], %279 {strides = array<i32>} : memref<64x128xf32, #tpu.memory_space<vmem>>, vector<64x128xf32>,
    %c1_i32 = arith.constant 1 : i32
    %281 = arith.cmpi eq, %arg0, %c1_i32 : i32
    %282 = arith.extui %281 : i1 to i32
    %c0_i32_112 = arith.constant 0 : i32
    %283 = arith.cmpi ne, %282, %c0_i32_112 : i32
    scf.if %283 {
      %284 = vector.extract_strided_slice %279 {offsets = [0, 0], sizes = [1, 128], strides = [1, 1]} : vector<64x128xf32> to vector<1x128xf32>
      %285 = vector.extract_strided_slice %279 {offsets = [32, 0], sizes = [1, 128], strides = [1, 1]} : vector<64x128xf32> to vector<1x128xf32>
      %286 = tpu.concatenate %284, %285 in 0 : vector<1x128xf32>, vector<1x128xf32> -> vector<2x128xf32>
      %287 = vector.extract_strided_slice %279 {offsets = [1, 0], sizes = [1, 128], strides = [1, 1]} : vector<64x128xf32> to vector<1x128xf32>
      %288 = vector.extract_strided_slice %279 {offsets = [33, 0], sizes = [1, 128], strides = [1, 1]} : vector<64x128xf32> to vector<1x128xf32>
      %289 = tpu.concatenate %287, %288 in 0 : vector<1x128xf32>, vector<1x128xf32> -> vector<2x128xf32>
      %c0_113 = arith.constant 0 : index
      %c0_114 = arith.constant 0 : index
      %290 = vector.load %arg18[%c0_113, %c0_114] : memref<1x128xf32, #tpu.memory_space<vmem>>, vector<1x128xf32>
      %c0_115 = arith.constant 0 : index
      %c0_116 = arith.constant 0 : index
      %291 = vector.load %arg19[%c0_115, %c0_116] : memref<1x128xf32, #tpu.memory_space<vmem>>, vector<1x128xf32>
      %cst_117 = arith.constant dense<0.000000e+00> : vector<2xf32>
      %292 = vector.multi_reduction <add>, %286, %cst_117 [1] : vector<2x128xf32> to vector<2xf32>
      %293 = vector.shape_cast %292 : vector<2xf32> to vector<2x1xf32>
      %cst_118 = arith.constant 1.280000e+02 : f32
      %294 = vector.broadcast %cst_118 : f32 to vector<2x1xf32>
      %295 = arith.divf %293, %294 : vector<2x1xf32>
      %296 = vector.broadcast %295 : vector<2x1xf32> to vector<2x128xf32>
      %297 = arith.subf %286, %296 : vector<2x128xf32>
      %298 = arith.mulf %297, %297 : vector<2x128xf32>
      %cst_119 = arith.constant dense<0.000000e+00> : vector<2xf32>
      %299 = vector.multi_reduction <add>, %298, %cst_119 [1] : vector<2x128xf32> to vector<2xf32>
      %300 = vector.shape_cast %299 : vector<2xf32> to vector<2x1xf32>
      %cst_120 = arith.constant 1.280000e+02 : f32
      %301 = vector.broadcast %cst_120 : f32 to vector<2x1xf32>
      %302 = arith.divf %300, %301 : vector<2x1xf32>
      %303 = vector.broadcast %295 : vector<2x1xf32> to vector<2x128xf32>
      %304 = arith.subf %286, %303 : vector<2x128xf32>
      %cst_121 = arith.constant 9.99999997E-7 : f32
      %305 = vector.broadcast %cst_121 : f32 to vector<2x1xf32>
      %306 = arith.addf %302, %305 : vector<2x1xf32>
      %307 = math.rsqrt %306 : vector<2x1xf32>
      %308 = vector.broadcast %307 : vector<2x1xf32> to vector<2x128xf32>
      %309 = arith.mulf %304, %308 : vector<2x128xf32>
      %310 = vector.broadcast %290 : vector<1x128xf32> to vector<2x128xf32>
      %311 = arith.mulf %309, %310 : vector<2x128xf32>
      %312 = vector.broadcast %291 : vector<1x128xf32> to vector<2x128xf32>
      %313 = arith.addf %311, %312 : vector<2x128xf32>
      %c0_122 = arith.constant 0 : index
      %c0_123 = arith.constant 0 : index
      %314 = vector.load %arg18[%c0_122, %c0_123] : memref<1x128xf32, #tpu.memory_space<vmem>>, vector<1x128xf32>
      %c0_124 = arith.constant 0 : index
      %c0_125 = arith.constant 0 : index
      %315 = vector.load %arg19[%c0_124, %c0_125] : memref<1x128xf32, #tpu.memory_space<vmem>>, vector<1x128xf32>
      %cst_126 = arith.constant dense<0.000000e+00> : vector<2xf32>
      %316 = vector.multi_reduction <add>, %289, %cst_126 [1] : vector<2x128xf32> to vector<2xf32>
      %317 = vector.shape_cast %316 : vector<2xf32> to vector<2x1xf32>
      %cst_127 = arith.constant 1.280000e+02 : f32
      %318 = vector.broadcast %cst_127 : f32 to vector<2x1xf32>
      %319 = arith.divf %317, %318 : vector<2x1xf32>
      %320 = vector.broadcast %319 : vector<2x1xf32> to vector<2x128xf32>
      %321 = arith.subf %289, %320 : vector<2x128xf32>
      %322 = arith.mulf %321, %321 : vector<2x128xf32>
      %cst_128 = arith.constant dense<0.000000e+00> : vector<2xf32>
      %323 = vector.multi_reduction <add>, %322, %cst_128 [1] : vector<2x128xf32> to vector<2xf32>
      %324 = vector.shape_cast %323 : vector<2xf32> to vector<2x1xf32>
      %cst_129 = arith.constant 1.280000e+02 : f32
      %325 = vector.broadcast %cst_129 : f32 to vector<2x1xf32>
      %326 = arith.divf %324, %325 : vector<2x1xf32>
      %327 = vector.broadcast %319 : vector<2x1xf32> to vector<2x128xf32>
      %328 = arith.subf %289, %327 : vector<2x128xf32>
      %cst_130 = arith.constant 9.99999997E-7 : f32
      %329 = vector.broadcast %cst_130 : f32 to vector<2x1xf32>
      %330 = arith.addf %326, %329 : vector<2x1xf32>
      %331 = math.rsqrt %330 : vector<2x1xf32>
      %332 = vector.broadcast %331 : vector<2x1xf32> to vector<2x128xf32>
      %333 = arith.mulf %328, %332 : vector<2x128xf32>
      %334 = vector.broadcast %314 : vector<1x128xf32> to vector<2x128xf32>
      %335 = arith.mulf %333, %334 : vector<2x128xf32>
      %336 = vector.broadcast %315 : vector<1x128xf32> to vector<2x128xf32>
      %337 = arith.addf %335, %336 : vector<2x128xf32>
      %338 = arith.addf %313, %337 : vector<2x128xf32>
      %cst_131 = arith.constant 5.000000e-01 : f32
      %339 = vector.broadcast %cst_131 : f32 to vector<2x128xf32>
      %340 = arith.mulf %339, %338 : vector<2x128xf32>
      %c0_132 = arith.constant 0 : index
      %c0_133 = arith.constant 0 : index
      %341 = vector.load %arg20[%c0_132, %c0_133] : memref<2x128xf32, #tpu.memory_space<vmem>>, vector<2x128xf32>
      tpu.vector_store %arg20[%c0_132, %c0_133], %340 {strides = array<i32>} : memref<2x128xf32, #tpu.memory_space<vmem>>, vector<2x128xf32>,
    } else {
    }
    return
  }
  func.func @transform_0(%arg0: i32) -> (i32, i32) {
    %c0_i32 = arith.constant 0 : i32
    %c0_i32_0 = arith.constant 0 : i32
    %c0_i32_1 = arith.constant 0 : i32
    return %c0_i32, %c0_i32_0 : i32, i32
  }
  func.func @transform_1(%arg0: i32) -> (i32, i32) {
    %c0_i32 = arith.constant 0 : i32
    %c0_i32_0 = arith.constant 0 : i32
    %c0_i32_1 = arith.constant 0 : i32
    return %c0_i32, %c0_i32_0 : i32, i32
  }
  func.func @transform_2(%arg0: i32) -> (i32, i32) {
    %c0_i32 = arith.constant 0 : i32
    %c0_i32_0 = arith.constant 0 : i32
    %c0_i32_1 = arith.constant 0 : i32
    return %c0_i32, %c0_i32_0 : i32, i32
  }
  func.func @transform_3(%arg0: i32) -> (i32, i32, i32) {
    %c0_i32 = arith.constant 0 : i32
    %c0_i32_0 = arith.constant 0 : i32
    %c0_i32_1 = arith.constant 0 : i32
    %c0_i32_2 = arith.constant 0 : i32
    return %c0_i32, %c0_i32_0, %c0_i32_1 : i32, i32, i32
  }
  func.func @transform_4(%arg0: i32) -> (i32, i32, i32) {
    %c0_i32 = arith.constant 0 : i32
    %c0_i32_0 = arith.constant 0 : i32
    %c0_i32_1 = arith.constant 0 : i32
    %c0_i32_2 = arith.constant 0 : i32
    return %c0_i32, %c0_i32_0, %c0_i32_1 : i32, i32, i32
  }
  func.func @transform_5(%arg0: i32) -> (i32, i32, i32) {
    %c0_i32 = arith.constant 0 : i32
    %c0_i32_0 = arith.constant 0 : i32
    %c0_i32_1 = arith.constant 0 : i32
    return %arg0, %c0_i32, %c0_i32_0 : i32, i32, i32
  }
  func.func @transform_6(%arg0: i32) -> (i32, i32, i32) {
    %c0_i32 = arith.constant 0 : i32
    %c0_i32_0 = arith.constant 0 : i32
    %c0_i32_1 = arith.constant 0 : i32
    return %arg0, %c0_i32, %c0_i32_0 : i32, i32, i32
  }
  func.func @transform_7(%arg0: i32) -> (i32, i32, i32) {
    %c0_i32 = arith.constant 0 : i32
    %c0_i32_0 = arith.constant 0 : i32
    %c0_i32_1 = arith.constant 0 : i32
    return %arg0, %c0_i32, %c0_i32_0 : i32, i32, i32
  }
  func.func @transform_8(%arg0: i32) -> (i32, i32, i32) {
    %c0_i32 = arith.constant 0 : i32
    %c0_i32_0 = arith.constant 0 : i32
    %c0_i32_1 = arith.constant 0 : i32
    return %arg0, %c0_i32, %c0_i32_0 : i32, i32, i32
  }
  func.func @transform_9(%arg0: i32) -> (i32, i32, i32) {
    %c0_i32 = arith.constant 0 : i32
    %c0_i32_0 = arith.constant 0 : i32
    %c0_i32_1 = arith.constant 0 : i32
    return %arg0, %c0_i32, %c0_i32_0 : i32, i32, i32
  }
  func.func @transform_10(%arg0: i32) -> (i32, i32, i32) {
    %c0_i32 = arith.constant 0 : i32
    %c0_i32_0 = arith.constant 0 : i32
    %c0_i32_1 = arith.constant 0 : i32
    return %arg0, %c0_i32, %c0_i32_0 : i32, i32, i32
  }
  func.func @transform_11(%arg0: i32) -> (i32, i32, i32) {
    %c0_i32 = arith.constant 0 : i32
    %c0_i32_0 = arith.constant 0 : i32
    %c0_i32_1 = arith.constant 0 : i32
    return %arg0, %c0_i32, %c0_i32_0 : i32, i32, i32
  }
  func.func @transform_12(%arg0: i32) -> (i32, i32, i32) {
    %c0_i32 = arith.constant 0 : i32
    %c0_i32_0 = arith.constant 0 : i32
    %c0_i32_1 = arith.constant 0 : i32
    return %arg0, %c0_i32, %c0_i32_0 : i32, i32, i32
  }
  func.func @transform_13(%arg0: i32) -> (i32, i32, i32) {
    %c0_i32 = arith.constant 0 : i32
    %c0_i32_0 = arith.constant 0 : i32
    %c0_i32_1 = arith.constant 0 : i32
    return %arg0, %c0_i32, %c0_i32_0 : i32, i32, i32
  }
  func.func @transform_14(%arg0: i32) -> (i32, i32, i32) {
    %c0_i32 = arith.constant 0 : i32
    %c0_i32_0 = arith.constant 0 : i32
    %c0_i32_1 = arith.constant 0 : i32
    return %arg0, %c0_i32, %c0_i32_0 : i32, i32, i32
  }
  func.func @transform_15(%arg0: i32) -> (i32, i32, i32) {
    %c0_i32 = arith.constant 0 : i32
    %c0_i32_0 = arith.constant 0 : i32
    %c0_i32_1 = arith.constant 0 : i32
    return %arg0, %c0_i32, %c0_i32_0 : i32, i32, i32
  }
  func.func @transform_16(%arg0: i32) -> (i32, i32, i32) {
    %c0_i32 = arith.constant 0 : i32
    %c0_i32_0 = arith.constant 0 : i32
    %c0_i32_1 = arith.constant 0 : i32
    return %arg0, %c0_i32, %c0_i32_0 : i32, i32, i32
  }
  func.func @transform_17(%arg0: i32) -> (i32, i32) {
    %c0_i32 = arith.constant 0 : i32
    %c0_i32_0 = arith.constant 0 : i32
    %c0_i32_1 = arith.constant 0 : i32
    return %c0_i32, %c0_i32_0 : i32, i32
  }
  func.func @transform_18(%arg0: i32) -> (i32, i32) {
    %c0_i32 = arith.constant 0 : i32
    %c0_i32_0 = arith.constant 0 : i32
    %c0_i32_1 = arith.constant 0 : i32
    return %c0_i32, %c0_i32_0 : i32, i32
  }
  func.func @transform_19(%arg0: i32) -> (i32, i32) {
    %c0_i32 = arith.constant 0 : i32
    %c0_i32_0 = arith.constant 0 : i32
    %c0_i32_1 = arith.constant 0 : i32
    return %c0_i32, %c0_i32_0 : i32, i32
  }
}

</mosaic_0001>

<llo_original>
// kernel: passt_forward.3
$region0: #{passt_forward.3}
  #allocation0 [shape = 'u32[]', space=smem, size = 0x4, offset = 0x4, fixed_abs, tag = 'smem constant byte address 0x4 - core index']
  #allocation1 [shape = 'u32[144,128]{1,0:T(1,128)}', space=vmem, size = 0x12000, scoped, tag = 'internal scratch']
  %s0 = inlined_call_operand.vmem [shape: f32[2,2,16,256], index: 0, kind: input, shape index: {}]
  %s1 = inlined_call_operand.vmem [shape: bf16[320,128], index: 1, kind: input, shape index: {}]
  %s2 = inlined_call_operand.vmem [shape: f32[2,16,128], index: 2, kind: output, shape index: {}]
  %s3 = sld [smem:[#allocation0]]
  $region18: #{passt_forward.3} parent=0
    _
  %s5 = ssub.s32 1, %s3
  %s6 = scalar_select 0, %s5, %s3
  // Predicated region
  $region2: #{passt_forward.3} parent=0 // pred_check
    _
  $region3: #{passt_forward.3} parent=0 // pred_check_branch
    %8 = sbr.rel (0) target = $region5
  $region4: #{passt_forward.3} parent=0 // pred_region
    _
  $region5: #{passt_forward.3} parent=0 // pred_fallthru
    _
  // Predicated region
  $region6: #{passt_forward.3} parent=0 // pred_check
    _
  $region7: #{passt_forward.3} parent=0 // pred_check_branch
    %10 = sbr.rel (0) target = $region9
  $region8: #{passt_forward.3} parent=0 // pred_region
    _
  $region9: #{passt_forward.3} parent=0 // pred_fallthru
    _
  %v12 = vld [vmem:[%s0] sm:$0xff]
  %v13 = vld [vmem:[%s0 + $0x8] sm:$0xff]
  %v14 = vld [vmem:[%s0 + $0x10] sm:$0xff]
  %v15 = vld [vmem:[%s0 + $0x18] sm:$0xff]
  %v16 = vld [vmem:[%s0 + $0x20] sm:$0xff]
  %v17 = vld [vmem:[%s0 + $0x28] sm:$0xff]
  %v18 = vld [vmem:[%s0 + $0x30] sm:$0xff]
  %v19 = vld [vmem:[%s0 + $0x38] sm:$0xff]
  %v20 = vadd.f32 %v12, %v16
  %v21 = vadd.f32 %v13, %v17
  %v22 = vadd.f32 %v14, %v18
  %v23 = vadd.f32 %v15, %v19
  %v24 = vrcp.pop 2.0
  %v25 = vmul.f32 %v20, %v24
  %v26 = vmul.f32 %v21, %v24
  %v27 = vmul.f32 %v22, %v24
  %v28 = vmul.f32 %v23, %v24
  %v29 = vpack.c.bf16 %v27, %v25
  %v30 = vpack.c.bf16 %v28, %v26
  %v32 = vshrl.u32 %v30, 16
  %v34 = vrot.slane %v32, 7
  %v35 = vshll.u32 %v30, 16
  %v37 = vor.u32 %v34, %v35
  %38 = vrot.lane.b32.xlu0 %v37, 32
  %v39 = vpop.permute.xlu0 %38
  %vm41 = vcmask 1040384
  %vm42 = vsmask.f32 256
  %vm43 = vmand %vm41, %vm42
  %v44 = vsel %vm43, 0, %v39
  %v46 = vshrl.u32 %v29, 16
  %v48 = vshll.u32 %v29, 16
  %v50 = vrot.slane %v48, 1
  %v51 = vor.u32 %v46, %v50
  %vm53 = vcmask 1047552
  %vm54 = vsmask.f32 7424
  %vm55 = vmand %vm53, %vm54
  %v56 = vsel %vm55, %v51, 0
  %59 = vrot.lane.b32.xlu0 %v29, 32
  %v60 = vpop.permute.xlu0 %59
  %61 = vrot.lane.b32.xlu0 %v30, 32
  %v62 = vpop.permute.xlu0 %61
  %vm63 = vcmask 261120
  %v64 = vsel %vm63, %v60, %v62
  %67 = vrot.lane.b32.xlu0 %v56, 32
  %v68 = vpop.permute.xlu0 %67
  %vm69 = vcmask 261120
  %v72 = vsel %vm69, %v44, %v60
  %v76 = vsel %vm69, %v62, %v68
  %v77 = vld [vmem:[%s1] sm:$0xf]
  %v78 = vld [vmem:[%s1 + $0x4] sm:$0xf]
  %v79 = vld [vmem:[%s1 + $0x8] sm:$0xf]
  %v80 = vld [vmem:[%s1 + $0xc] sm:$0xf]
  %v81 = vld [vmem:[%s1 + $0x10] sm:$0xf]
  %v82 = vld [vmem:[%s1 + $0x14] sm:$0xf]
  %v83 = vld [vmem:[%s1 + $0x18] sm:$0xf]
  %v84 = vld [vmem:[%s1 + $0x1c] sm:$0xf]
  %v85 = vld [vmem:[%s1 + $0x20] sm:$0xf]
  %v86 = vld [vmem:[%s1 + $0x24] sm:$0xf]
  %v87 = vld [vmem:[%s1 + $0x28] sm:$0xf]
  %v88 = vld [vmem:[%s1 + $0x2c] sm:$0xf]
  %v89 = vld [vmem:[%s1 + $0x30] sm:$0xf]
  %v90 = vld [vmem:[%s1 + $0x34] sm:$0xf]
  %v91 = vld [vmem:[%s1 + $0x38] sm:$0xf]
  %v92 = vld [vmem:[%s1 + $0x3c] sm:$0xf]
  %v93 = vld [vmem:[%s1 + $0x40] sm:$0xf]
  %v94 = vld [vmem:[%s1 + $0x44] sm:$0xf]
  %v95 = vld [vmem:[%s1 + $0x48] sm:$0xf]
  %v96 = vld [vmem:[%s1 + $0x4c] sm:$0xf]
  %v97 = vld [vmem:[%s1 + $0x50] sm:$0xf]
  %v98 = vld [vmem:[%s1 + $0x54] sm:$0xf]
  %v99 = vld [vmem:[%s1 + $0x58] sm:$0xf]
  %v100 = vld [vmem:[%s1 + $0x5c] sm:$0xf]
  %v101 = vld [vmem:[%s1 + $0x60] sm:$0xf]
  %v102 = vld [vmem:[%s1 + $0x64] sm:$0xf]
  %v103 = vld [vmem:[%s1 + $0x68] sm:$0xf]
  %v104 = vld [vmem:[%s1 + $0x6c] sm:$0xf]
  %v105 = vld [vmem:[%s1 + $0x70] sm:$0xf]
  %v106 = vld [vmem:[%s1 + $0x74] sm:$0xf]
  %v107 = vld [vmem:[%s1 + $0x78] sm:$0xf]
  %v108 = vld [vmem:[%s1 + $0x7c] sm:$0xf]
  %v109 = vld [vmem:[%s1 + $0x80] sm:$0xf]
  %v110 = vld [vmem:[%s1 + $0x84] sm:$0xf]
  %v111 = vld [vmem:[%s1 + $0x88] sm:$0xf]
  %v112 = vld [vmem:[%s1 + $0x8c] sm:$0xf]
  %v113 = vld [vmem:[%s1 + $0x90] sm:$0xf]
  %v114 = vld [vmem:[%s1 + $0x94] sm:$0xf]
  %v115 = vld [vmem:[%s1 + $0x98] sm:$0xf]
  %v116 = vld [vmem:[%s1 + $0x9c] sm:$0xf]
  %v157 = vunpack.c.l.b16 %v77
  %v158 = vunpack.c.l.b16 %v78
  %v159 = vunpack.c.l.b16 %v79
  %v160 = vunpack.c.l.b16 %v80
  %v161 = vunpack.c.l.b16 %v81
  %v162 = vunpack.c.l.b16 %v82
  %v163 = vunpack.c.l.b16 %v83
  %v164 = vunpack.c.l.b16 %v84
  %v165 = vunpack.c.l.b16 %v85
  %v166 = vunpack.c.l.b16 %v86
  %v167 = vunpack.c.l.b16 %v87
  %v168 = vunpack.c.l.b16 %v88
  %v169 = vunpack.c.l.b16 %v89
  %v170 = vunpack.c.l.b16 %v90
  %v171 = vunpack.c.l.b16 %v91
  %v172 = vunpack.c.l.b16 %v92
  %v173 = vunpack.c.l.b16 %v93
  %v174 = vunpack.c.l.b16 %v94
  %v175 = vunpack.c.l.b16 %v95
  %v176 = vunpack.c.l.b16 %v96
  %v177 = vunpack.c.l.b16 %v97
  %v178 = vunpack.c.l.b16 %v98
  %v179 = vunpack.c.l.b16 %v99
  %v180 = vunpack.c.l.b16 %v100
  %v181 = vunpack.c.l.b16 %v101
  %v182 = vunpack.c.l.b16 %v102
  %v183 = vunpack.c.l.b16 %v103
  %v184 = vunpack.c.l.b16 %v104
  %v185 = vunpack.c.l.b16 %v105
  %v186 = vunpack.c.l.b16 %v106
  %v187 = vunpack.c.l.b16 %v107
  %v188 = vunpack.c.l.b16 %v108
  %v189 = vunpack.c.l.b16 %v109
  %v190 = vunpack.c.l.b16 %v110
  %v191 = vunpack.c.l.b16 %v111
  %v192 = vunpack.c.l.b16 %v112
  %v193 = vunpack.c.l.b16 %v113
  %v194 = vunpack.c.l.b16 %v114
  %v195 = vunpack.c.l.b16 %v115
  %v196 = vunpack.c.l.b16 %v116
  %v197 = vpack.c.b16 %v158, %v157
  %v198 = vpack.c.b16 %v160, %v159
  %v199 = vpack.c.b16 %v162, %v161
  %v200 = vpack.c.b16 %v164, %v163
  %v201 = vpack.c.b16 %v166, %v165
  %v202 = vpack.c.b16 %v168, %v167
  %v203 = vpack.c.b16 %v170, %v169
  %v204 = vpack.c.b16 %v172, %v171
  %v205 = vpack.c.b16 %v174, %v173
  %v206 = vpack.c.b16 %v176, %v175
  %v207 = vpack.c.b16 %v178, %v177
  %v208 = vpack.c.b16 %v180, %v179
  %v209 = vpack.c.b16 %v182, %v181
  %v210 = vpack.c.b16 %v184, %v183
  %v211 = vpack.c.b16 %v186, %v185
  %v212 = vpack.c.b16 %v188, %v187
  %v213 = vpack.c.b16 %v190, %v189
  %v214 = vpack.c.b16 %v192, %v191
  %v215 = vpack.c.b16 %v194, %v193
  %v216 = vpack.c.b16 %v196, %v195
  %vm237 = vcmask 523264
  %v238 = vsel %vm237, %v76, 0
  %240 = vmatprep.subr.bf16.mxu0 0
  %241 = vmatpush1.bf16.msra.mxu0 %v204
  %242 = vmatprep.subr.bf16.mxu0 0
  %243 = vmatpush1.bf16.msra.mxu0 %v203
  %244 = vmatprep.subr.bf16.mxu0 0
  %245 = vmatpush1.bf16.msra.mxu0 %v202
  %246 = vmatprep.subr.bf16.mxu0 0
  %247 = vmatpush1.bf16.msra.mxu0 %v201
  %248 = vmatprep.subr.bf16.mxu0 0
  %249 = vmatpush1.bf16.msra.mxu0 %v200
  %250 = vmatprep.subr.bf16.mxu0 0
  %251 = vmatpush1.bf16.msra.mxu0 %v199
  %252 = vmatprep.subr.bf16.mxu0 0
  %253 = vmatpush1.bf16.msra.mxu0 %v198
  %254 = vmatprep.subr.bf16.mxu0 0
  %255 = vmatpush1.bf16.msra.mxu0 %v197
  %256 = vmatprep.subr.bf16.mxu0 0
  %257 = vmatpush2.bf16.msra.mxu0 %v212
  %258 = vmatprep.subr.bf16.mxu0 0
  %259 = vmatpush2.bf16.msra.mxu0 %v211
  %260 = vmatprep.subr.bf16.mxu0 0
  %261 = vmatpush2.bf16.msra.mxu0 %v210
  %262 = vmatprep.subr.bf16.mxu0 0
  %263 = vmatpush2.bf16.msra.mxu0 %v209
  %264 = vmatprep.subr.bf16.mxu0 0
  %265 = vmatpush2.bf16.msra.mxu0 %v208
  %266 = vmatprep.subr.bf16.mxu0 0
  %267 = vmatpush2.bf16.msra.mxu0 %v207
  %268 = vmatprep.subr.bf16.mxu0 0
  %269 = vmatpush2.bf16.msra.mxu0 %v206
  %270 = vmatprep.subr.bf16.mxu0 0
  %271 = vmatpush2.bf16.msra.mxu0 %v205
  %272 = vmatprep.mubr.bf16.mxu0 %v64
  %273 = vmatmul.mubr.bf16.gmra.mxu0 %v72
  %v274 = vpop.f32.mrf.mxu0
  %v275 = vadd.f32 0.0, %v274
  %v276 = vpop.f32.mrf.mxu0
  %v277 = vpop.f32.mrf.mxu0
  %v278 = vadd.f32 0.0, %v277
  %v279 = vpop.f32.mrf.mxu0
  %280 = vdwg.mxu0
  %281 = vmatprep.subr.bf16.mxu0 0
  %282 = vmatpush1.bf16.msra.mxu0 0
  %283 = vmatprep.subr.bf16.mxu0 0
  %284 = vmatpush1.bf16.msra.mxu0 0
  %285 = vmatprep.subr.bf16.mxu0 0
  %286 = vmatpush1.bf16.msra.mxu0 0
  %287 = vmatprep.subr.bf16.mxu0 0
  %288 = vmatpush1.bf16.msra.mxu0 0
  %289 = vmatprep.subr.bf16.mxu0 0
  %290 = vmatpush1.bf16.msra.mxu0 %v216
  %291 = vmatprep.subr.bf16.mxu0 0
  %292 = vmatpush1.bf16.msra.mxu0 %v215
  %293 = vmatprep.subr.bf16.mxu0 0
  %294 = vmatpush1.bf16.msra.mxu0 %v214
  %295 = vmatprep.subr.bf16.mxu0 0
  %296 = vmatpush1.bf16.msra.mxu0 %v213
  %297 = vmatprep.subr.bf16.mxu0 0
  %298 = vmatpush2.bf16.msra.mxu0 0
  %299 = vmatprep.subr.bf16.mxu0 0
  %300 = vmatpush2.bf16.msra.mxu0 0
  %301 = vmatprep.subr.bf16.mxu0 0
  %302 = vmatpush2.bf16.msra.mxu0 0
  %303 = vmatprep.subr.bf16.mxu0 0
  %304 = vmatpush2.bf16.msra.mxu0 0
  %305 = vmatprep.subr.bf16.mxu0 0
  %306 = vmatpush2.bf16.msra.mxu0 0
  %307 = vmatprep.subr.bf16.mxu0 0
  %308 = vmatpush2.bf16.msra.mxu0 0
  %309 = vmatprep.subr.bf16.mxu0 0
  %310 = vmatpush2.bf16.msra.mxu0 0
  %311 = vmatprep.subr.bf16.mxu0 0
  %312 = vmatpush2.bf16.msra.mxu0 0
  %313 = vmatprep.mubr.bf16.mxu0 0
  %314 = vmatmul.mubr.bf16.gmra.mxu0 %v238
  %v315 = vpop.f32.mrf.mxu0
  %v316 = vadd.f32 %v275, %v315
  %v317 = vpop.f32.mrf.mxu0
  %v318 = vpop.f32.mrf.mxu0
  %v319 = vadd.f32 %v278, %v318
  %v320 = vpop.f32.mrf.mxu0
  %321 = vdwg.mxu0
  %322 = vst [vmem:[%s2] sm:$0xff] %v316
  %323 = vst [vmem:[%s2 + $0x8] sm:$0xff] %v319
  %s324 = scalar_lea.vmem %s0, 64
  %v325 = vld [vmem:[%s324] sm:$0xff]
  %v326 = vld [vmem:[%s324 + $0x8] sm:$0xff]
  %v327 = vld [vmem:[%s324 + $0x10] sm:$0xff]
  %v328 = vld [vmem:[%s324 + $0x18] sm:$0xff]
  %v329 = vld [vmem:[%s324 + $0x20] sm:$0xff]
  %v330 = vld [vmem:[%s324 + $0x28] sm:$0xff]
  %v331 = vld [vmem:[%s324 + $0x30] sm:$0xff]
  %v332 = vld [vmem:[%s324 + $0x38] sm:$0xff]
  %v333 = vadd.f32 %v325, %v329
  %v334 = vadd.f32 %v326, %v330
  %v335 = vadd.f32 %v327, %v331
  %v336 = vadd.f32 %v328, %v332
  %v337 = vmul.f32 %v333, %v24
  %v338 = vmul.f32 %v334, %v24
  %v339 = vmul.f32 %v335, %v24
  %v340 = vmul.f32 %v336, %v24
  %v341 = vpack.c.bf16 %v339, %v337
  %v342 = vpack.c.bf16 %v340, %v338
  %v344 = vshrl.u32 %v342, 16
  %v346 = vrot.slane %v344, 7
  %v347 = vshll.u32 %v342, 16
  %v349 = vor.u32 %v346, %v347
  %350 = vrot.lane.b32.xlu0 %v349, 32
  %v351 = vpop.permute.xlu0 %350
  %v353 = vsel %vm43, 0, %v351
  %v355 = vshrl.u32 %v341, 16
  %v357 = vshll.u32 %v341, 16
  %v359 = vrot.slane %v357, 1
  %v360 = vor.u32 %v355, %v359
  %v362 = vsel %vm55, %v360, 0
  %365 = vrot.lane.b32.xlu0 %v341, 32
  %v366 = vpop.permute.xlu0 %365
  %367 = vrot.lane.b32.xlu0 %v342, 32
  %v368 = vpop.permute.xlu0 %367
  %v369 = vsel %vm63, %v366, %v368
  %372 = vrot.lane.b32.xlu0 %v362, 32
  %v373 = vpop.permute.xlu0 %372
  %v376 = vsel %vm69, %v353, %v366
  %v380 = vsel %vm69, %v368, %v373
  %v381 = vld [vmem:[%s1] sm:$0xf]
  %v382 = vld [vmem:[%s1 + $0x4] sm:$0xf]
  %v383 = vld [vmem:[%s1 + $0x8] sm:$0xf]
  %v384 = vld [vmem:[%s1 + $0xc] sm:$0xf]
  %v385 = vld [vmem:[%s1 + $0x10] sm:$0xf]
  %v386 = vld [vmem:[%s1 + $0x14] sm:$0xf]
  %v387 = vld [vmem:[%s1 + $0x18] sm:$0xf]
  %v388 = vld [vmem:[%s1 + $0x1c] sm:$0xf]
  %v389 = vld [vmem:[%s1 + $0x20] sm:$0xf]
  %v390 = vld [vmem:[%s1 + $0x24] sm:$0xf]
  %v391 = vld [vmem:[%s1 + $0x28] sm:$0xf]
  %v392 = vld [vmem:[%s1 + $0x2c] sm:$0xf]
  %v393 = vld [vmem:[%s1 + $0x30] sm:$0xf]
  %v394 = vld [vmem:[%s1 + $0x34] sm:$0xf]
  %v395 = vld [vmem:[%s1 + $0x38] sm:$0xf]
  %v396 = vld [vmem:[%s1 + $0x3c] sm:$0xf]
  %v397 = vld [vmem:[%s1 + $0x40] sm:$0xf]
  %v398 = vld [vmem:[%s1 + $0x44] sm:$0xf]
  %v399 = vld [vmem:[%s1 + $0x48] sm:$0xf]
  %v400 = vld [vmem:[%s1 + $0x4c] sm:$0xf]
  %v401 = vld [vmem:[%s1 + $0x50] sm:$0xf]
  %v402 = vld [vmem:[%s1 + $0x54] sm:$0xf]
  %v403 = vld [vmem:[%s1 + $0x58] sm:$0xf]
  %v404 = vld [vmem:[%s1 + $0x5c] sm:$0xf]
  %v405 = vld [vmem:[%s1 + $0x60] sm:$0xf]
  %v406 = vld [vmem:[%s1 + $0x64] sm:$0xf]
  %v407 = vld [vmem:[%s1 + $0x68] sm:$0xf]
  %v408 = vld [vmem:[%s1 + $0x6c] sm:$0xf]
  %v409 = vld [vmem:[%s1 + $0x70] sm:$0xf]
  %v410 = vld [vmem:[%s1 + $0x74] sm:$0xf]
  %v411 = vld [vmem:[%s1 + $0x78] sm:$0xf]
  %v412 = vld [vmem:[%s1 + $0x7c] sm:$0xf]
  %v413 = vld [vmem:[%s1 + $0x80] sm:$0xf]
  %v414 = vld [vmem:[%s1 + $0x84] sm:$0xf]
  %v415 = vld [vmem:[%s1 + $0x88] sm:$0xf]
  %v416 = vld [vmem:[%s1 + $0x8c] sm:$0xf]
  %v417 = vld [vmem:[%s1 + $0x90] sm:$0xf]
  %v418 = vld [vmem:[%s1 + $0x94] sm:$0xf]
  %v419 = vld [vmem:[%s1 + $0x98] sm:$0xf]
  %v420 = vld [vmem:[%s1 + $0x9c] sm:$0xf]
  %v461 = vunpack.c.l.b16 %v381
  %v462 = vunpack.c.l.b16 %v382
  %v463 = vunpack.c.l.b16 %v383
  %v464 = vunpack.c.l.b16 %v384
  %v465 = vunpack.c.l.b16 %v385
  %v466 = vunpack.c.l.b16 %v386
  %v467 = vunpack.c.l.b16 %v387
  %v468 = vunpack.c.l.b16 %v388
  %v469 = vunpack.c.l.b16 %v389
  %v470 = vunpack.c.l.b16 %v390
  %v471 = vunpack.c.l.b16 %v391
  %v472 = vunpack.c.l.b16 %v392
  %v473 = vunpack.c.l.b16 %v393
  %v474 = vunpack.c.l.b16 %v394
  %v475 = vunpack.c.l.b16 %v395
  %v476 = vunpack.c.l.b16 %v396
  %v477 = vunpack.c.l.b16 %v397
  %v478 = vunpack.c.l.b16 %v398
  %v479 = vunpack.c.l.b16 %v399
  %v480 = vunpack.c.l.b16 %v400
  %v481 = vunpack.c.l.b16 %v401
  %v482 = vunpack.c.l.b16 %v402
  %v483 = vunpack.c.l.b16 %v403
  %v484 = vunpack.c.l.b16 %v404
  %v485 = vunpack.c.l.b16 %v405
  %v486 = vunpack.c.l.b16 %v406
  %v487 = vunpack.c.l.b16 %v407
  %v488 = vunpack.c.l.b16 %v408
  %v489 = vunpack.c.l.b16 %v409
  %v490 = vunpack.c.l.b16 %v410
  %v491 = vunpack.c.l.b16 %v411
  %v492 = vunpack.c.l.b16 %v412
  %v493 = vunpack.c.l.b16 %v413
  %v494 = vunpack.c.l.b16 %v414
  %v495 = vunpack.c.l.b16 %v415
  %v496 = vunpack.c.l.b16 %v416
  %v497 = vunpack.c.l.b16 %v417
  %v498 = vunpack.c.l.b16 %v418
  %v499 = vunpack.c.l.b16 %v419
  %v500 = vunpack.c.l.b16 %v420
  %v501 = vpack.c.b16 %v462, %v461
  %v502 = vpack.c.b16 %v464, %v463
  %v503 = vpack.c.b16 %v466, %v465
  %v504 = vpack.c.b16 %v468, %v467
  %v505 = vpack.c.b16 %v470, %v469
  %v506 = vpack.c.b16 %v472, %v471
  %v507 = vpack.c.b16 %v474, %v473
  %v508 = vpack.c.b16 %v476, %v475
  %v509 = vpack.c.b16 %v478, %v477
  %v510 = vpack.c.b16 %v480, %v479
  %v511 = vpack.c.b16 %v482, %v481
  %v512 = vpack.c.b16 %v484, %v483
  %v513 = vpack.c.b16 %v486, %v485
  %v514 = vpack.c.b16 %v488, %v487
  %v515 = vpack.c.b16 %v490, %v489
  %v516 = vpack.c.b16 %v492, %v491
  %v517 = vpack.c.b16 %v494, %v493
  %v518 = vpack.c.b16 %v496, %v495
  %v519 = vpack.c.b16 %v498, %v497
  %v520 = vpack.c.b16 %v500, %v499
  %v541 = vsel %vm237, %v380, 0
  %543 = vmatprep.subr.bf16.mxu0 0
  %544 = vmatpush1.bf16.msra.mxu0 %v508
  %545 = vmatprep.subr.bf16.mxu0 0
  %546 = vmatpush1.bf16.msra.mxu0 %v507
  %547 = vmatprep.subr.bf16.mxu0 0
  %548 = vmatpush1.bf16.msra.mxu0 %v506
  %549 = vmatprep.subr.bf16.mxu0 0
  %550 = vmatpush1.bf16.msra.mxu0 %v505
  %551 = vmatprep.subr.bf16.mxu0 0
  %552 = vmatpush1.bf16.msra.mxu0 %v504
  %553 = vmatprep.subr.bf16.mxu0 0
  %554 = vmatpush1.bf16.msra.mxu0 %v503
  %555 = vmatprep.subr.bf16.mxu0 0
  %556 = vmatpush1.bf16.msra.mxu0 %v502
  %557 = vmatprep.subr.bf16.mxu0 0
  %558 = vmatpush1.bf16.msra.mxu0 %v501
  %559 = vmatprep.subr.bf16.mxu0 0
  %560 = vmatpush2.bf16.msra.mxu0 %v516
  %561 = vmatprep.subr.bf16.mxu0 0
  %562 = vmatpush2.bf16.msra.mxu0 %v515
  %563 = vmatprep.subr.bf16.mxu0 0
  %564 = vmatpush2.bf16.msra.mxu0 %v514
  %565 = vmatprep.subr.bf16.mxu0 0
  %566 = vmatpush2.bf16.msra.mxu0 %v513
  %567 = vmatprep.subr.bf16.mxu0 0
  %568 = vmatpush2.bf16.msra.mxu0 %v512
  %569 = vmatprep.subr.bf16.mxu0 0
  %570 = vmatpush2.bf16.msra.mxu0 %v511
  %571 = vmatprep.subr.bf16.mxu0 0
  %572 = vmatpush2.bf16.msra.mxu0 %v510
  %573 = vmatprep.subr.bf16.mxu0 0
  %574 = vmatpush2.bf16.msra.mxu0 %v509
  %575 = vmatprep.mubr.bf16.mxu0 %v369
  %576 = vmatmul.mubr.bf16.gmra.mxu0 %v376
  %v577 = vpop.f32.mrf.mxu0
  %v578 = vadd.f32 0.0, %v577
  %v579 = vpop.f32.mrf.mxu0
  %v580 = vpop.f32.mrf.mxu0
  %v581 = vadd.f32 0.0, %v580
  %v582 = vpop.f32.mrf.mxu0
  %583 = vdwg.mxu0
  %584 = vmatprep.subr.bf16.mxu0 0
  %585 = vmatpush1.bf16.msra.mxu0 0
  %586 = vmatprep.subr.bf16.mxu0 0
  %587 = vmatpush1.bf16.msra.mxu0 0
  %588 = vmatprep.subr.bf16.mxu0 0
  %589 = vmatpush1.bf16.msra.mxu0 0
  %590 = vmatprep.subr.bf16.mxu0 0
  %591 = vmatpush1.bf16.msra.mxu0 0
  %592 = vmatprep.subr.bf16.mxu0 0
  %593 = vmatpush1.bf16.msra.mxu0 %v520
  %594 = vmatprep.subr.bf16.mxu0 0
  %595 = vmatpush1.bf16.msra.mxu0 %v519
  %596 = vmatprep.subr.bf16.mxu0 0
  %597 = vmatpush1.bf16.msra.mxu0 %v518
  %598 = vmatprep.subr.bf16.mxu0 0
  %599 = vmatpush1.bf16.msra.mxu0 %v517
  %600 = vmatprep.subr.bf16.mxu0 0
  %601 = vmatpush2.bf16.msra.mxu0 0
  %602 = vmatprep.subr.bf16.mxu0 0
  %603 = vmatpush2.bf16.msra.mxu0 0
  %604 = vmatprep.subr.bf16.mxu0 0
  %605 = vmatpush2.bf16.msra.mxu0 0
  %606 = vmatprep.subr.bf16.mxu0 0
  %607 = vmatpush2.bf16.msra.mxu0 0
  %608 = vmatprep.subr.bf16.mxu0 0
  %609 = vmatpush2.bf16.msra.mxu0 0
  %610 = vmatprep.subr.bf16.mxu0 0
  %611 = vmatpush2.bf16.msra.mxu0 0
  %612 = vmatprep.subr.bf16.mxu0 0
  %613 = vmatpush2.bf16.msra.mxu0 0
  %614 = vmatprep.subr.bf16.mxu0 0
  %615 = vmatpush2.bf16.msra.mxu0 0
  %616 = vmatprep.mubr.bf16.mxu0 0
  %617 = vmatmul.mubr.bf16.gmra.mxu0 %v541
  %v618 = vpop.f32.mrf.mxu0
  %v619 = vadd.f32 %v578, %v618
  %v620 = vpop.f32.mrf.mxu0
  %v621 = vpop.f32.mrf.mxu0
  %v622 = vadd.f32 %v581, %v621
  %v623 = vpop.f32.mrf.mxu0
  %624 = vdwg.mxu0
  %s625 = scalar_lea.vmem %s2, 16
  %626 = vst [vmem:[%s625] sm:$0xff] %v619
  %627 = vst [vmem:[%s625 + $0x8] sm:$0xff] %v622
  // Predicated region
  $region10: #{passt_forward.3} parent=0 // pred_check
    _
  $region11: #{passt_forward.3} parent=0 // pred_check_branch
    %629 = sbr.rel (0) target = $region13
  $region12: #{passt_forward.3} parent=0 // pred_region
    _
  $region13: #{passt_forward.3} parent=0 // pred_fallthru
    _
  // Predicated region
  $region14: #{passt_forward.3} parent=0 // pred_check
    _
  $region15: #{passt_forward.3} parent=0 // pred_check_branch
    %631 = sbr.rel (0) target = $region17
  $region16: #{passt_forward.3} parent=0 // pred_region
    _
  $region17: #{passt_forward.3} parent=0 // pred_fallthru
    _

// kernel: passt_forward.4
$region0: #{passt_forward.4}
  #allocation0 [shape = 'u32[]', space=smem, size = 0x4, offset = 0x4, fixed_abs, tag = 'smem constant byte address 0x4 - core index']
  #allocation1 [shape = 'u32[144,128]{1,0:T(1,128)}', space=vmem, size = 0x12000, scoped, tag = 'internal scratch']
  %s0 = inlined_call_operand.vmem [shape: f32[2,128,16], index: 0, kind: input, shape index: {}]
  %s1 = inlined_call_operand.vmem [shape: bf16[32,128], index: 1, kind: input, shape index: {}]
  %s2 = inlined_call_operand.vmem [shape: bf16[64,16], index: 2, kind: input, shape index: {}]
  %s3 = inlined_call_operand.vmem [shape: f32[2,120,16], index: 3, kind: output, shape index: {}]
  %s4 = sld [smem:[#allocation0]]
  $region22: #{passt_forward.4} parent=0
    _
  %s6 = ssub.s32 1, %s4
  %s7 = scalar_select 0, %s6, %s4
  // Predicated region
  $region2: #{passt_forward.4} parent=0 // pred_check
    _
  $region3: #{passt_forward.4} parent=0 // pred_check_branch
    %9 = sbr.rel (0) target = $region5
  $region4: #{passt_forward.4} parent=0 // pred_region
    _
  $region5: #{passt_forward.4} parent=0 // pred_fallthru
    _
  // Predicated region
  $region6: #{passt_forward.4} parent=0 // pred_check
    _
  $region7: #{passt_forward.4} parent=0 // pred_check_branch
    %11 = sbr.rel (0) target = $region9
  $region8: #{passt_forward.4} parent=0 // pred_region
    _
  $region9: #{passt_forward.4} parent=0 // pred_fallthru
    _
  // Predicated region
  $region10: #{passt_forward.4} parent=0 // pred_check
    _
  $region11: #{passt_forward.4} parent=0 // pred_check_branch
    %13 = sbr.rel (0) target = $region13
  $region12: #{passt_forward.4} parent=0 // pred_region
    _
  $region13: #{passt_forward.4} parent=0 // pred_fallthru
    _
  %v15 = vld [vmem:[%s0] sm:$0xff]
  %v16 = vld [vmem:[%s0 + $0x8] sm:$0xff]
  %v17 = vld [vmem:[%s0 + $0x10] sm:$0xff]
  %v18 = vld [vmem:[%s0 + $0x18] sm:$0xff]
  %v19 = vld [vmem:[%s0 + $0x20] sm:$0xff]
  %v20 = vld [vmem:[%s0 + $0x28] sm:$0xff]
  %v21 = vld [vmem:[%s0 + $0x30] sm:$0xff]
  %v22 = vld [vmem:[%s0 + $0x38] sm:$0xff]
  %v23 = vld [vmem:[%s0 + $0x40] sm:$0xff]
  %v24 = vld [vmem:[%s0 + $0x48] sm:$0xff]
  %v25 = vld [vmem:[%s0 + $0x50] sm:$0xff]
  %v26 = vld [vmem:[%s0 + $0x58] sm:$0xff]
  %v27 = vld [vmem:[%s0 + $0x60] sm:$0xff]
  %v28 = vld [vmem:[%s0 + $0x68] sm:$0xff]
  %v29 = vld [vmem:[%s0 + $0x70] sm:$0xff]
  %v30 = vld [vmem:[%s0 + $0x78] sm:$0xff]
  %vm47 = vcmask 1046528
  %v48 = vrot.slane %v15, 1
  %v49 = vrot.slane %v16, 1
  %v50 = vsel %vm47, %v48, %v49
  %v51 = vrot.slane %v17, 1
  %v52 = vsel %vm47, %v49, %v51
  %v53 = vrot.slane %v18, 1
  %v54 = vsel %vm47, %v51, %v53
  %v55 = vrot.slane %v19, 1
  %v56 = vsel %vm47, %v53, %v55
  %v57 = vrot.slane %v20, 1
  %v58 = vsel %vm47, %v55, %v57
  %v59 = vrot.slane %v21, 1
  %v60 = vsel %vm47, %v57, %v59
  %v61 = vrot.slane %v22, 1
  %v62 = vsel %vm47, %v59, %v61
  %v63 = vrot.slane %v23, 1
  %v64 = vsel %vm47, %v61, %v63
  %v65 = vrot.slane %v24, 1
  %v66 = vsel %vm47, %v63, %v65
  %v67 = vrot.slane %v25, 1
  %v68 = vsel %vm47, %v65, %v67
  %v69 = vrot.slane %v26, 1
  %v70 = vsel %vm47, %v67, %v69
  %v71 = vrot.slane %v27, 1
  %v72 = vsel %vm47, %v69, %v71
  %v73 = vrot.slane %v28, 1
  %v74 = vsel %vm47, %v71, %v73
  %v75 = vrot.slane %v29, 1
  %v76 = vsel %vm47, %v73, %v75
  %v77 = vrot.slane %v30, 1
  %v78 = vsel %vm47, %v75, %v77
  %79 = vrot.lane.b32.xlu0 %v50, 16
  %v80 = vpop.permute.xlu0 %79
  %81 = vrot.lane.b32.xlu0 %v52, 16
  %v82 = vpop.permute.xlu0 %81
  %83 = vrot.lane.b32.xlu0 %v54, 16
  %v84 = vpop.permute.xlu0 %83
  %85 = vrot.lane.b32.xlu0 %v56, 16
  %v86 = vpop.permute.xlu0 %85
  %87 = vrot.lane.b32.xlu0 %v58, 16
  %v88 = vpop.permute.xlu0 %87
  %89 = vrot.lane.b32.xlu0 %v60, 16
  %v90 = vpop.permute.xlu0 %89
  %91 = vrot.lane.b32.xlu0 %v62, 16
  %v92 = vpop.permute.xlu0 %91
  %93 = vrot.lane.b32.xlu0 %v64, 16
  %v94 = vpop.permute.xlu0 %93
  %95 = vrot.lane.b32.xlu0 %v66, 16
  %v96 = vpop.permute.xlu0 %95
  %97 = vrot.lane.b32.xlu0 %v68, 16
  %v98 = vpop.permute.xlu0 %97
  %99 = vrot.lane.b32.xlu0 %v70, 16
  %v100 = vpop.permute.xlu0 %99
  %101 = vrot.lane.b32.xlu0 %v72, 16
  %v102 = vpop.permute.xlu0 %101
  %103 = vrot.lane.b32.xlu0 %v74, 16
  %v104 = vpop.permute.xlu0 %103
  %105 = vrot.lane.b32.xlu0 %v76, 16
  %v106 = vpop.permute.xlu0 %105
  %107 = vrot.lane.b32.xlu0 %v78, 16
  %v108 = vpop.permute.xlu0 %107
  %vm124 = vcmask 130048
  %v125 = vsel %vm124, %v15, %v80
  %v126 = vsel %vm124, %v16, %v82
  %v127 = vsel %vm124, %v17, %v84
  %v128 = vsel %vm124, %v18, %v86
  %v129 = vsel %vm124, %v19, %v88
  %v130 = vsel %vm124, %v20, %v90
  %v131 = vsel %vm124, %v21, %v92
  %v132 = vsel %vm124, %v22, %v94
  %v133 = vsel %vm124, %v23, %v96
  %v134 = vsel %vm124, %v24, %v98
  %v135 = vsel %vm124, %v25, %v100
  %v136 = vsel %vm124, %v26, %v102
  %v137 = vsel %vm124, %v27, %v104
  %v138 = vsel %vm124, %v28, %v106
  %v139 = vsel %vm124, %v29, %v108
  %s140 = scalar_lea.vmem %s0, 128
  %v141 = vld [vmem:[%s140] sm:$0xff]
  %v142 = vld [vmem:[%s140 + $0x8] sm:$0xff]
  %v143 = vld [vmem:[%s140 + $0x10] sm:$0xff]
  %v144 = vld [vmem:[%s140 + $0x18] sm:$0xff]
  %v145 = vld [vmem:[%s140 + $0x20] sm:$0xff]
  %v146 = vld [vmem:[%s140 + $0x28] sm:$0xff]
  %v147 = vld [vmem:[%s140 + $0x30] sm:$0xff]
  %v148 = vld [vmem:[%s140 + $0x38] sm:$0xff]
  %v149 = vld [vmem:[%s140 + $0x40] sm:$0xff]
  %v150 = vld [vmem:[%s140 + $0x48] sm:$0xff]
  %v151 = vld [vmem:[%s140 + $0x50] sm:$0xff]
  %v152 = vld [vmem:[%s140 + $0x58] sm:$0xff]
  %v153 = vld [vmem:[%s140 + $0x60] sm:$0xff]
  %v154 = vld [vmem:[%s140 + $0x68] sm:$0xff]
  %v155 = vld [vmem:[%s140 + $0x70] sm:$0xff]
  %v156 = vld [vmem:[%s140 + $0x78] sm:$0xff]
  %v173 = vrot.slane %v141, 1
  %v174 = vrot.slane %v142, 1
  %v175 = vsel %vm47, %v173, %v174
  %v176 = vrot.slane %v143, 1
  %v177 = vsel %vm47, %v174, %v176
  %v178 = vrot.slane %v144, 1
  %v179 = vsel %vm47, %v176, %v178
  %v180 = vrot.slane %v145, 1
  %v181 = vsel %vm47, %v178, %v180
  %v182 = vrot.slane %v146, 1
  %v183 = vsel %vm47, %v180, %v182
  %v184 = vrot.slane %v147, 1
  %v185 = vsel %vm47, %v182, %v184
  %v186 = vrot.slane %v148, 1
  %v187 = vsel %vm47, %v184, %v186
  %v188 = vrot.slane %v149, 1
  %v189 = vsel %vm47, %v186, %v188
  %v190 = vrot.slane %v150, 1
  %v191 = vsel %vm47, %v188, %v190
  %v192 = vrot.slane %v151, 1
  %v193 = vsel %vm47, %v190, %v192
  %v194 = vrot.slane %v152, 1
  %v195 = vsel %vm47, %v192, %v194
  %v196 = vrot.slane %v153, 1
  %v197 = vsel %vm47, %v194, %v196
  %v198 = vrot.slane %v154, 1
  %v199 = vsel %vm47, %v196, %v198
  %v200 = vrot.slane %v155, 1
  %v201 = vsel %vm47, %v198, %v200
  %v202 = vrot.slane %v156, 1
  %v203 = vsel %vm47, %v200, %v202
  %204 = vrot.lane.b32.xlu0 %v175, 16
  %v205 = vpop.permute.xlu0 %204
  %206 = vrot.lane.b32.xlu0 %v177, 16
  %v207 = vpop.permute.xlu0 %206
  %208 = vrot.lane.b32.xlu0 %v179, 16
  %v209 = vpop.permute.xlu0 %208
  %210 = vrot.lane.b32.xlu0 %v181, 16
  %v211 = vpop.permute.xlu0 %210
  %212 = vrot.lane.b32.xlu0 %v183, 16
  %v213 = vpop.permute.xlu0 %212
  %214 = vrot.lane.b32.xlu0 %v185, 16
  %v215 = vpop.permute.xlu0 %214
  %216 = vrot.lane.b32.xlu0 %v187, 16
  %v217 = vpop.permute.xlu0 %216
  %218 = vrot.lane.b32.xlu0 %v189, 16
  %v219 = vpop.permute.xlu0 %218
  %220 = vrot.lane.b32.xlu0 %v191, 16
  %v221 = vpop.permute.xlu0 %220
  %222 = vrot.lane.b32.xlu0 %v193, 16
  %v223 = vpop.permute.xlu0 %222
  %224 = vrot.lane.b32.xlu0 %v195, 16
  %v225 = vpop.permute.xlu0 %224
  %226 = vrot.lane.b32.xlu0 %v197, 16
  %v227 = vpop.permute.xlu0 %226
  %228 = vrot.lane.b32.xlu0 %v199, 16
  %v229 = vpop.permute.xlu0 %228
  %230 = vrot.lane.b32.xlu0 %v201, 16
  %v231 = vpop.permute.xlu0 %230
  %232 = vrot.lane.b32.xlu0 %v203, 16
  %v233 = vpop.permute.xlu0 %232
  %v249 = vsel %vm124, %v141, %v205
  %v250 = vsel %vm124, %v142, %v207
  %v251 = vsel %vm124, %v143, %v209
  %v252 = vsel %vm124, %v144, %v211
  %v253 = vsel %vm124, %v145, %v213
  %v254 = vsel %vm124, %v146, %v215
  %v255 = vsel %vm124, %v147, %v217
  %v256 = vsel %vm124, %v148, %v219
  %v257 = vsel %vm124, %v149, %v221
  %v258 = vsel %vm124, %v150, %v223
  %v259 = vsel %vm124, %v151, %v225
  %v260 = vsel %vm124, %v152, %v227
  %v261 = vsel %vm124, %v153, %v229
  %v262 = vsel %vm124, %v154, %v231
  %v263 = vsel %vm124, %v155, %v233
  %v264 = vpack.c.bf16 %v126, %v125
  %v265 = vpack.c.bf16 %v128, %v127
  %v266 = vpack.c.bf16 %v130, %v129
  %v267 = vpack.c.bf16 %v132, %v131
  %v268 = vpack.c.bf16 %v134, %v133
  %v269 = vpack.c.bf16 %v136, %v135
  %v270 = vpack.c.bf16 %v138, %v137
  %v271 = vpack.c.bf16 %v249, %v139
  %v272 = vpack.c.bf16 %v251, %v250
  %v273 = vpack.c.bf16 %v253, %v252
  %v274 = vpack.c.bf16 %v255, %v254
  %v275 = vpack.c.bf16 %v257, %v256
  %v276 = vpack.c.bf16 %v259, %v258
  %v277 = vpack.c.bf16 %v261, %v260
  %v278 = vpack.c.bf16 %v263, %v262
  %v279 = vld [vmem:[%s1] sm:$0xf]
  %v280 = vld [vmem:[%s1 + $0x4] sm:$0xf]
  %v281 = vld [vmem:[%s1 + $0x8] sm:$0xf]
  %v282 = vld [vmem:[%s1 + $0xc] sm:$0xf]
  %v287 = vunpack.c.l.b16 %v279
  %v288 = vunpack.c.l.b16 %v280
  %v289 = vunpack.c.l.b16 %v281
  %v290 = vunpack.c.l.b16 %v282
  %v291 = vpack.c.b16 %v288, %v287
  %v292 = vpack.c.b16 %v290, %v289
  %vm295 = vcmask 261120
  %v297 = vsel %vm295, %v264, 0
  %v300 = vsel %vm295, %v265, 0
  %v303 = vsel %vm295, %v266, 0
  %v306 = vsel %vm295, %v267, 0
  %v309 = vsel %vm295, %v268, 0
  %v312 = vsel %vm295, %v269, 0
  %v315 = vsel %vm295, %v270, 0
  %v318 = vsel %vm295, %v271, 0
  %v321 = vsel %vm295, %v272, 0
  %v324 = vsel %vm295, %v273, 0
  %v327 = vsel %vm295, %v274, 0
  %v330 = vsel %vm295, %v275, 0
  %v333 = vsel %vm295, %v276, 0
  %v336 = vsel %vm295, %v277, 0
  %v339 = vsel %vm295, %v278, 0
  %341 = vmatprep.subr.bf16.mxu0 0
  %342 = vmatpush1.bf16.msra.mxu0 0
  %343 = vmatprep.subr.bf16.mxu0 0
  %344 = vmatpush1.bf16.msra.mxu0 0
  %345 = vmatprep.subr.bf16.mxu0 0
  %346 = vmatpush1.bf16.msra.mxu0 0
  %347 = vmatprep.subr.bf16.mxu0 0
  %348 = vmatpush1.bf16.msra.mxu0 0
  %349 = vmatprep.subr.bf16.mxu0 0
  %350 = vmatpush1.bf16.msra.mxu0 0
  %351 = vmatprep.subr.bf16.mxu0 0
  %352 = vmatpush1.bf16.msra.mxu0 0
  %353 = vmatprep.subr.bf16.mxu0 0
  %354 = vmatpush1.bf16.msra.mxu0 %v292
  %355 = vmatprep.subr.bf16.mxu0 0
  %356 = vmatpush1.bf16.msra.mxu0 %v291
  %357 = vmatprep.subr.bf16.mxu0 0
  %358 = vmatpush2.bf16.msra.mxu0 0
  %359 = vmatprep.subr.bf16.mxu0 0
  %360 = vmatpush2.bf16.msra.mxu0 0
  %361 = vmatprep.subr.bf16.mxu0 0
  %362 = vmatpush2.bf16.msra.mxu0 0
  %363 = vmatprep.subr.bf16.mxu0 0
  %364 = vmatpush2.bf16.msra.mxu0 0
  %365 = vmatprep.subr.bf16.mxu0 0
  %366 = vmatpush2.bf16.msra.mxu0 0
  %367 = vmatprep.subr.bf16.mxu0 0
  %368 = vmatpush2.bf16.msra.mxu0 0
  %369 = vmatprep.subr.bf16.mxu0 0
  %370 = vmatpush2.bf16.msra.mxu0 0
  %371 = vmatprep.subr.bf16.mxu0 0
  %372 = vmatpush2.bf16.msra.mxu0 0
  %373 = vmatprep.mubr.bf16.mxu0 0
  %374 = vmatmul.mubr.bf16.gmra.mxu0 %v297
  %v375 = vpop.f32.mrf.mxu0
  %v376 = vadd.f32 0.0, %v375
  %v377 = vpop.f32.mrf.mxu0
  %v378 = vpop.f32.mrf.mxu0
  %v379 = vadd.f32 0.0, %v378
  %v380 = vpop.f32.mrf.mxu0
  %381 = vmatprep.mubr.bf16.mxu0 0
  %382 = vmatmul.mubr.bf16.gmra.mxu0 %v300
  %v383 = vpop.f32.mrf.mxu0
  %v384 = vadd.f32 0.0, %v383
  %v385 = vpop.f32.mrf.mxu0
  %v386 = vpop.f32.mrf.mxu0
  %v387 = vadd.f32 0.0, %v386
  %v388 = vpop.f32.mrf.mxu0
  %389 = vmatprep.mubr.bf16.mxu0 0
  %390 = vmatmul.mubr.bf16.gmra.mxu0 %v303
  %v391 = vpop.f32.mrf.mxu0
  %v392 = vadd.f32 0.0, %v391
  %v393 = vpop.f32.mrf.mxu0
  %v394 = vpop.f32.mrf.mxu0
  %v395 = vadd.f32 0.0, %v394
  %v396 = vpop.f32.mrf.mxu0
  %397 = vmatprep.mubr.bf16.mxu0 0
  %398 = vmatmul.mubr.bf16.gmra.mxu0 %v306
  %v399 = vpop.f32.mrf.mxu0
  %v400 = vadd.f32 0.0, %v399
  %v401 = vpop.f32.mrf.mxu0
  %v402 = vpop.f32.mrf.mxu0
  %v403 = vadd.f32 0.0, %v402
  %v404 = vpop.f32.mrf.mxu0
  %405 = vmatprep.mubr.bf16.mxu0 0
  %406 = vmatmul.mubr.bf16.gmra.mxu0 %v309
  %v407 = vpop.f32.mrf.mxu0
  %v408 = vadd.f32 0.0, %v407
  %v409 = vpop.f32.mrf.mxu0
  %v410 = vpop.f32.mrf.mxu0
  %v411 = vadd.f32 0.0, %v410
  %v412 = vpop.f32.mrf.mxu0
  %413 = vmatprep.mubr.bf16.mxu0 0
  %414 = vmatmul.mubr.bf16.gmra.mxu0 %v312
  %v415 = vpop.f32.mrf.mxu0
  %v416 = vadd.f32 0.0, %v415
  %v417 = vpop.f32.mrf.mxu0
  %v418 = vpop.f32.mrf.mxu0
  %v419 = vadd.f32 0.0, %v418
  %v420 = vpop.f32.mrf.mxu0
  %421 = vmatprep.mubr.bf16.mxu0 0
  %422 = vmatmul.mubr.bf16.gmra.mxu0 %v315
  %v423 = vpop.f32.mrf.mxu0
  %v424 = vadd.f32 0.0, %v423
  %v425 = vpop.f32.mrf.mxu0
  %v426 = vpop.f32.mrf.mxu0
  %v427 = vadd.f32 0.0, %v426
  %v428 = vpop.f32.mrf.mxu0
  %429 = vmatprep.mubr.bf16.mxu0 0
  %430 = vmatmul.mubr.bf16.gmra.mxu0 %v318
  %v431 = vpop.f32.mrf.mxu0
  %v432 = vadd.f32 0.0, %v431
  %v433 = vpop.f32.mrf.mxu0
  %v434 = vpop.f32.mrf.mxu0
  %v435 = vadd.f32 0.0, %v434
  %v436 = vpop.f32.mrf.mxu0
  %437 = vmatprep.mubr.bf16.mxu0 0
  %438 = vmatmul.mubr.bf16.gmra.mxu0 %v321
  %v439 = vpop.f32.mrf.mxu0
  %v440 = vadd.f32 0.0, %v439
  %v441 = vpop.f32.mrf.mxu0
  %v442 = vpop.f32.mrf.mxu0
  %v443 = vadd.f32 0.0, %v442
  %v444 = vpop.f32.mrf.mxu0
  %445 = vmatprep.mubr.bf16.mxu0 0
  %446 = vmatmul.mubr.bf16.gmra.mxu0 %v324
  %v447 = vpop.f32.mrf.mxu0
  %v448 = vadd.f32 0.0, %v447
  %v449 = vpop.f32.mrf.mxu0
  %v450 = vpop.f32.mrf.mxu0
  %v451 = vadd.f32 0.0, %v450
  %v452 = vpop.f32.mrf.mxu0
  %453 = vmatprep.mubr.bf16.mxu0 0
  %454 = vmatmul.mubr.bf16.gmra.mxu0 %v327
  %v455 = vpop.f32.mrf.mxu0
  %v456 = vadd.f32 0.0, %v455
  %v457 = vpop.f32.mrf.mxu0
  %v458 = vpop.f32.mrf.mxu0
  %v459 = vadd.f32 0.0, %v458
  %v460 = vpop.f32.mrf.mxu0
  %461 = vmatprep.mubr.bf16.mxu0 0
  %462 = vmatmul.mubr.bf16.gmra.mxu0 %v330
  %v463 = vpop.f32.mrf.mxu0
  %v464 = vadd.f32 0.0, %v463
  %v465 = vpop.f32.mrf.mxu0
  %v466 = vpop.f32.mrf.mxu0
  %v467 = vadd.f32 0.0, %v466
  %v468 = vpop.f32.mrf.mxu0
  %469 = vmatprep.mubr.bf16.mxu0 0
  %470 = vmatmul.mubr.bf16.gmra.mxu0 %v333
  %v471 = vpop.f32.mrf.mxu0
  %v472 = vadd.f32 0.0, %v471
  %v473 = vpop.f32.mrf.mxu0
  %v474 = vpop.f32.mrf.mxu0
  %v475 = vadd.f32 0.0, %v474
  %v476 = vpop.f32.mrf.mxu0
  %477 = vmatprep.mubr.bf16.mxu0 0
  %478 = vmatmul.mubr.bf16.gmra.mxu0 %v336
  %v479 = vpop.f32.mrf.mxu0
  %v480 = vadd.f32 0.0, %v479
  %v481 = vpop.f32.mrf.mxu0
  %v482 = vpop.f32.mrf.mxu0
  %v483 = vadd.f32 0.0, %v482
  %v484 = vpop.f32.mrf.mxu0
  %485 = vmatprep.mubr.bf16.mxu0 0
  %486 = vmatmul.mubr.bf16.gmra.mxu0 %v339
  %v487 = vpop.f32.mrf.mxu0
  %v488 = vadd.f32 0.0, %v487
  %v489 = vpop.f32.mrf.mxu0
  %v490 = vpop.f32.mrf.mxu0
  %v491 = vadd.f32 0.0, %v490
  %v492 = vpop.f32.mrf.mxu0
  %493 = vdwg.mxu0
  %v494 = vmul.f32 %v376, %v376
  %v495 = vmul.f32 %v379, %v379
  %v496 = vmul.f32 %v384, %v384
  %v497 = vmul.f32 %v387, %v387
  %v498 = vmul.f32 %v392, %v392
  %v499 = vmul.f32 %v395, %v395
  %v500 = vmul.f32 %v400, %v400
  %v501 = vmul.f32 %v403, %v403
  %v502 = vmul.f32 %v408, %v408
  %v503 = vmul.f32 %v411, %v411
  %v504 = vmul.f32 %v416, %v416
  %v505 = vmul.f32 %v419, %v419
  %v506 = vmul.f32 %v424, %v424
  %v507 = vmul.f32 %v427, %v427
  %v508 = vmul.f32 %v432, %v432
  %v509 = vmul.f32 %v435, %v435
  %v510 = vmul.f32 %v440, %v440
  %v511 = vmul.f32 %v443, %v443
  %v512 = vmul.f32 %v448, %v448
  %v513 = vmul.f32 %v451, %v451
  %v514 = vmul.f32 %v456, %v456
  %v515 = vmul.f32 %v459, %v459
  %v516 = vmul.f32 %v464, %v464
  %v517 = vmul.f32 %v467, %v467
  %v518 = vmul.f32 %v472, %v472
  %v519 = vmul.f32 %v475, %v475
  %v520 = vmul.f32 %v480, %v480
  %v521 = vmul.f32 %v483, %v483
  %v522 = vmul.f32 %v488, %v488
  %v523 = vmul.f32 %v491, %v491
  %554 = vrot.lane.b32.xlu0 %v494, 64
  %v555 = vpop.permute.xlu0 %554
  %556 = vrot.lane.b32.xlu0 %v495, 64
  %v557 = vpop.permute.xlu0 %556
  %558 = vrot.lane.b32.xlu0 %v496, 64
  %v559 = vpop.permute.xlu0 %558
  %560 = vrot.lane.b32.xlu0 %v497, 64
  %v561 = vpop.permute.xlu0 %560
  %562 = vrot.lane.b32.xlu0 %v498, 64
  %v563 = vpop.permute.xlu0 %562
  %564 = vrot.lane.b32.xlu0 %v499, 64
  %v565 = vpop.permute.xlu0 %564
  %566 = vrot.lane.b32.xlu0 %v500, 64
  %v567 = vpop.permute.xlu0 %566
  %568 = vrot.lane.b32.xlu0 %v501, 64
  %v569 = vpop.permute.xlu0 %568
  %570 = vrot.lane.b32.xlu0 %v502, 64
  %v571 = vpop.permute.xlu0 %570
  %572 = vrot.lane.b32.xlu0 %v503, 64
  %v573 = vpop.permute.xlu0 %572
  %574 = vrot.lane.b32.xlu0 %v504, 64
  %v575 = vpop.permute.xlu0 %574
  %576 = vrot.lane.b32.xlu0 %v505, 64
  %v577 = vpop.permute.xlu0 %576
  %578 = vrot.lane.b32.xlu0 %v506, 64
  %v579 = vpop.permute.xlu0 %578
  %580 = vrot.lane.b32.xlu0 %v507, 64
  %v581 = vpop.permute.xlu0 %580
  %582 = vrot.lane.b32.xlu0 %v508, 64
  %v583 = vpop.permute.xlu0 %582
  %584 = vrot.lane.b32.xlu0 %v509, 64
  %v585 = vpop.permute.xlu0 %584
  %586 = vrot.lane.b32.xlu0 %v510, 64
  %v587 = vpop.permute.xlu0 %586
  %588 = vrot.lane.b32.xlu0 %v511, 64
  %v589 = vpop.permute.xlu0 %588
  %590 = vrot.lane.b32.xlu0 %v512, 64
  %v591 = vpop.permute.xlu0 %590
  %592 = vrot.lane.b32.xlu0 %v513, 64
  %v593 = vpop.permute.xlu0 %592
  %594 = vrot.lane.b32.xlu0 %v514, 64
  %v595 = vpop.permute.xlu0 %594
  %596 = vrot.lane.b32.xlu0 %v515, 64
  %v597 = vpop.permute.xlu0 %596
  %598 = vrot.lane.b32.xlu0 %v516, 64
  %v599 = vpop.permute.xlu0 %598
  %600 = vrot.lane.b32.xlu0 %v517, 64
  %v601 = vpop.permute.xlu0 %600
  %602 = vrot.lane.b32.xlu0 %v518, 64
  %v603 = vpop.permute.xlu0 %602
  %604 = vrot.lane.b32.xlu0 %v519, 64
  %v605 = vpop.permute.xlu0 %604
  %606 = vrot.lane.b32.xlu0 %v520, 64
  %v607 = vpop.permute.xlu0 %606
  %608 = vrot.lane.b32.xlu0 %v521, 64
  %v609 = vpop.permute.xlu0 %608
  %610 = vrot.lane.b32.xlu0 %v522, 64
  %v611 = vpop.permute.xlu0 %610
  %612 = vrot.lane.b32.xlu0 %v523, 64
  %v613 = vpop.permute.xlu0 %612
  %v644 = vadd.f32 %v494, %v555
  %v645 = vadd.f32 %v495, %v557
  %v646 = vadd.f32 %v496, %v559
  %v647 = vadd.f32 %v497, %v561
  %v648 = vadd.f32 %v498, %v563
  %v649 = vadd.f32 %v499, %v565
  %v650 = vadd.f32 %v500, %v567
  %v651 = vadd.f32 %v501, %v569
  %v652 = vadd.f32 %v502, %v571
  %v653 = vadd.f32 %v503, %v573
  %v654 = vadd.f32 %v504, %v575
  %v655 = vadd.f32 %v505, %v577
  %v656 = vadd.f32 %v506, %v579
  %v657 = vadd.f32 %v507, %v581
  %v658 = vadd.f32 %v508, %v583
  %v659 = vadd.f32 %v509, %v585
  %v660 = vadd.f32 %v510, %v587
  %v661 = vadd.f32 %v511, %v589
  %v662 = vadd.f32 %v512, %v591
  %v663 = vadd.f32 %v513, %v593
  %v664 = vadd.f32 %v514, %v595
  %v665 = vadd.f32 %v515, %v597
  %v666 = vadd.f32 %v516, %v599
  %v667 = vadd.f32 %v517, %v601
  %v668 = vadd.f32 %v518, %v603
  %v669 = vadd.f32 %v519, %v605
  %v670 = vadd.f32 %v520, %v607
  %v671 = vadd.f32 %v521, %v609
  %v672 = vadd.f32 %v522, %v611
  %v673 = vadd.f32 %v523, %v613
  %v674 = vpack.c.bf16 %v645, %v644
  %v675 = vpack.c.bf16 %v647, %v646
  %v676 = vpack.c.bf16 %v649, %v648
  %v677 = vpack.c.bf16 %v651, %v650
  %v678 = vpack.c.bf16 %v653, %v652
  %v679 = vpack.c.bf16 %v655, %v654
  %v680 = vpack.c.bf16 %v657, %v656
  %v681 = vpack.c.bf16 %v659, %v658
  %v682 = vpack.c.bf16 %v661, %v660
  %v683 = vpack.c.bf16 %v663, %v662
  %v684 = vpack.c.bf16 %v665, %v664
  %v685 = vpack.c.bf16 %v667, %v666
  %v686 = vpack.c.bf16 %v669, %v668
  %v687 = vpack.c.bf16 %v671, %v670
  %v688 = vpack.c.bf16 %v673, %v672
  %v689 = vld [vmem:[%s2] sm:$0xf]
  %v690 = vld [vmem:[%s2 + $0x4] sm:$0xf]
  %v691 = vld [vmem:[%s2 + $0x8] sm:$0xf]
  %v692 = vld [vmem:[%s2 + $0xc] sm:$0xf]
  %v693 = vld [vmem:[%s2 + $0x10] sm:$0xf]
  %v694 = vld [vmem:[%s2 + $0x14] sm:$0xf]
  %v695 = vld [vmem:[%s2 + $0x18] sm:$0xf]
  %v696 = vld [vmem:[%s2 + $0x1c] sm:$0xf]
  %v705 = vunpack.c.l.b16 %v689
  %v706 = vunpack.c.l.b16 %v690
  %v707 = vunpack.c.l.b16 %v691
  %v708 = vunpack.c.l.b16 %v692
  %v709 = vunpack.c.l.b16 %v693
  %v710 = vunpack.c.l.b16 %v694
  %v711 = vunpack.c.l.b16 %v695
  %v712 = vunpack.c.l.b16 %v696
  %v713 = vpack.c.b16 %v706, %v705
  %v714 = vpack.c.b16 %v708, %v707
  %v715 = vpack.c.b16 %v710, %v709
  %v716 = vpack.c.b16 %v712, %v711
  %vm721 = vcmask 523264
  %v723 = vsel %vm721, %v674, 0
  %v726 = vsel %vm721, %v675, 0
  %v729 = vsel %vm721, %v676, 0
  %v732 = vsel %vm721, %v677, 0
  %v735 = vsel %vm721, %v678, 0
  %v738 = vsel %vm721, %v679, 0
  %v741 = vsel %vm721, %v680, 0
  %v744 = vsel %vm721, %v681, 0
  %v747 = vsel %vm721, %v682, 0
  %v750 = vsel %vm721, %v683, 0
  %v753 = vsel %vm721, %v684, 0
  %v756 = vsel %vm721, %v685, 0
  %v759 = vsel %vm721, %v686, 0
  %v762 = vsel %vm721, %v687, 0
  %v765 = vsel %vm721, %v688, 0
  %767 = vmatprep.subr.bf16.mxu0 0
  %768 = vmatpush1.bf16.msra.mxu0 0
  %769 = vmatprep.subr.bf16.mxu0 0
  %770 = vmatpush1.bf16.msra.mxu0 0
  %771 = vmatprep.subr.bf16.mxu0 0
  %772 = vmatpush1.bf16.msra.mxu0 0
  %773 = vmatprep.subr.bf16.mxu0 0
  %774 = vmatpush1.bf16.msra.mxu0 0
  %775 = vmatprep.subr.bf16.mxu0 0
  %776 = vmatpush1.bf16.msra.mxu0 %v716
  %777 = vmatprep.subr.bf16.mxu0 0
  %778 = vmatpush1.bf16.msra.mxu0 %v715
  %779 = vmatprep.subr.bf16.mxu0 0
  %780 = vmatpush1.bf16.msra.mxu0 %v714
  %781 = vmatprep.subr.bf16.mxu0 0
  %782 = vmatpush1.bf16.msra.mxu0 %v713
  %783 = vmatprep.subr.bf16.mxu0 0
  %784 = vmatpush2.bf16.msra.mxu0 0
  %785 = vmatprep.subr.bf16.mxu0 0
  %786 = vmatpush2.bf16.msra.mxu0 0
  %787 = vmatprep.subr.bf16.mxu0 0
  %788 = vmatpush2.bf16.msra.mxu0 0
  %789 = vmatprep.subr.bf16.mxu0 0
  %790 = vmatpush2.bf16.msra.mxu0 0
  %791 = vmatprep.subr.bf16.mxu0 0
  %792 = vmatpush2.bf16.msra.mxu0 0
  %793 = vmatprep.subr.bf16.mxu0 0
  %794 = vmatpush2.bf16.msra.mxu0 0
  %795 = vmatprep.subr.bf16.mxu0 0
  %796 = vmatpush2.bf16.msra.mxu0 0
  %797 = vmatprep.subr.bf16.mxu0 0
  %798 = vmatpush2.bf16.msra.mxu0 0
  %799 = vmatprep.mubr.bf16.mxu0 0
  %800 = vmatmul.mubr.bf16.gmra.mxu0 %v723
  %v801 = vpop.f32.mrf.mxu0
  %v802 = vadd.f32 1e-05, %v801
  %v803 = vpop.f32.mrf.mxu0
  %v804 = vpop.f32.mrf.mxu0
  %v805 = vadd.f32 1e-05, %v804
  %v806 = vpop.f32.mrf.mxu0
  %807 = vmatprep.mubr.bf16.mxu0 0
  %808 = vmatmul.mubr.bf16.gmra.mxu0 %v726
  %v809 = vpop.f32.mrf.mxu0
  %v810 = vadd.f32 1e-05, %v809
  %v811 = vpop.f32.mrf.mxu0
  %v812 = vpop.f32.mrf.mxu0
  %v813 = vadd.f32 1e-05, %v812
  %v814 = vpop.f32.mrf.mxu0
  %815 = vmatprep.mubr.bf16.mxu0 0
  %816 = vmatmul.mubr.bf16.gmra.mxu0 %v729
  %v817 = vpop.f32.mrf.mxu0
  %v818 = vadd.f32 1e-05, %v817
  %v819 = vpop.f32.mrf.mxu0
  %v820 = vpop.f32.mrf.mxu0
  %v821 = vadd.f32 1e-05, %v820
  %v822 = vpop.f32.mrf.mxu0
  %823 = vmatprep.mubr.bf16.mxu0 0
  %824 = vmatmul.mubr.bf16.gmra.mxu0 %v732
  %v825 = vpop.f32.mrf.mxu0
  %v826 = vadd.f32 1e-05, %v825
  %v827 = vpop.f32.mrf.mxu0
  %v828 = vpop.f32.mrf.mxu0
  %v829 = vadd.f32 1e-05, %v828
  %v830 = vpop.f32.mrf.mxu0
  %831 = vmatprep.mubr.bf16.mxu0 0
  %832 = vmatmul.mubr.bf16.gmra.mxu0 %v735
  %v833 = vpop.f32.mrf.mxu0
  %v834 = vadd.f32 1e-05, %v833
  %v835 = vpop.f32.mrf.mxu0
  %v836 = vpop.f32.mrf.mxu0
  %v837 = vadd.f32 1e-05, %v836
  %v838 = vpop.f32.mrf.mxu0
  %839 = vmatprep.mubr.bf16.mxu0 0
  %840 = vmatmul.mubr.bf16.gmra.mxu0 %v738
  %v841 = vpop.f32.mrf.mxu0
  %v842 = vadd.f32 1e-05, %v841
  %v843 = vpop.f32.mrf.mxu0
  %v844 = vpop.f32.mrf.mxu0
  %v845 = vadd.f32 1e-05, %v844
  %v846 = vpop.f32.mrf.mxu0
  %847 = vmatprep.mubr.bf16.mxu0 0
  %848 = vmatmul.mubr.bf16.gmra.mxu0 %v741
  %v849 = vpop.f32.mrf.mxu0
  %v850 = vadd.f32 1e-05, %v849
  %v851 = vpop.f32.mrf.mxu0
  %v852 = vpop.f32.mrf.mxu0
  %v853 = vadd.f32 1e-05, %v852
  %v854 = vpop.f32.mrf.mxu0
  %855 = vmatprep.mubr.bf16.mxu0 0
  %856 = vmatmul.mubr.bf16.gmra.mxu0 %v744
  %v857 = vpop.f32.mrf.mxu0
  %v858 = vadd.f32 1e-05, %v857
  %v859 = vpop.f32.mrf.mxu0
  %v860 = vpop.f32.mrf.mxu0
  %v861 = vadd.f32 1e-05, %v860
  %v862 = vpop.f32.mrf.mxu0
  %863 = vmatprep.mubr.bf16.mxu0 0
  %864 = vmatmul.mubr.bf16.gmra.mxu0 %v747
  %v865 = vpop.f32.mrf.mxu0
  %v866 = vadd.f32 1e-05, %v865
  %v867 = vpop.f32.mrf.mxu0
  %v868 = vpop.f32.mrf.mxu0
  %v869 = vadd.f32 1e-05, %v868
  %v870 = vpop.f32.mrf.mxu0
  %871 = vmatprep.mubr.bf16.mxu0 0
  %872 = vmatmul.mubr.bf16.gmra.mxu0 %v750
  %v873 = vpop.f32.mrf.mxu0
  %v874 = vadd.f32 1e-05, %v873
  %v875 = vpop.f32.mrf.mxu0
  %v876 = vpop.f32.mrf.mxu0
  %v877 = vadd.f32 1e-05, %v876
  %v878 = vpop.f32.mrf.mxu0
  %879 = vmatprep.mubr.bf16.mxu0 0
  %880 = vmatmul.mubr.bf16.gmra.mxu0 %v753
  %v881 = vpop.f32.mrf.mxu0
  %v882 = vadd.f32 1e-05, %v881
  %v883 = vpop.f32.mrf.mxu0
  %v884 = vpop.f32.mrf.mxu0
  %v885 = vadd.f32 1e-05, %v884
  %v886 = vpop.f32.mrf.mxu0
  %887 = vmatprep.mubr.bf16.mxu0 0
  %888 = vmatmul.mubr.bf16.gmra.mxu0 %v756
  %v889 = vpop.f32.mrf.mxu0
  %v890 = vadd.f32 1e-05, %v889
  %v891 = vpop.f32.mrf.mxu0
  %v892 = vpop.f32.mrf.mxu0
  %v893 = vadd.f32 1e-05, %v892
  %v894 = vpop.f32.mrf.mxu0
  %895 = vmatprep.mubr.bf16.mxu0 0
  %896 = vmatmul.mubr.bf16.gmra.mxu0 %v759
  %v897 = vpop.f32.mrf.mxu0
  %v898 = vadd.f32 1e-05, %v897
  %v899 = vpop.f32.mrf.mxu0
  %v900 = vpop.f32.mrf.mxu0
  %v901 = vadd.f32 1e-05, %v900
  %v902 = vpop.f32.mrf.mxu0
  %903 = vmatprep.mubr.bf16.mxu0 0
  %904 = vmatmul.mubr.bf16.gmra.mxu0 %v762
  %v905 = vpop.f32.mrf.mxu0
  %v906 = vadd.f32 1e-05, %v905
  %v907 = vpop.f32.mrf.mxu0
  %v908 = vpop.f32.mrf.mxu0
  %v909 = vadd.f32 1e-05, %v908
  %v910 = vpop.f32.mrf.mxu0
  %911 = vmatprep.mubr.bf16.mxu0 0
  %912 = vmatmul.mubr.bf16.gmra.mxu0 %v765
  %v913 = vpop.f32.mrf.mxu0
  %v914 = vadd.f32 1e-05, %v913
  %v915 = vpop.f32.mrf.mxu0
  %v916 = vpop.f32.mrf.mxu0
  %v917 = vadd.f32 1e-05, %v916
  %v918 = vpop.f32.mrf.mxu0
  %919 = vdwg.mxu0
  %v920 = vlog2.pop %v802
  %v921 = vmul.f32 %v920, 0.6931472
  %v922 = vlog2.pop %v805
  %v923 = vmul.f32 %v922, 0.6931472
  %v924 = vlog2.pop %v810
  %v925 = vmul.f32 %v924, 0.6931472
  %v926 = vlog2.pop %v813
  %v927 = vmul.f32 %v926, 0.6931472
  %v928 = vlog2.pop %v818
  %v929 = vmul.f32 %v928, 0.6931472
  %v930 = vlog2.pop %v821
  %v931 = vmul.f32 %v930, 0.6931472
  %v932 = vlog2.pop %v826
  %v933 = vmul.f32 %v932, 0.6931472
  %v934 = vlog2.pop %v829
  %v935 = vmul.f32 %v934, 0.6931472
  %v936 = vlog2.pop %v834
  %v937 = vmul.f32 %v936, 0.6931472
  %v938 = vlog2.pop %v837
  %v939 = vmul.f32 %v938, 0.6931472
  %v940 = vlog2.pop %v842
  %v941 = vmul.f32 %v940, 0.6931472
  %v942 = vlog2.pop %v845
  %v943 = vmul.f32 %v942, 0.6931472
  %v944 = vlog2.pop %v850
  %v945 = vmul.f32 %v944, 0.6931472
  %v946 = vlog2.pop %v853
  %v947 = vmul.f32 %v946, 0.6931472
  %v948 = vlog2.pop %v858
  %v949 = vmul.f32 %v948, 0.6931472
  %v950 = vlog2.pop %v861
  %v951 = vmul.f32 %v950, 0.6931472
  %v952 = vlog2.pop %v866
  %v953 = vmul.f32 %v952, 0.6931472
  %v954 = vlog2.pop %v869
  %v955 = vmul.f32 %v954, 0.6931472
  %v956 = vlog2.pop %v874
  %v957 = vmul.f32 %v956, 0.6931472
  %v958 = vlog2.pop %v877
  %v959 = vmul.f32 %v958, 0.6931472
  %v960 = vlog2.pop %v882
  %v961 = vmul.f32 %v960, 0.6931472
  %v962 = vlog2.pop %v885
  %v963 = vmul.f32 %v962, 0.6931472
  %v964 = vlog2.pop %v890
  %v965 = vmul.f32 %v964, 0.6931472
  %v966 = vlog2.pop %v893
  %v967 = vmul.f32 %v966, 0.6931472
  %v968 = vlog2.pop %v898
  %v969 = vmul.f32 %v968, 0.6931472
  %v970 = vlog2.pop %v901
  %v971 = vmul.f32 %v970, 0.6931472
  %v972 = vlog2.pop %v906
  %v973 = vmul.f32 %v972, 0.6931472
  %v974 = vlog2.pop %v909
  %v975 = vmul.f32 %v974, 0.6931472
  %v976 = vlog2.pop %v914
  %v977 = vmul.f32 %v976, 0.6931472
  %v978 = vlog2.pop %v917
  %v979 = vmul.f32 %v978, 0.6931472
  %980 = vst.msk [vmem:[%s3] sm:$0xff] %vm124, %v921
  %981 = vst.msk [vmem:[%s3 + $0x8] sm:$0xff] %vm124, %v923
  %982 = vst.msk [vmem:[%s3 + $0x10] sm:$0xff] %vm124, %v925
  %983 = vst.msk [vmem:[%s3 + $0x18] sm:$0xff] %vm124, %v927
  %984 = vst.msk [vmem:[%s3 + $0x20] sm:$0xff] %vm124, %v929
  %985 = vst.msk [vmem:[%s3 + $0x28] sm:$0xff] %vm124, %v931
  %986 = vst.msk [vmem:[%s3 + $0x30] sm:$0xff] %vm124, %v933
  %987 = vst.msk [vmem:[%s3 + $0x38] sm:$0xff] %vm124, %v935
  %988 = vst.msk [vmem:[%s3 + $0x40] sm:$0xff] %vm124, %v937
  %989 = vst.msk [vmem:[%s3 + $0x48] sm:$0xff] %vm124, %v939
  %990 = vst.msk [vmem:[%s3 + $0x50] sm:$0xff] %vm124, %v941
  %991 = vst.msk [vmem:[%s3 + $0x58] sm:$0xff] %vm124, %v943
  %992 = vst.msk [vmem:[%s3 + $0x60] sm:$0xff] %vm124, %v945
  %993 = vst.msk [vmem:[%s3 + $0x68] sm:$0xff] %vm124, %v947
  %994 = vst.msk [vmem:[%s3 + $0x70] sm:$0xff] %vm124, %v949
  %s995 = scalar_lea.vmem %s3, 120
  %996 = vst.msk [vmem:[%s995] sm:$0xff] %vm124, %v951
  %997 = vst.msk [vmem:[%s995 + $0x8] sm:$0xff] %vm124, %v953
  %998 = vst.msk [vmem:[%s995 + $0x10] sm:$0xff] %vm124, %v955
  %999 = vst.msk [vmem:[%s995 + $0x18] sm:$0xff] %vm124, %v957
  %1000 = vst.msk [vmem:[%s995 + $0x20] sm:$0xff] %vm124, %v959
  %1001 = vst.msk [vmem:[%s995 + $0x28] sm:$0xff] %vm124, %v961
  %1002 = vst.msk [vmem:[%s995 + $0x30] sm:$0xff] %vm124, %v963
  %1003 = vst.msk [vmem:[%s995 + $0x38] sm:$0xff] %vm124, %v965
  %1004 = vst.msk [vmem:[%s995 + $0x40] sm:$0xff] %vm124, %v967
  %1005 = vst.msk [vmem:[%s995 + $0x48] sm:$0xff] %vm124, %v969
  %1006 = vst.msk [vmem:[%s995 + $0x50] sm:$0xff] %vm124, %v971
  %1007 = vst.msk [vmem:[%s995 + $0x58] sm:$0xff] %vm124, %v973
  %1008 = vst.msk [vmem:[%s995 + $0x60] sm:$0xff] %vm124, %v975
  %1009 = vst.msk [vmem:[%s995 + $0x68] sm:$0xff] %vm124, %v977
  %1010 = vst.msk [vmem:[%s995 + $0x70] sm:$0xff] %vm124, %v979
  // Predicated region
  $region14: #{passt_forward.4} parent=0 // pred_check
    _
  $region15: #{passt_forward.4} parent=0 // pred_check_branch
    %1012 = sbr.rel (0) target = $region17
  $region16: #{passt_forward.4} parent=0 // pred_region
    _
  $region17: #{passt_forward.4} parent=0 // pred_fallthru
    _
  // Predicated region
  $region18: #{passt_forward.4} parent=0 // pred_check
    _
  $region19: #{passt_forward.4} parent=0 // pred_check_branch
    %1014 = sbr.rel (0) target = $region21
  $region20: #{passt_forward.4} parent=0 // pred_region
    _
  $region21: #{passt_forward.4} parent=0 // pred_fallthru
    _

// kernel: passt_forward.5
$region0: #{passt_forward.5}
  #allocation0 [shape = 'u32[]', space=smem, size = 0x4, offset = 0x4, fixed_abs, tag = 'smem constant byte address 0x4 - core index']
  #allocation1 [shape = 'u32[144,128]{1,0:T(1,128)}', space=vmem, size = 0x12000, scoped, tag = 'internal scratch']
  #allocation2 [shape = 'f32[64,128]{1,0:T(8,128)}', space=vmem, size = 0x8000, scoped, tag = 'scratch operand']
  #allocation3 [shape = 'f32[64,128]{1,0:T(8,128)}', space=vmem, size = 0x8000, scoped, tag = 'scratch operand']
  %s0 = inlined_call_operand.vmem [shape: f32[60,64], index: 0, kind: input, shape index: {}]
  %s1 = inlined_call_operand.vmem [shape: bf16[64,128], index: 1, kind: input, shape index: {}]
  %s2 = inlined_call_operand.vmem [shape: f32[1,128], index: 2, kind: input, shape index: {}]
  %s3 = inlined_call_operand.vmem [shape: f32[1,2,128], index: 3, kind: input, shape index: {}]
  %s4 = inlined_call_operand.vmem [shape: f32[1,30,128], index: 4, kind: input, shape index: {}]
  %s5 = inlined_call_operand.vmem [shape: f32[2,1,128], index: 5, kind: input, shape index: {}]
  %s6 = inlined_call_operand.vmem [shape: f32[2,1,128], index: 6, kind: input, shape index: {}]
  %s7 = inlined_call_operand.vmem [shape: bf16[2,128,384], index: 7, kind: input, shape index: {}]
  %s8 = inlined_call_operand.vmem [shape: f32[2,1,384], index: 8, kind: input, shape index: {}]
  %s9 = inlined_call_operand.vmem [shape: bf16[2,128,128], index: 9, kind: input, shape index: {}]
  %s10 = inlined_call_operand.vmem [shape: f32[2,1,128], index: 10, kind: input, shape index: {}]
  %s11 = inlined_call_operand.vmem [shape: f32[2,1,128], index: 11, kind: input, shape index: {}]
  %s12 = inlined_call_operand.vmem [shape: f32[2,1,128], index: 12, kind: input, shape index: {}]
  %s13 = inlined_call_operand.vmem [shape: bf16[2,128,256], index: 13, kind: input, shape index: {}]
  %s14 = inlined_call_operand.vmem [shape: f32[2,1,256], index: 14, kind: input, shape index: {}]
  %s15 = inlined_call_operand.vmem [shape: bf16[2,256,128], index: 15, kind: input, shape index: {}]
  %s16 = inlined_call_operand.vmem [shape: f32[2,1,128], index: 16, kind: input, shape index: {}]
  %s17 = inlined_call_operand.vmem [shape: f32[1,128], index: 17, kind: input, shape index: {}]
  %s18 = inlined_call_operand.vmem [shape: f32[1,128], index: 18, kind: input, shape index: {}]
  %s19 = inlined_call_operand.hbm [shape: f32[2,128], index: 19, kind: output, shape index: {}]
  %s20 = sld [smem:[#allocation0]]
  $region117: #{passt_forward.5} parent=0
    _
  %s22 = ssub.s32 1, %s20
  %s23 = scalar_select 0, %s22, %s20
  $region1: #{passt_forward.5} parent=0
    #allocation4 [shape = 'u8[1024]{0}', space=vmem, size = 0x400, scoped, tag = 'output window, operand 0, single buffered']
    #allocation5 [shape = 's32[2]{0}', space=sflag, size = 0x8, scoped, tag = 'scoped memory for passt_forward.5']
    %24 = vsyncpa [#allocation5], 0
    loop: start=0, step=1, limit=4
    $region2: #{passt_forward.5} parent=1 // loop_pre_header
      _
    $region3: #{passt_forward.5} parent=1 // loop_header
      %s26 = sphi 0, %s30
      %p27 = scmp.ge.s32.totalorder %s26, 4
      %s34 = sphi 0, %s34
      %s36 = sphi 0, %s34
      %s37 = sphi 0, %s36
      %s51 = sphi 0, %s37
      %s55 = sphi 0, %s55
      %s57 = sphi 0, %s55
      %s58 = sphi 0, %s57
      %s72 = sphi 0, %s58
      %s76 = sphi 0, %s76
      %s78 = sphi 0, %s76
      %s79 = sphi 0, %s78
      %s93 = sphi 0, %s79
      %s97 = sphi 0, %s97
      %s99 = sphi 0, %s97
      %s100 = sphi 0, %s99
      %s114 = sphi 0, %s100
      %s118 = sphi 0, %s118
      %s120 = sphi 0, %s118
      %s121 = sphi 0, %s120
      %s135 = sphi 0, %s121
      %s141 = sphi 0, %s143
      %s144 = sphi 0, %s141
      %s145 = sphi 0, %s144
      %s161 = sphi 0, %s145
      %s167 = sphi 0, %s169
      %s170 = sphi 0, %s167
      %s171 = sphi 0, %s170
      %s187 = sphi 0, %s171
      %s193 = sphi 0, %s195
      %s196 = sphi 0, %s193
      %s197 = sphi 0, %s196
      %s213 = sphi 0, %s197
      %s219 = sphi 0, %s221
      %s222 = sphi 0, %s219
      %s223 = sphi 0, %s222
      %s239 = sphi 0, %s223
      %s245 = sphi 0, %s247
      %s248 = sphi 0, %s245
      %s249 = sphi 0, %s248
      %s265 = sphi 0, %s249
      %s271 = sphi 0, %s273
      %s274 = sphi 0, %s271
      %s275 = sphi 0, %s274
      %s291 = sphi 0, %s275
      %s297 = sphi 0, %s299
      %s300 = sphi 0, %s297
      %s301 = sphi 0, %s300
      %s317 = sphi 0, %s301
      %s323 = sphi 0, %s325
      %s326 = sphi 0, %s323
      %s327 = sphi 0, %s326
      %s343 = sphi 0, %s327
      %s349 = sphi 0, %s351
      %s352 = sphi 0, %s349
      %s353 = sphi 0, %s352
      %s369 = sphi 0, %s353
      %s375 = sphi 0, %s377
      %s378 = sphi 0, %s375
      %s379 = sphi 0, %s378
      %s395 = sphi 0, %s379
      %s401 = sphi 0, %s403
      %s404 = sphi 0, %s401
      %s405 = sphi 0, %s404
      %s421 = sphi 0, %s405
      %s427 = sphi 0, %s429
      %s430 = sphi 0, %s427
      %s431 = sphi 0, %s430
      %s447 = sphi 0, %s431
      %s451 = sphi 0, %s451
      %s453 = sphi 0, %s451
      %s454 = sphi 0, %s453
      %s468 = sphi 0, %s454
      %s472 = sphi 0, %s472
      %s474 = sphi 0, %s472
      %s475 = sphi 0, %s474
      %s489 = sphi 0, %s475
      %s493 = sphi 0, %s493
      %s495 = sphi 0, %s493
      %s496 = sphi 0, %s495
      %s510 = sphi 0, %s496
    $region4: #{passt_forward.5} parent=1 // loop_header_branch
      %29 = sbr.rel (%p27) target = $region8
    $region5: #{passt_forward.5} parent=1 // loop_body
      %s31 = ssub.s32 %s26, 1
      %s32 = ssub.s32 %s26, 2
      %s33 = sadd.s32 %s26, 1
      %s35 = sadd.s32 %s34, 1
      %p38 = scmp.eq.s32.totalorder %s26, 1
      %p39 = scmp.ne.s32.totalorder %s34, %s36
      %p40 = scmp.eq.s32.totalorder %s26, 0
      %p41 = por %p39, %p40
      %p42 = scmp.ne.s32.totalorder %s34, %s36
      %p43 = scmp.eq.s32.totalorder %s31, 1
      %p44 = por %p42, %p43
      %p45 = scmp.ne.s32.totalorder %s36, %s37
      %p46 = scmp.eq.s32.totalorder %s31, 0
      %p47 = por %p45, %p46
      %p48 = scmp.ne.s32.totalorder %s36, %s37
      %p49 = scmp.eq.s32.totalorder %s32, 1
      %p50 = por %p48, %p49
      %p52 = scmp.ne.s32.totalorder %s37, %s51
      %p53 = scmp.eq.s32.totalorder %s32, 0
      %p54 = por %p52, %p53
      %s56 = sadd.s32 %s55, 1
      %p59 = scmp.eq.s32.totalorder %s26, 1
      %p60 = scmp.ne.s32.totalorder %s55, %s57
      %p61 = scmp.eq.s32.totalorder %s26, 0
      %p62 = por %p60, %p61
      %p63 = scmp.ne.s32.totalorder %s55, %s57
      %p64 = scmp.eq.s32.totalorder %s31, 1
      %p65 = por %p63, %p64
      %p66 = scmp.ne.s32.totalorder %s57, %s58
      %p67 = scmp.eq.s32.totalorder %s31, 0
      %p68 = por %p66, %p67
      %p69 = scmp.ne.s32.totalorder %s57, %s58
      %p70 = scmp.eq.s32.totalorder %s32, 1
      %p71 = por %p69, %p70
      %p73 = scmp.ne.s32.totalorder %s58, %s72
      %p74 = scmp.eq.s32.totalorder %s32, 0
      %p75 = por %p73, %p74
      %s77 = sadd.s32 %s76, 1
      %p80 = scmp.eq.s32.totalorder %s26, 1
      %p81 = scmp.ne.s32.totalorder %s76, %s78
      %p82 = scmp.eq.s32.totalorder %s26, 0
      %p83 = por %p81, %p82
      %p84 = scmp.ne.s32.totalorder %s76, %s78
      %p85 = scmp.eq.s32.totalorder %s31, 1
      %p86 = por %p84, %p85
      %p87 = scmp.ne.s32.totalorder %s78, %s79
      %p88 = scmp.eq.s32.totalorder %s31, 0
      %p89 = por %p87, %p88
      %p90 = scmp.ne.s32.totalorder %s78, %s79
      %p91 = scmp.eq.s32.totalorder %s32, 1
      %p92 = por %p90, %p91
      %p94 = scmp.ne.s32.totalorder %s79, %s93
      %p95 = scmp.eq.s32.totalorder %s32, 0
      %p96 = por %p94, %p95
      %s98 = sadd.s32 %s97, 1
      %p101 = scmp.eq.s32.totalorder %s26, 1
      %p102 = scmp.ne.s32.totalorder %s97, %s99
      %p103 = scmp.eq.s32.totalorder %s26, 0
      %p104 = por %p102, %p103
      %p105 = scmp.ne.s32.totalorder %s97, %s99
      %p106 = scmp.eq.s32.totalorder %s31, 1
      %p107 = por %p105, %p106
      %p108 = scmp.ne.s32.totalorder %s99, %s100
      %p109 = scmp.eq.s32.totalorder %s31, 0
      %p110 = por %p108, %p109
      %p111 = scmp.ne.s32.totalorder %s99, %s100
      %p112 = scmp.eq.s32.totalorder %s32, 1
      %p113 = por %p111, %p112
      %p115 = scmp.ne.s32.totalorder %s100, %s114
      %p116 = scmp.eq.s32.totalorder %s32, 0
      %p117 = por %p115, %p116
      %s119 = sadd.s32 %s118, 1
      %p122 = scmp.eq.s32.totalorder %s26, 1
      %p123 = scmp.ne.s32.totalorder %s118, %s120
      %p124 = scmp.eq.s32.totalorder %s26, 0
      %p125 = por %p123, %p124
      %p126 = scmp.ne.s32.totalorder %s118, %s120
      %p127 = scmp.eq.s32.totalorder %s31, 1
      %p128 = por %p126, %p127
      %p129 = scmp.ne.s32.totalorder %s120, %s121
      %p130 = scmp.eq.s32.totalorder %s31, 0
      %p131 = por %p129, %p130
      %p132 = scmp.ne.s32.totalorder %s120, %s121
      %p133 = scmp.eq.s32.totalorder %s32, 1
      %p134 = por %p132, %p133
      %p136 = scmp.ne.s32.totalorder %s121, %s135
      %p137 = scmp.eq.s32.totalorder %s32, 0
      %p138 = por %p136, %p137
      %s139 = ssub.s32 %s26, %s33
      %p140 = scmp.eq.s32.totalorder %s139, 0
      %s142 = sadd.s32 %s141, 1
      %s143 = scalar_select %p140, %s141, %s142
      %p146 = pneg %p140
      %p147 = scmp.eq.s32.totalorder %s26, 1
      %p148 = por %p146, %p147
      %p149 = scmp.ne.s32.totalorder %s141, %s144
      %p150 = scmp.eq.s32.totalorder %s26, 0
      %p151 = por %p149, %p150
      %p152 = scmp.ne.s32.totalorder %s141, %s144
      %p153 = scmp.eq.s32.totalorder %s31, 1
      %p154 = por %p152, %p153
      %p155 = scmp.ne.s32.totalorder %s144, %s145
      %p156 = scmp.eq.s32.totalorder %s31, 0
      %p157 = por %p155, %p156
      %p158 = scmp.ne.s32.totalorder %s144, %s145
      %p159 = scmp.eq.s32.totalorder %s32, 1
      %p160 = por %p158, %p159
      %p162 = scmp.ne.s32.totalorder %s145, %s161
      %p163 = scmp.eq.s32.totalorder %s32, 0
      %p164 = por %p162, %p163
      %s165 = ssub.s32 %s26, %s33
      %p166 = scmp.eq.s32.totalorder %s165, 0
      %s168 = sadd.s32 %s167, 1
      %s169 = scalar_select %p166, %s167, %s168
      %p172 = pneg %p166
      %p173 = scmp.eq.s32.totalorder %s26, 1
      %p174 = por %p172, %p173
      %p175 = scmp.ne.s32.totalorder %s167, %s170
      %p176 = scmp.eq.s32.totalorder %s26, 0
      %p177 = por %p175, %p176
      %p178 = scmp.ne.s32.totalorder %s167, %s170
      %p179 = scmp.eq.s32.totalorder %s31, 1
      %p180 = por %p178, %p179
      %p181 = scmp.ne.s32.totalorder %s170, %s171
      %p182 = scmp.eq.s32.totalorder %s31, 0
      %p183 = por %p181, %p182
      %p184 = scmp.ne.s32.totalorder %s170, %s171
      %p185 = scmp.eq.s32.totalorder %s32, 1
      %p186 = por %p184, %p185
      %p188 = scmp.ne.s32.totalorder %s171, %s187
      %p189 = scmp.eq.s32.totalorder %s32, 0
      %p190 = por %p188, %p189
      %s191 = ssub.s32 %s26, %s33
      %p192 = scmp.eq.s32.totalorder %s191, 0
      %s194 = sadd.s32 %s193, 1
      %s195 = scalar_select %p192, %s193, %s194
      %p198 = pneg %p192
      %p199 = scmp.eq.s32.totalorder %s26, 1
      %p200 = por %p198, %p199
      %p201 = scmp.ne.s32.totalorder %s193, %s196
      %p202 = scmp.eq.s32.totalorder %s26, 0
      %p203 = por %p201, %p202
      %p204 = scmp.ne.s32.totalorder %s193, %s196
      %p205 = scmp.eq.s32.totalorder %s31, 1
      %p206 = por %p204, %p205
      %p207 = scmp.ne.s32.totalorder %s196, %s197
      %p208 = scmp.eq.s32.totalorder %s31, 0
      %p209 = por %p207, %p208
      %p210 = scmp.ne.s32.totalorder %s196, %s197
      %p211 = scmp.eq.s32.totalorder %s32, 1
      %p212 = por %p210, %p211
      %p214 = scmp.ne.s32.totalorder %s197, %s213
      %p215 = scmp.eq.s32.totalorder %s32, 0
      %p216 = por %p214, %p215
      %s217 = ssub.s32 %s26, %s33
      %p218 = scmp.eq.s32.totalorder %s217, 0
      %s220 = sadd.s32 %s219, 1
      %s221 = scalar_select %p218, %s219, %s220
      %p224 = pneg %p218
      %p225 = scmp.eq.s32.totalorder %s26, 1
      %p226 = por %p224, %p225
      %p227 = scmp.ne.s32.totalorder %s219, %s222
      %p228 = scmp.eq.s32.totalorder %s26, 0
      %p229 = por %p227, %p228
      %p230 = scmp.ne.s32.totalorder %s219, %s222
      %p231 = scmp.eq.s32.totalorder %s31, 1
      %p232 = por %p230, %p231
      %p233 = scmp.ne.s32.totalorder %s222, %s223
      %p234 = scmp.eq.s32.totalorder %s31, 0
      %p235 = por %p233, %p234
      %p236 = scmp.ne.s32.totalorder %s222, %s223
      %p237 = scmp.eq.s32.totalorder %s32, 1
      %p238 = por %p236, %p237
      %p240 = scmp.ne.s32.totalorder %s223, %s239
      %p241 = scmp.eq.s32.totalorder %s32, 0
      %p242 = por %p240, %p241
      %s243 = ssub.s32 %s26, %s33
      %p244 = scmp.eq.s32.totalorder %s243, 0
      %s246 = sadd.s32 %s245, 1
      %s247 = scalar_select %p244, %s245, %s246
      %p250 = pneg %p244
      %p251 = scmp.eq.s32.totalorder %s26, 1
      %p252 = por %p250, %p251
      %p253 = scmp.ne.s32.totalorder %s245, %s248
      %p254 = scmp.eq.s32.totalorder %s26, 0
      %p255 = por %p253, %p254
      %p256 = scmp.ne.s32.totalorder %s245, %s248
      %p257 = scmp.eq.s32.totalorder %s31, 1
      %p258 = por %p256, %p257
      %p259 = scmp.ne.s32.totalorder %s248, %s249
      %p260 = scmp.eq.s32.totalorder %s31, 0
      %p261 = por %p259, %p260
      %p262 = scmp.ne.s32.totalorder %s248, %s249
      %p263 = scmp.eq.s32.totalorder %s32, 1
      %p264 = por %p262, %p263
      %p266 = scmp.ne.s32.totalorder %s249, %s265
      %p267 = scmp.eq.s32.totalorder %s32, 0
      %p268 = por %p266, %p267
      %s269 = ssub.s32 %s26, %s33
      %p270 = scmp.eq.s32.totalorder %s269, 0
      %s272 = sadd.s32 %s271, 1
      %s273 = scalar_select %p270, %s271, %s272
      %p276 = pneg %p270
      %p277 = scmp.eq.s32.totalorder %s26, 1
      %p278 = por %p276, %p277
      %p279 = scmp.ne.s32.totalorder %s271, %s274
      %p280 = scmp.eq.s32.totalorder %s26, 0
      %p281 = por %p279, %p280
      %p282 = scmp.ne.s32.totalorder %s271, %s274
      %p283 = scmp.eq.s32.totalorder %s31, 1
      %p284 = por %p282, %p283
      %p285 = scmp.ne.s32.totalorder %s274, %s275
      %p286 = scmp.eq.s32.totalorder %s31, 0
      %p287 = por %p285, %p286
      %p288 = scmp.ne.s32.totalorder %s274, %s275
      %p289 = scmp.eq.s32.totalorder %s32, 1
      %p290 = por %p288, %p289
      %p292 = scmp.ne.s32.totalorder %s275, %s291
      %p293 = scmp.eq.s32.totalorder %s32, 0
      %p294 = por %p292, %p293
      %s295 = ssub.s32 %s26, %s33
      %p296 = scmp.eq.s32.totalorder %s295, 0
      %s298 = sadd.s32 %s297, 1
      %s299 = scalar_select %p296, %s297, %s298
      %p302 = pneg %p296
      %p303 = scmp.eq.s32.totalorder %s26, 1
      %p304 = por %p302, %p303
      %p305 = scmp.ne.s32.totalorder %s297, %s300
      %p306 = scmp.eq.s32.totalorder %s26, 0
      %p307 = por %p305, %p306
      %p308 = scmp.ne.s32.totalorder %s297, %s300
      %p309 = scmp.eq.s32.totalorder %s31, 1
      %p310 = por %p308, %p309
      %p311 = scmp.ne.s32.totalorder %s300, %s301
      %p312 = scmp.eq.s32.totalorder %s31, 0
      %p313 = por %p311, %p312
      %p314 = scmp.ne.s32.totalorder %s300, %s301
      %p315 = scmp.eq.s32.totalorder %s32, 1
      %p316 = por %p314, %p315
      %p318 = scmp.ne.s32.totalorder %s301, %s317
      %p319 = scmp.eq.s32.totalorder %s32, 0
      %p320 = por %p318, %p319
      %s321 = ssub.s32 %s26, %s33
      %p322 = scmp.eq.s32.totalorder %s321, 0
      %s324 = sadd.s32 %s323, 1
      %s325 = scalar_select %p322, %s323, %s324
      %p328 = pneg %p322
      %p329 = scmp.eq.s32.totalorder %s26, 1
      %p330 = por %p328, %p329
      %p331 = scmp.ne.s32.totalorder %s323, %s326
      %p332 = scmp.eq.s32.totalorder %s26, 0
      %p333 = por %p331, %p332
      %p334 = scmp.ne.s32.totalorder %s323, %s326
      %p335 = scmp.eq.s32.totalorder %s31, 1
      %p336 = por %p334, %p335
      %p337 = scmp.ne.s32.totalorder %s326, %s327
      %p338 = scmp.eq.s32.totalorder %s31, 0
      %p339 = por %p337, %p338
      %p340 = scmp.ne.s32.totalorder %s326, %s327
      %p341 = scmp.eq.s32.totalorder %s32, 1
      %p342 = por %p340, %p341
      %p344 = scmp.ne.s32.totalorder %s327, %s343
      %p345 = scmp.eq.s32.totalorder %s32, 0
      %p346 = por %p344, %p345
      %s347 = ssub.s32 %s26, %s33
      %p348 = scmp.eq.s32.totalorder %s347, 0
      %s350 = sadd.s32 %s349, 1
      %s351 = scalar_select %p348, %s349, %s350
      %p354 = pneg %p348
      %p355 = scmp.eq.s32.totalorder %s26, 1
      %p356 = por %p354, %p355
      %p357 = scmp.ne.s32.totalorder %s349, %s352
      %p358 = scmp.eq.s32.totalorder %s26, 0
      %p359 = por %p357, %p358
      %p360 = scmp.ne.s32.totalorder %s349, %s352
      %p361 = scmp.eq.s32.totalorder %s31, 1
      %p362 = por %p360, %p361
      %p363 = scmp.ne.s32.totalorder %s352, %s353
      %p364 = scmp.eq.s32.totalorder %s31, 0
      %p365 = por %p363, %p364
      %p366 = scmp.ne.s32.totalorder %s352, %s353
      %p367 = scmp.eq.s32.totalorder %s32, 1
      %p368 = por %p366, %p367
      %p370 = scmp.ne.s32.totalorder %s353, %s369
      %p371 = scmp.eq.s32.totalorder %s32, 0
      %p372 = por %p370, %p371
      %s373 = ssub.s32 %s26, %s33
      %p374 = scmp.eq.s32.totalorder %s373, 0
      %s376 = sadd.s32 %s375, 1
      %s377 = scalar_select %p374, %s375, %s376
      %p380 = pneg %p374
      %p381 = scmp.eq.s32.totalorder %s26, 1
      %p382 = por %p380, %p381
      %p383 = scmp.ne.s32.totalorder %s375, %s378
      %p384 = scmp.eq.s32.totalorder %s26, 0
      %p385 = por %p383, %p384
      %p386 = scmp.ne.s32.totalorder %s375, %s378
      %p387 = scmp.eq.s32.totalorder %s31, 1
      %p388 = por %p386, %p387
      %p389 = scmp.ne.s32.totalorder %s378, %s379
      %p390 = scmp.eq.s32.totalorder %s31, 0
      %p391 = por %p389, %p390
      %p392 = scmp.ne.s32.totalorder %s378, %s379
      %p393 = scmp.eq.s32.totalorder %s32, 1
      %p394 = por %p392, %p393
      %p396 = scmp.ne.s32.totalorder %s379, %s395
      %p397 = scmp.eq.s32.totalorder %s32, 0
      %p398 = por %p396, %p397
      %s399 = ssub.s32 %s26, %s33
      %p400 = scmp.eq.s32.totalorder %s399, 0
      %s402 = sadd.s32 %s401, 1
      %s403 = scalar_select %p400, %s401, %s402
      %p406 = pneg %p400
      %p407 = scmp.eq.s32.totalorder %s26, 1
      %p408 = por %p406, %p407
      %p409 = scmp.ne.s32.totalorder %s401, %s404
      %p410 = scmp.eq.s32.totalorder %s26, 0
      %p411 = por %p409, %p410
      %p412 = scmp.ne.s32.totalorder %s401, %s404
      %p413 = scmp.eq.s32.totalorder %s31, 1
      %p414 = por %p412, %p413
      %p415 = scmp.ne.s32.totalorder %s404, %s405
      %p416 = scmp.eq.s32.totalorder %s31, 0
      %p417 = por %p415, %p416
      %p418 = scmp.ne.s32.totalorder %s404, %s405
      %p419 = scmp.eq.s32.totalorder %s32, 1
      %p420 = por %p418, %p419
      %p422 = scmp.ne.s32.totalorder %s405, %s421
      %p423 = scmp.eq.s32.totalorder %s32, 0
      %p424 = por %p422, %p423
      %s425 = ssub.s32 %s26, %s33
      %p426 = scmp.eq.s32.totalorder %s425, 0
      %s428 = sadd.s32 %s427, 1
      %s429 = scalar_select %p426, %s427, %s428
      %p432 = pneg %p426
      %p433 = scmp.eq.s32.totalorder %s26, 1
      %p434 = por %p432, %p433
      %p435 = scmp.ne.s32.totalorder %s427, %s430
      %p436 = scmp.eq.s32.totalorder %s26, 0
      %p437 = por %p435, %p436
      %p438 = scmp.ne.s32.totalorder %s427, %s430
      %p439 = scmp.eq.s32.totalorder %s31, 1
      %p440 = por %p438, %p439
      %p441 = scmp.ne.s32.totalorder %s430, %s431
      %p442 = scmp.eq.s32.totalorder %s31, 0
      %p443 = por %p441, %p442
      %p444 = scmp.ne.s32.totalorder %s430, %s431
      %p445 = scmp.eq.s32.totalorder %s32, 1
      %p446 = por %p444, %p445
      %p448 = scmp.ne.s32.totalorder %s431, %s447
      %p449 = scmp.eq.s32.totalorder %s32, 0
      %p450 = por %p448, %p449
      %s452 = sadd.s32 %s451, 1
      %p455 = scmp.eq.s32.totalorder %s26, 1
      %p456 = scmp.ne.s32.totalorder %s451, %s453
      %p457 = scmp.eq.s32.totalorder %s26, 0
      %p458 = por %p456, %p457
      %p459 = scmp.ne.s32.totalorder %s451, %s453
      %p460 = scmp.eq.s32.totalorder %s31, 1
      %p461 = por %p459, %p460
      %p462 = scmp.ne.s32.totalorder %s453, %s454
      %p463 = scmp.eq.s32.totalorder %s31, 0
      %p464 = por %p462, %p463
      %p465 = scmp.ne.s32.totalorder %s453, %s454
      %p466 = scmp.eq.s32.totalorder %s32, 1
      %p467 = por %p465, %p466
      %p469 = scmp.ne.s32.totalorder %s454, %s468
      %p470 = scmp.eq.s32.totalorder %s32, 0
      %p471 = por %p469, %p470
      %s473 = sadd.s32 %s472, 1
      %p476 = scmp.eq.s32.totalorder %s26, 1
      %p477 = scmp.ne.s32.totalorder %s472, %s474
      %p478 = scmp.eq.s32.totalorder %s26, 0
      %p479 = por %p477, %p478
      %p480 = scmp.ne.s32.totalorder %s472, %s474
      %p481 = scmp.eq.s32.totalorder %s31, 1
      %p482 = por %p480, %p481
      %p483 = scmp.ne.s32.totalorder %s474, %s475
      %p484 = scmp.eq.s32.totalorder %s31, 0
      %p485 = por %p483, %p484
      %p486 = scmp.ne.s32.totalorder %s474, %s475
      %p487 = scmp.eq.s32.totalorder %s32, 1
      %p488 = por %p486, %p487
      %p490 = scmp.ne.s32.totalorder %s475, %s489
      %p491 = scmp.eq.s32.totalorder %s32, 0
      %p492 = por %p490, %p491
      %s494 = sadd.s32 %s493, 1
      %p497 = scmp.eq.s32.totalorder %s26, 1
      %p498 = scmp.ne.s32.totalorder %s493, %s495
      %p499 = scmp.eq.s32.totalorder %s26, 0
      %p500 = por %p498, %p499
      %p501 = scmp.ne.s32.totalorder %s493, %s495
      %p502 = scmp.eq.s32.totalorder %s31, 1
      %p503 = por %p501, %p502
      %p504 = scmp.ne.s32.totalorder %s495, %s496
      %p505 = scmp.eq.s32.totalorder %s31, 0
      %p506 = por %p504, %p505
      %p507 = scmp.ne.s32.totalorder %s495, %s496
      %p508 = scmp.eq.s32.totalorder %s32, 1
      %p509 = por %p507, %p508
      %p511 = scmp.ne.s32.totalorder %s496, %s510
      %p512 = scmp.eq.s32.totalorder %s32, 0
      %p513 = por %p511, %p512
      %p514 = scmp.le.s32.totalorder 1, %s26
      %p515 = scmp.lt.s32.totalorder %s26, 3
      %p516 = pnand %p514, %p515
      %p517 = pneg %p516
      // Predicated region
      $region9: #{passt_forward.5} parent=5 // pred_check
        _
      $region10: #{passt_forward.5} parent=5 // pred_check_branch
        %519 = sbr.rel (%p516) target = $region12
      $region11: #{passt_forward.5} parent=5 // pred_region
        %s520 = ssub.s32 %s26, 1
        // Predicated region
        $region13: #{passt_forward.5} parent=11 // pred_check
          %p521 = pneg %p47
        $region14: #{passt_forward.5} parent=11 // pred_check_branch
          %523 = sbr.rel (%p521) target = $region16
        $region15: #{passt_forward.5} parent=11 // pred_region
          _
        $region16: #{passt_forward.5} parent=11 // pred_fallthru
          _
        // Predicated region
        $region17: #{passt_forward.5} parent=11 // pred_check
          %p524 = pneg %p68
        $region18: #{passt_forward.5} parent=11 // pred_check_branch
          %526 = sbr.rel (%p524) target = $region20
        $region19: #{passt_forward.5} parent=11 // pred_region
          _
        $region20: #{passt_forward.5} parent=11 // pred_fallthru
          _
        // Predicated region
        $region21: #{passt_forward.5} parent=11 // pred_check
          %p527 = pneg %p89
        $region22: #{passt_forward.5} parent=11 // pred_check_branch
          %529 = sbr.rel (%p527) target = $region24
        $region23: #{passt_forward.5} parent=11 // pred_region
          _
        $region24: #{passt_forward.5} parent=11 // pred_fallthru
          _
        // Predicated region
        $region25: #{passt_forward.5} parent=11 // pred_check
          %p530 = pneg %p110
        $region26: #{passt_forward.5} parent=11 // pred_check_branch
          %532 = sbr.rel (%p530) target = $region28
        $region27: #{passt_forward.5} parent=11 // pred_region
          _
        $region28: #{passt_forward.5} parent=11 // pred_fallthru
          _
        // Predicated region
        $region29: #{passt_forward.5} parent=11 // pred_check
          %p533 = pneg %p131
        $region30: #{passt_forward.5} parent=11 // pred_check_branch
          %535 = sbr.rel (%p533) target = $region32
        $region31: #{passt_forward.5} parent=11 // pred_region
          _
        $region32: #{passt_forward.5} parent=11 // pred_fallthru
          _
        // Predicated region
        $region33: #{passt_forward.5} parent=11 // pred_check
          %p536 = pneg %p464
        $region34: #{passt_forward.5} parent=11 // pred_check_branch
          %538 = sbr.rel (%p536) target = $region36
        $region35: #{passt_forward.5} parent=11 // pred_region
          _
        $region36: #{passt_forward.5} parent=11 // pred_fallthru
          _
        // Predicated region
        $region37: #{passt_forward.5} parent=11 // pred_check
          %p539 = pneg %p485
        $region38: #{passt_forward.5} parent=11 // pred_check_branch
          %541 = sbr.rel (%p539) target = $region40
        $region39: #{passt_forward.5} parent=11 // pred_region
          _
        $region40: #{passt_forward.5} parent=11 // pred_fallthru
          _
      $region12: #{passt_forward.5} parent=5 // pred_fallthru
        _
      %p542 = scmp.lt.s32.totalorder %s26, 2
      // Predicated region
      $region41: #{passt_forward.5} parent=5 // pred_check
        %p543 = pneg %p542
      $region42: #{passt_forward.5} parent=5 // pred_check_branch
        %545 = sbr.rel (%p543) target = $region44
      $region43: #{passt_forward.5} parent=5 // pred_region
        // Predicated region
        $region45: #{passt_forward.5} parent=43 // pred_check
          %p546 = pneg %p151
        $region46: #{passt_forward.5} parent=43 // pred_check_branch
          %548 = sbr.rel (%p546) target = $region48
        $region47: #{passt_forward.5} parent=43 // pred_region
          %p549 = scmp.lt.s32.totalorder %s26, 1
          %s550 = scalar_select %p549, %s26, 1
          %s551 = scalar_lea.vmem %s5, %s550
        $region48: #{passt_forward.5} parent=43 // pred_fallthru
          _
        // Predicated region
        $region49: #{passt_forward.5} parent=43 // pred_check
          %p552 = pneg %p177
        $region50: #{passt_forward.5} parent=43 // pred_check_branch
          %554 = sbr.rel (%p552) target = $region52
        $region51: #{passt_forward.5} parent=43 // pred_region
          %p555 = scmp.lt.s32.totalorder %s26, 1
          %s556 = scalar_select %p555, %s26, 1
          %s557 = scalar_lea.vmem %s6, %s556
        $region52: #{passt_forward.5} parent=43 // pred_fallthru
          _
        // Predicated region
        $region53: #{passt_forward.5} parent=43 // pred_check
          %p558 = pneg %p203
        $region54: #{passt_forward.5} parent=43 // pred_check_branch
          %560 = sbr.rel (%p558) target = $region56
        $region55: #{passt_forward.5} parent=43 // pred_region
          %p561 = scmp.lt.s32.totalorder %s26, 1
          %s562 = scalar_select %p561, %s26, 1
          %s563 = smul.addr %s562, 48
          %s564 = smul.addr %s563, 4
          %s565 = scalar_lea.vmem %s7, %s564
        $region56: #{passt_forward.5} parent=43 // pred_fallthru
          _
        // Predicated region
        $region57: #{passt_forward.5} parent=43 // pred_check
          %p566 = pneg %p229
        $region58: #{passt_forward.5} parent=43 // pred_check_branch
          %568 = sbr.rel (%p566) target = $region60
        $region59: #{passt_forward.5} parent=43 // pred_region
          %p569 = scmp.lt.s32.totalorder %s26, 1
          %s570 = scalar_select %p569, %s26, 1
          %s571 = smul.addr %s570, 3
          %s572 = scalar_lea.vmem %s8, %s571
        $region60: #{passt_forward.5} parent=43 // pred_fallthru
          _
        // Predicated region
        $region61: #{passt_forward.5} parent=43 // pred_check
          %p573 = pneg %p255
        $region62: #{passt_forward.5} parent=43 // pred_check_branch
          %575 = sbr.rel (%p573) target = $region64
        $region63: #{passt_forward.5} parent=43 // pred_region
          %p576 = scmp.lt.s32.totalorder %s26, 1
          %s577 = scalar_select %p576, %s26, 1
          %s578 = smul.addr %s577, 16
          %s579 = smul.addr %s578, 4
          %s580 = scalar_lea.vmem %s9, %s579
        $region64: #{passt_forward.5} parent=43 // pred_fallthru
          _
        // Predicated region
        $region65: #{passt_forward.5} parent=43 // pred_check
          %p581 = pneg %p281
        $region66: #{passt_forward.5} parent=43 // pred_check_branch
          %583 = sbr.rel (%p581) target = $region68
        $region67: #{passt_forward.5} parent=43 // pred_region
          %p584 = scmp.lt.s32.totalorder %s26, 1
          %s585 = scalar_select %p584, %s26, 1
          %s586 = scalar_lea.vmem %s10, %s585
        $region68: #{passt_forward.5} parent=43 // pred_fallthru
          _
        // Predicated region
        $region69: #{passt_forward.5} parent=43 // pred_check
          %p587 = pneg %p307
        $region70: #{passt_forward.5} parent=43 // pred_check_branch
          %589 = sbr.rel (%p587) target = $region72
        $region71: #{passt_forward.5} parent=43 // pred_region
          %p590 = scmp.lt.s32.totalorder %s26, 1
          %s591 = scalar_select %p590, %s26, 1
          %s592 = scalar_lea.vmem %s11, %s591
        $region72: #{passt_forward.5} parent=43 // pred_fallthru
          _
        // Predicated region
        $region73: #{passt_forward.5} parent=43 // pred_check
          %p593 = pneg %p333
        $region74: #{passt_forward.5} parent=43 // pred_check_branch
          %595 = sbr.rel (%p593) target = $region76
        $region75: #{passt_forward.5} parent=43 // pred_region
          %p596 = scmp.lt.s32.totalorder %s26, 1
          %s597 = scalar_select %p596, %s26, 1
          %s598 = scalar_lea.vmem %s12, %s597
        $region76: #{passt_forward.5} parent=43 // pred_fallthru
          _
        // Predicated region
        $region77: #{passt_forward.5} parent=43 // pred_check
          %p599 = pneg %p359
        $region78: #{passt_forward.5} parent=43 // pred_check_branch
          %601 = sbr.rel (%p599) target = $region80
        $region79: #{passt_forward.5} parent=43 // pred_region
          %p602 = scmp.lt.s32.totalorder %s26, 1
          %s603 = scalar_select %p602, %s26, 1
          %s604 = smul.addr %s603, 32
          %s605 = smul.addr %s604, 4
          %s606 = scalar_lea.vmem %s13, %s605
        $region80: #{passt_forward.5} parent=43 // pred_fallthru
          _
        // Predicated region
        $region81: #{passt_forward.5} parent=43 // pred_check
          %p607 = pneg %p385
        $region82: #{passt_forward.5} parent=43 // pred_check_branch
          %609 = sbr.rel (%p607) target = $region84
        $region83: #{passt_forward.5} parent=43 // pred_region
          %p610 = scmp.lt.s32.totalorder %s26, 1
          %s611 = scalar_select %p610, %s26, 1
          %s612 = smul.addr %s611, 2
          %s613 = scalar_lea.vmem %s14, %s612
        $region84: #{passt_forward.5} parent=43 // pred_fallthru
          _
        // Predicated region
        $region85: #{passt_forward.5} parent=43 // pred_check
          %p614 = pneg %p411
        $region86: #{passt_forward.5} parent=43 // pred_check_branch
          %616 = sbr.rel (%p614) target = $region88
        $region87: #{passt_forward.5} parent=43 // pred_region
          %p617 = scmp.lt.s32.totalorder %s26, 1
          %s618 = scalar_select %p617, %s26, 1
          %s619 = smul.addr %s618, 32
          %s620 = smul.addr %s619, 4
          %s621 = scalar_lea.vmem %s15, %s620
        $region88: #{passt_forward.5} parent=43 // pred_fallthru
          _
        // Predicated region
        $region89: #{passt_forward.5} parent=43 // pred_check
          %p622 = pneg %p437
        $region90: #{passt_forward.5} parent=43 // pred_check_branch
          %624 = sbr.rel (%p622) target = $region92
        $region91: #{passt_forward.5} parent=43 // pred_region
          %p625 = scmp.lt.s32.totalorder %s26, 1
          %s626 = scalar_select %p625, %s26, 1
          %s627 = scalar_lea.vmem %s16, %s626
        $region92: #{passt_forward.5} parent=43 // pred_fallthru
          _
      $region44: #{passt_forward.5} parent=5 // pred_fallthru
        _
      %p628 = scmp.le.s32.totalorder 1, %s26
      %p629 = scmp.lt.s32.totalorder %s26, 3
      %p630 = pnand %p628, %p629
      %p631 = pneg %p630
      // Predicated region
      $region93: #{passt_forward.5} parent=5 // pred_check
        _
      $region94: #{passt_forward.5} parent=5 // pred_check_branch
        %633 = sbr.rel (%p630) target = $region96
      $region95: #{passt_forward.5} parent=5 // pred_region
        %s634 = ssub.s32 %s26, 1
        %p635 = pneg %p47
        %p636 = pneg %p44
        %p637 = pneg %p68
        %p638 = pneg %p65
        %p639 = pneg %p89
        %p640 = pneg %p86
        %p641 = pneg %p110
        %p642 = pneg %p107
        %p643 = pneg %p131
        %p644 = pneg %p128
        %p645 = scmp.lt.s32.totalorder %s31, 1
        %s646 = scalar_select %p645, %s31, 1
        %s647 = scalar_lea.vmem %s5, %s646
        %p648 = pneg %p157
        %p649 = pneg %p154
        %p650 = scmp.lt.s32.totalorder %s31, 1
        %s651 = scalar_select %p650, %s31, 1
        %s652 = scalar_lea.vmem %s6, %s651
        %p653 = pneg %p183
        %p654 = pneg %p180
        %p655 = scmp.lt.s32.totalorder %s31, 1
        %s656 = scalar_select %p655, %s31, 1
        %s657 = smul.addr %s656, 48
        %s658 = smul.addr %s657, 4
        %s659 = scalar_lea.vmem %s7, %s658
        %p660 = pneg %p209
        %p661 = pneg %p206
        %p662 = scmp.lt.s32.totalorder %s31, 1
        %s663 = scalar_select %p662, %s31, 1
        %s664 = smul.addr %s663, 3
        %s665 = scalar_lea.vmem %s8, %s664
        %p666 = pneg %p235
        %p667 = pneg %p232
        %p668 = scmp.lt.s32.totalorder %s31, 1
        %s669 = scalar_select %p668, %s31, 1
        %s670 = smul.addr %s669, 16
        %s671 = smul.addr %s670, 4
        %s672 = scalar_lea.vmem %s9, %s671
        %p673 = pneg %p261
        %p674 = pneg %p258
        %p675 = scmp.lt.s32.totalorder %s31, 1
        %s676 = scalar_select %p675, %s31, 1
        %s677 = scalar_lea.vmem %s10, %s676
        %p678 = pneg %p287
        %p679 = pneg %p284
        %p680 = scmp.lt.s32.totalorder %s31, 1
        %s681 = scalar_select %p680, %s31, 1
        %s682 = scalar_lea.vmem %s11, %s681
        %p683 = pneg %p313
        %p684 = pneg %p310
        %p685 = scmp.lt.s32.totalorder %s31, 1
        %s686 = scalar_select %p685, %s31, 1
        %s687 = scalar_lea.vmem %s12, %s686
        %p688 = pneg %p339
        %p689 = pneg %p336
        %p690 = scmp.lt.s32.totalorder %s31, 1
        %s691 = scalar_select %p690, %s31, 1
        %s692 = smul.addr %s691, 32
        %s693 = smul.addr %s692, 4
        %s694 = scalar_lea.vmem %s13, %s693
        %p695 = pneg %p365
        %p696 = pneg %p362
        %p697 = scmp.lt.s32.totalorder %s31, 1
        %s698 = scalar_select %p697, %s31, 1
        %s699 = smul.addr %s698, 2
        %s700 = scalar_lea.vmem %s14, %s699
        %p701 = pneg %p391
        %p702 = pneg %p388
        %p703 = scmp.lt.s32.totalorder %s31, 1
        %s704 = scalar_select %p703, %s31, 1
        %s705 = smul.addr %s704, 32
        %s706 = smul.addr %s705, 4
        %s707 = scalar_lea.vmem %s15, %s706
        %p708 = pneg %p417
        %p709 = pneg %p414
        %p710 = scmp.lt.s32.totalorder %s31, 1
        %s711 = scalar_select %p710, %s31, 1
        %s712 = scalar_lea.vmem %s16, %s711
        %p713 = pneg %p443
        %p714 = pneg %p440
        %p715 = pneg %p464
        %p716 = pneg %p461
        %p717 = pneg %p485
        %p718 = pneg %p482
        %p719 = pneg %p506
        %p720 = pneg %p503
        %p721 = scmp.lt.s32.totalorder %s31, 1
        %s722 = scalar_select %p721, %s31, 1
        %s723 = scalar_lea.vmem %s5, %s722
        %p724 = scmp.lt.s32.totalorder %s31, 1
        %s725 = scalar_select %p724, %s31, 1
        %s726 = scalar_lea.vmem %s6, %s725
        %p727 = scmp.lt.s32.totalorder %s31, 1
        %s728 = scalar_select %p727, %s31, 1
        %s729 = smul.addr %s728, 48
        %s730 = smul.addr %s729, 4
        %s731 = scalar_lea.vmem %s7, %s730
        %p732 = scmp.lt.s32.totalorder %s31, 1
        %s733 = scalar_select %p732, %s31, 1
        %s734 = smul.addr %s733, 3
        %s735 = scalar_lea.vmem %s8, %s734
        %p736 = scmp.lt.s32.totalorder %s31, 1
        %s737 = scalar_select %p736, %s31, 1
        %s738 = smul.addr %s737, 16
        %s739 = smul.addr %s738, 4
        %s740 = scalar_lea.vmem %s9, %s739
        %p741 = scmp.lt.s32.totalorder %s31, 1
        %s742 = scalar_select %p741, %s31, 1
        %s743 = scalar_lea.vmem %s10, %s742
        %p744 = scmp.lt.s32.totalorder %s31, 1
        %s745 = scalar_select %p744, %s31, 1
        %s746 = scalar_lea.vmem %s11, %s745
        %p747 = scmp.lt.s32.totalorder %s31, 1
        %s748 = scalar_select %p747, %s31, 1
        %s749 = scalar_lea.vmem %s12, %s748
        %p750 = scmp.lt.s32.totalorder %s31, 1
        %s751 = scalar_select %p750, %s31, 1
        %s752 = smul.addr %s751, 32
        %s753 = smul.addr %s752, 4
        %s754 = scalar_lea.vmem %s13, %s753
        %p755 = scmp.lt.s32.totalorder %s31, 1
        %s756 = scalar_select %p755, %s31, 1
        %s757 = smul.addr %s756, 2
        %s758 = scalar_lea.vmem %s14, %s757
        %p759 = scmp.lt.s32.totalorder %s31, 1
        %s760 = scalar_select %p759, %s31, 1
        %s761 = smul.addr %s760, 32
        %s762 = smul.addr %s761, 4
        %s763 = scalar_lea.vmem %s15, %s762
        %p764 = scmp.lt.s32.totalorder %s31, 1
        %s765 = scalar_select %p764, %s31, 1
        %s766 = scalar_lea.vmem %s16, %s765
        %p768 = scmp.eq.s32.totalorder %s31, 0
        // Predicated region
        $region97: #{passt_forward.5} parent=95 // pred_check
          %p769 = pneg %p768
        $region98: #{passt_forward.5} parent=95 // pred_check_branch
          %771 = sbr.rel (%p769) target = $region100
        $region99: #{passt_forward.5} parent=95 // pred_region
          %v772 = vld [vmem:[%s0] sm:$0xff]
          %v773 = vld [vmem:[%s0 + $0x8] sm:$0xff]
          %v774 = vld [vmem:[%s0 + $0x10] sm:$0xff]
          %v775 = vld [vmem:[%s0 + $0x18] sm:$0xff]
          %v776 = vld [vmem:[%s0 + $0x20] sm:$0xff]
          %v777 = vld [vmem:[%s0 + $0x28] sm:$0xff]
          %v778 = vld [vmem:[%s0 + $0x30] sm:$0xff]
          %v779 = vld [vmem:[%s0 + $0x38] sm:$0xf]
          %v780 = vpack.c.bf16 %v773, %v772
          %v781 = vpack.c.bf16 %v775, %v774
          %v782 = vpack.c.bf16 %v777, %v776
          %v783 = vpack.c.bf16 %v779, %v778
          %v784 = vld [vmem:[%s1] sm:$0xf]
          %v785 = vld [vmem:[%s1 + $0x4] sm:$0xf]
          %v786 = vld [vmem:[%s1 + $0x8] sm:$0xf]
          %v787 = vld [vmem:[%s1 + $0xc] sm:$0xf]
          %v788 = vld [vmem:[%s1 + $0x10] sm:$0xf]
          %v789 = vld [vmem:[%s1 + $0x14] sm:$0xf]
          %v790 = vld [vmem:[%s1 + $0x18] sm:$0xf]
          %v791 = vld [vmem:[%s1 + $0x1c] sm:$0xf]
          %v792 = vld [vmem:[%s2] sm:$0x1]
          %v794 = vlaneseq
          %v795 = vshrl.u32 %v794, 7
          %v796 = vsub.s32 0, %v795
          %v797 = vrot.slane %v792, %v796
          %v807 = vunpack.c.l.b16 %v784
          %v808 = vunpack.c.l.b16 %v785
          %v809 = vunpack.c.l.b16 %v786
          %v810 = vunpack.c.l.b16 %v787
          %v811 = vunpack.c.l.b16 %v788
          %v812 = vunpack.c.l.b16 %v789
          %v813 = vunpack.c.l.b16 %v790
          %v814 = vunpack.c.l.b16 %v791
          %v815 = vpack.c.b16 %v808, %v807
          %v816 = vpack.c.b16 %v810, %v809
          %v817 = vpack.c.b16 %v812, %v811
          %v818 = vpack.c.b16 %v814, %v813
          %vm823 = vcmask 523264
          %v825 = vsel %vm823, %v780, 0
          %v828 = vsel %vm823, %v781, 0
          %v831 = vsel %vm823, %v782, 0
          %v834 = vsel %vm823, %v783, 0
          %836 = vmatprep.subr.bf16.mxu0 0
          %837 = vmatpush1.bf16.msra.mxu0 0
          %838 = vmatprep.subr.bf16.mxu0 0
          %839 = vmatpush1.bf16.msra.mxu0 0
          %840 = vmatprep.subr.bf16.mxu0 0
          %841 = vmatpush1.bf16.msra.mxu0 0
          %842 = vmatprep.subr.bf16.mxu0 0
          %843 = vmatpush1.bf16.msra.mxu0 0
          %844 = vmatprep.subr.bf16.mxu0 0
          %845 = vmatpush1.bf16.msra.mxu0 %v818
          %846 = vmatprep.subr.bf16.mxu0 0
          %847 = vmatpush1.bf16.msra.mxu0 %v817
          %848 = vmatprep.subr.bf16.mxu0 0
          %849 = vmatpush1.bf16.msra.mxu0 %v816
          %850 = vmatprep.subr.bf16.mxu0 0
          %851 = vmatpush1.bf16.msra.mxu0 %v815
          %852 = vmatprep.subr.bf16.mxu0 0
          %853 = vmatpush2.bf16.msra.mxu0 0
          %854 = vmatprep.subr.bf16.mxu0 0
          %855 = vmatpush2.bf16.msra.mxu0 0
          %856 = vmatprep.subr.bf16.mxu0 0
          %857 = vmatpush2.bf16.msra.mxu0 0
          %858 = vmatprep.subr.bf16.mxu0 0
          %859 = vmatpush2.bf16.msra.mxu0 0
          %860 = vmatprep.subr.bf16.mxu0 0
          %861 = vmatpush2.bf16.msra.mxu0 0
          %862 = vmatprep.subr.bf16.mxu0 0
          %863 = vmatpush2.bf16.msra.mxu0 0
          %864 = vmatprep.subr.bf16.mxu0 0
          %865 = vmatpush2.bf16.msra.mxu0 0
          %866 = vmatprep.subr.bf16.mxu0 0
          %867 = vmatpush2.bf16.msra.mxu0 0
          %868 = vmatprep.mubr.bf16.mxu0 0
          %869 = vmatmul.mubr.bf16.gmra.mxu0 %v825
          %v870 = vpop.f32.mrf.mxu0
          %v871 = vadd.f32 %v797, %v870
          %v872 = vpop.f32.mrf.mxu0
          %v873 = vpop.f32.mrf.mxu0
          %v874 = vadd.f32 %v797, %v873
          %v875 = vpop.f32.mrf.mxu0
          %876 = vmatprep.mubr.bf16.mxu0 0
          %877 = vmatmul.mubr.bf16.gmra.mxu0 %v828
          %v878 = vpop.f32.mrf.mxu0
          %v879 = vadd.f32 %v797, %v878
          %v880 = vpop.f32.mrf.mxu0
          %v881 = vpop.f32.mrf.mxu0
          %v882 = vadd.f32 %v797, %v881
          %v883 = vpop.f32.mrf.mxu0
          %884 = vmatprep.mubr.bf16.mxu0 0
          %885 = vmatmul.mubr.bf16.gmra.mxu0 %v831
          %v886 = vpop.f32.mrf.mxu0
          %v887 = vadd.f32 %v797, %v886
          %v888 = vpop.f32.mrf.mxu0
          %v889 = vpop.f32.mrf.mxu0
          %v890 = vadd.f32 %v797, %v889
          %v891 = vpop.f32.mrf.mxu0
          %892 = vmatprep.mubr.bf16.mxu0 0
          %893 = vmatmul.mubr.bf16.gmra.mxu0 %v834
          %v894 = vpop.f32.mrf.mxu0
          %v895 = vadd.f32 %v797, %v894
          %v896 = vpop.f32.mrf.mxu0
          %v897 = vpop.f32.mrf.mxu0
          %v898 = vadd.f32 %v797, %v897
          %v899 = vpop.f32.mrf.mxu0
          %900 = vdwg.mxu0
          %v901 = vld [vmem:[%s3] sm:$0x3]
          %v902 = vld [vmem:[%s4] sm:$0xff]
          %v903 = vld [vmem:[%s4 + $0x8] sm:$0xff]
          %v904 = vld [vmem:[%s4 + $0x10] sm:$0xff]
          %v905 = vld [vmem:[%s4 + $0x18] sm:$0x3f]
          %v906 = vadd.f32 %v871, %v902
          %v907 = vadd.f32 %v874, %v903
          %v908 = vadd.f32 %v879, %v904
          %v909 = vadd.f32 %v882, %v905
          %vm914 = vcmask 1045504
          %v915 = vrot.slane %v902, 2
          %v916 = vrot.slane %v903, 2
          %v917 = vsel %vm914, %v915, %v916
          %v918 = vrot.slane %v904, 2
          %v919 = vsel %vm914, %v916, %v918
          %v920 = vrot.slane %v905, 2
          %v921 = vsel %vm914, %v918, %v920
          %v927 = vadd.f32 %v882, %v915
          %v928 = vadd.f32 %v887, %v917
          %v929 = vadd.f32 %v890, %v919
          %v930 = vadd.f32 %v895, %v921
          %v931 = vadd.f32 %v898, %v920
          %vm936 = vcmask 1041408
          %v937 = vrot.slane %v906, 6
          %v938 = vrot.slane %v907, 6
          %v939 = vsel %vm936, %v937, %v938
          %v940 = vrot.slane %v908, 6
          %v941 = vsel %vm936, %v938, %v940
          %v942 = vrot.slane %v909, 6
          %v943 = vsel %vm936, %v940, %v942
          %vm953 = vcmask 1043456
          %v954 = vrot.slane %v927, 4
          %v955 = vrot.slane %v928, 4
          %v956 = vsel %vm953, %v954, %v955
          %v957 = vrot.slane %v929, 4
          %v958 = vsel %vm953, %v955, %v957
          %v959 = vrot.slane %v930, 4
          %v960 = vsel %vm953, %v957, %v959
          %v961 = vrot.slane %v931, 4
          %v962 = vsel %vm953, %v959, %v961
          %v967 = vsel %vm936, %v901, %v937
          %v968 = vsel %vm936, %v901, %v956
          %969 = vst [vmem:[#allocation2] sm:$0xff] %v967
          %970 = vst [vmem:[#allocation2 + $0x8] sm:$0xff] %v939
          %971 = vst [vmem:[#allocation2 + $0x10] sm:$0xff] %v941
          %972 = vst [vmem:[#allocation2 + $0x18] sm:$0xff] %v943
          %973 = vst [vmem:[#allocation2 + $0x20] sm:$0xff] %v968
          %974 = vst [vmem:[#allocation2 + $0x28] sm:$0xff] %v958
          %975 = vst [vmem:[#allocation2 + $0x30] sm:$0xff] %v960
          %976 = vst [vmem:[#allocation2 + $0x38] sm:$0xff] %v962
        $region100: #{passt_forward.5} parent=95 // pred_fallthru
          _
        %v977 = vld [vmem:[#allocation2] sm:$0xff]
        %v978 = vld [vmem:[#allocation2 + $0x8] sm:$0xff]
        %v979 = vld [vmem:[#allocation2 + $0x10] sm:$0xff]
        %v980 = vld [vmem:[#allocation2 + $0x18] sm:$0xff]
        %v981 = vld [vmem:[#allocation2 + $0x20] sm:$0xff]
        %v982 = vld [vmem:[#allocation2 + $0x28] sm:$0xff]
        %v983 = vld [vmem:[#allocation2 + $0x30] sm:$0xff]
        %v984 = vld [vmem:[#allocation2 + $0x38] sm:$0xff]
        %v985 = vld [vmem:[%s723] sm:$0x1]
        %v986 = vld [vmem:[%s726] sm:$0x1]
        %987 = vadd.xlane.f32.xlu0 %v977
        %v988 = vpop.xlane.xlu0 %987
        %989 = vadd.xlane.f32.xlu0 %v978
        %v990 = vpop.xlane.xlu0 %989
        %991 = vadd.xlane.f32.xlu0 %v979
        %v992 = vpop.xlane.xlu0 %991
        %993 = vadd.xlane.f32.xlu0 %v980
        %v994 = vpop.xlane.xlu0 %993
        %995 = vadd.xlane.f32.xlu0 %v981
        %v996 = vpop.xlane.xlu0 %995
        %997 = vadd.xlane.f32.xlu0 %v982
        %v998 = vpop.xlane.xlu0 %997
        %999 = vadd.xlane.f32.xlu0 %v983
        %v1000 = vpop.xlane.xlu0 %999
        %1001 = vadd.xlane.f32.xlu0 %v984
        %v1002 = vpop.xlane.xlu0 %1001
        %v1003 = vrcp.pop 128.0
        %v1004 = vmul.f32 %v988, %v1003
        %v1005 = vmul.f32 %v990, %v1003
        %v1006 = vmul.f32 %v992, %v1003
        %v1007 = vmul.f32 %v994, %v1003
        %v1008 = vmul.f32 %v996, %v1003
        %v1009 = vmul.f32 %v998, %v1003
        %v1010 = vmul.f32 %v1000, %v1003
        %v1011 = vmul.f32 %v1002, %v1003
        %v1012 = vsub.f32 %v977, %v1004
        %v1013 = vsub.f32 %v978, %v1005
        %v1014 = vsub.f32 %v979, %v1006
        %v1015 = vsub.f32 %v980, %v1007
        %v1016 = vsub.f32 %v981, %v1008
        %v1017 = vsub.f32 %v982, %v1009
        %v1018 = vsub.f32 %v983, %v1010
        %v1019 = vsub.f32 %v984, %v1011
        %v1020 = vmul.f32 %v1012, %v1012
        %v1021 = vmul.f32 %v1013, %v1013
        %v1022 = vmul.f32 %v1014, %v1014
        %v1023 = vmul.f32 %v1015, %v1015
        %v1024 = vmul.f32 %v1016, %v1016
        %v1025 = vmul.f32 %v1017, %v1017
        %v1026 = vmul.f32 %v1018, %v1018
        %v1027 = vmul.f32 %v1019, %v1019
        %1028 = vadd.xlane.f32.xlu0 %v1020
        %v1029 = vpop.xlane.xlu0 %1028
        %1030 = vadd.xlane.f32.xlu0 %v1021
        %v1031 = vpop.xlane.xlu0 %1030
        %1032 = vadd.xlane.f32.xlu0 %v1022
        %v1033 = vpop.xlane.xlu0 %1032
        %1034 = vadd.xlane.f32.xlu0 %v1023
        %v1035 = vpop.xlane.xlu0 %1034
        %1036 = vadd.xlane.f32.xlu0 %v1024
        %v1037 = vpop.xlane.xlu0 %1036
        %1038 = vadd.xlane.f32.xlu0 %v1025
        %v1039 = vpop.xlane.xlu0 %1038
        %1040 = vadd.xlane.f32.xlu0 %v1026
        %v1041 = vpop.xlane.xlu0 %1040
        %1042 = vadd.xlane.f32.xlu0 %v1027
        %v1043 = vpop.xlane.xlu0 %1042
        %v1044 = vmul.f32 %v1029, %v1003
        %v1045 = vmul.f32 %v1031, %v1003
        %v1046 = vmul.f32 %v1033, %v1003
        %v1047 = vmul.f32 %v1035, %v1003
        %v1048 = vmul.f32 %v1037, %v1003
        %v1049 = vmul.f32 %v1039, %v1003
        %v1050 = vmul.f32 %v1041, %v1003
        %v1051 = vmul.f32 %v1043, %v1003
        %v1052 = vadd.f32 %v1044, 1e-06
        %v1053 = vadd.f32 %v1045, 1e-06
        %v1054 = vadd.f32 %v1046, 1e-06
        %v1055 = vadd.f32 %v1047, 1e-06
        %v1056 = vadd.f32 %v1048, 1e-06
        %v1057 = vadd.f32 %v1049, 1e-06
        %v1058 = vadd.f32 %v1050, 1e-06
        %v1059 = vadd.f32 %v1051, 1e-06
        %v1060 = vrsqrt.pop %v1052
        %v1061 = vrsqrt.pop %v1053
        %v1062 = vrsqrt.pop %v1054
        %v1063 = vrsqrt.pop %v1055
        %v1064 = vrsqrt.pop %v1056
        %v1065 = vrsqrt.pop %v1057
        %v1066 = vrsqrt.pop %v1058
        %v1067 = vrsqrt.pop %v1059
        %v1068 = vmul.f32 %v1012, %v1060
        %v1069 = vmul.f32 %v1013, %v1061
        %v1070 = vmul.f32 %v1014, %v1062
        %v1071 = vmul.f32 %v1015, %v1063
        %v1072 = vmul.f32 %v1016, %v1064
        %v1073 = vmul.f32 %v1017, %v1065
        %v1074 = vmul.f32 %v1018, %v1066
        %v1075 = vmul.f32 %v1019, %v1067
        %v1077 = vlaneseq
        %v1078 = vshrl.u32 %v1077, 7
        %v1079 = vsub.s32 0, %v1078
        %v1080 = vrot.slane %v985, %v1079
        %v1082 = vmul.f32 %v1068, %v1080
        %v1083 = vmul.f32 %v1069, %v1080
        %v1084 = vmul.f32 %v1070, %v1080
        %v1085 = vmul.f32 %v1071, %v1080
        %v1086 = vmul.f32 %v1072, %v1080
        %v1087 = vmul.f32 %v1073, %v1080
        %v1088 = vmul.f32 %v1074, %v1080
        %v1089 = vmul.f32 %v1075, %v1080
        %v1091 = vlaneseq
        %v1092 = vshrl.u32 %v1091, 7
        %v1093 = vsub.s32 0, %v1092
        %v1094 = vrot.slane %v986, %v1093
        %v1096 = vadd.f32 %v1082, %v1094
        %v1097 = vadd.f32 %v1083, %v1094
        %v1098 = vadd.f32 %v1084, %v1094
        %v1099 = vadd.f32 %v1085, %v1094
        %v1100 = vadd.f32 %v1086, %v1094
        %v1101 = vadd.f32 %v1087, %v1094
        %v1102 = vadd.f32 %v1088, %v1094
        %v1103 = vadd.f32 %v1089, %v1094
        %v1104 = vpack.c.bf16 %v1097, %v1096
        %v1105 = vpack.c.bf16 %v1099, %v1098
        %v1106 = vpack.c.bf16 %v1101, %v1100
        %v1107 = vpack.c.bf16 %v1103, %v1102
        %v1108 = vld [vmem:[%s731] sm:$0xff]
        %v1109 = vld [vmem:[%s731 + $0x8] sm:$0xf]
        %v1110 = vld [vmem:[%s731 + $0xc] sm:$0xff]
        %v1111 = vld [vmem:[%s731 + $0x14] sm:$0xf]
        %v1112 = vld [vmem:[%s731 + $0x18] sm:$0xff]
        %v1113 = vld [vmem:[%s731 + $0x20] sm:$0xf]
        %v1114 = vld [vmem:[%s731 + $0x24] sm:$0xff]
        %v1115 = vld [vmem:[%s731 + $0x2c] sm:$0xf]
        %v1116 = vld [vmem:[%s731 + $0x30] sm:$0xff]
        %v1117 = vld [vmem:[%s731 + $0x38] sm:$0xf]
        %v1118 = vld [vmem:[%s731 + $0x3c] sm:$0xff]
        %v1119 = vld [vmem:[%s731 + $0x44] sm:$0xf]
        %v1120 = vld [vmem:[%s731 + $0x48] sm:$0xff]
        %v1121 = vld [vmem:[%s731 + $0x50] sm:$0xf]
        %v1122 = vld [vmem:[%s731 + $0x54] sm:$0xff]
        %v1123 = vld [vmem:[%s731 + $0x5c] sm:$0xf]
        %v1124 = vld [vmem:[%s731 + $0x60] sm:$0xff]
        %v1125 = vld [vmem:[%s731 + $0x68] sm:$0xf]
        %v1126 = vld [vmem:[%s731 + $0x6c] sm:$0xff]
        %v1127 = vld [vmem:[%s731 + $0x74] sm:$0xf]
        %v1128 = vld [vmem:[%s731 + $0x78] sm:$0xff]
        %v1129 = vld [vmem:[%s731 + $0x80] sm:$0xf]
        %v1130 = vld [vmem:[%s731 + $0x84] sm:$0xff]
        %v1131 = vld [vmem:[%s731 + $0x8c] sm:$0xf]
        %v1132 = vld [vmem:[%s731 + $0x90] sm:$0xff]
        %v1133 = vld [vmem:[%s731 + $0x98] sm:$0xf]
        %v1134 = vld [vmem:[%s731 + $0x9c] sm:$0xff]
        %v1135 = vld [vmem:[%s731 + $0xa4] sm:$0xf]
        %v1136 = vld [vmem:[%s731 + $0xa8] sm:$0xff]
        %v1137 = vld [vmem:[%s731 + $0xb0] sm:$0xf]
        %v1138 = vld [vmem:[%s731 + $0xb4] sm:$0xff]
        %v1139 = vld [vmem:[%s731 + $0xbc] sm:$0xf]
        %v1140 = vld [vmem:[%s735] sm:$0x7]
        %v1142 = vlaneseq
        %v1143 = vshrl.u32 %v1142, 7
        %v1144 = vsub.s32 0, %v1143
        %v1145 = vrot.slane %v1140, %v1144
        %v1146 = vlaneseq
        %v1147 = vshrl.u32 %v1146, 7
        %v1148 = vsub.s32 1, %v1147
        %v1149 = vrot.slane %v1140, %v1148
        %v1150 = vlaneseq
        %v1151 = vshrl.u32 %v1150, 7
        %v1152 = vsub.s32 2, %v1151
        %v1153 = vrot.slane %v1140, %v1152
        %v1189 = vunpack.c.l.b16 %v1108
        %v1190 = vunpack.c.h.b16 %v1108
        %v1191 = vunpack.c.l.b16 %v1109
        %v1192 = vunpack.c.l.b16 %v1110
        %v1193 = vunpack.c.h.b16 %v1110
        %v1194 = vunpack.c.l.b16 %v1111
        %v1195 = vunpack.c.l.b16 %v1112
        %v1196 = vunpack.c.h.b16 %v1112
        %v1197 = vunpack.c.l.b16 %v1113
        %v1198 = vunpack.c.l.b16 %v1114
        %v1199 = vunpack.c.h.b16 %v1114
        %v1200 = vunpack.c.l.b16 %v1115
        %v1201 = vunpack.c.l.b16 %v1116
        %v1202 = vunpack.c.h.b16 %v1116
        %v1203 = vunpack.c.l.b16 %v1117
        %v1204 = vunpack.c.l.b16 %v1118
        %v1205 = vunpack.c.h.b16 %v1118
        %v1206 = vunpack.c.l.b16 %v1119
        %v1207 = vunpack.c.l.b16 %v1120
        %v1208 = vunpack.c.h.b16 %v1120
        %v1209 = vunpack.c.l.b16 %v1121
        %v1210 = vunpack.c.l.b16 %v1122
        %v1211 = vunpack.c.h.b16 %v1122
        %v1212 = vunpack.c.l.b16 %v1123
        %v1213 = vunpack.c.l.b16 %v1124
        %v1214 = vunpack.c.h.b16 %v1124
        %v1215 = vunpack.c.l.b16 %v1125
        %v1216 = vunpack.c.l.b16 %v1126
        %v1217 = vunpack.c.h.b16 %v1126
        %v1218 = vunpack.c.l.b16 %v1127
        %v1219 = vunpack.c.l.b16 %v1128
        %v1220 = vunpack.c.h.b16 %v1128
        %v1221 = vunpack.c.l.b16 %v1129
        %v1222 = vunpack.c.l.b16 %v1130
        %v1223 = vunpack.c.h.b16 %v1130
        %v1224 = vunpack.c.l.b16 %v1131
        %v1225 = vunpack.c.l.b16 %v1132
        %v1226 = vunpack.c.h.b16 %v1132
        %v1227 = vunpack.c.l.b16 %v1133
        %v1228 = vunpack.c.l.b16 %v1134
        %v1229 = vunpack.c.h.b16 %v1134
        %v1230 = vunpack.c.l.b16 %v1135
        %v1231 = vunpack.c.l.b16 %v1136
        %v1232 = vunpack.c.h.b16 %v1136
        %v1233 = vunpack.c.l.b16 %v1137
        %v1234 = vunpack.c.l.b16 %v1138
        %v1235 = vunpack.c.h.b16 %v1138
        %v1236 = vunpack.c.l.b16 %v1139
        %v1237 = vpack.c.b16 %v1192, %v1189
        %v1238 = vpack.c.b16 %v1193, %v1190
        %v1239 = vpack.c.b16 %v1194, %v1191
        %v1240 = vpack.c.b16 %v1198, %v1195
        %v1241 = vpack.c.b16 %v1199, %v1196
        %v1242 = vpack.c.b16 %v1200, %v1197
        %v1243 = vpack.c.b16 %v1204, %v1201
        %v1244 = vpack.c.b16 %v1205, %v1202
        %v1245 = vpack.c.b16 %v1206, %v1203
        %v1246 = vpack.c.b16 %v1210, %v1207
        %v1247 = vpack.c.b16 %v1211, %v1208
        %v1248 = vpack.c.b16 %v1212, %v1209
        %v1249 = vpack.c.b16 %v1216, %v1213
        %v1250 = vpack.c.b16 %v1217, %v1214
        %v1251 = vpack.c.b16 %v1218, %v1215
        %v1252 = vpack.c.b16 %v1222, %v1219
        %v1253 = vpack.c.b16 %v1223, %v1220
        %v1254 = vpack.c.b16 %v1224, %v1221
        %v1255 = vpack.c.b16 %v1228, %v1225
        %v1256 = vpack.c.b16 %v1229, %v1226
        %v1257 = vpack.c.b16 %v1230, %v1227
        %v1258 = vpack.c.b16 %v1234, %v1231
        %v1259 = vpack.c.b16 %v1235, %v1232
        %v1260 = vpack.c.b16 %v1236, %v1233
        %1285 = vmatprep.subr.bf16.mxu0 %v1259
        %1286 = vmatpush1.bf16.msra.mxu0 %v1258
        %1287 = vmatprep.subr.bf16.mxu0 %v1256
        %1288 = vmatpush1.bf16.msra.mxu0 %v1255
        %1289 = vmatprep.subr.bf16.mxu0 %v1253
        %1290 = vmatpush1.bf16.msra.mxu0 %v1252
        %1291 = vmatprep.subr.bf16.mxu0 %v1250
        %1292 = vmatpush1.bf16.msra.mxu0 %v1249
        %1293 = vmatprep.subr.bf16.mxu0 %v1247
        %1294 = vmatpush1.bf16.msra.mxu0 %v1246
        %1295 = vmatprep.subr.bf16.mxu0 %v1244
        %1296 = vmatpush1.bf16.msra.mxu0 %v1243
        %1297 = vmatprep.subr.bf16.mxu0 %v1241
        %1298 = vmatpush1.bf16.msra.mxu0 %v1240
        %1299 = vmatprep.subr.bf16.mxu0 %v1238
        %1300 = vmatpush1.bf16.msra.mxu0 %v1237
        %1301 = vmatprep.subr.bf16.mxu0 0
        %1302 = vmatpush2.bf16.msra.mxu0 0
        %1303 = vmatprep.subr.bf16.mxu0 0
        %1304 = vmatpush2.bf16.msra.mxu0 0
        %1305 = vmatprep.subr.bf16.mxu0 0
        %1306 = vmatpush2.bf16.msra.mxu0 0
        %1307 = vmatprep.subr.bf16.mxu0 0
        %1308 = vmatpush2.bf16.msra.mxu0 0
        %1309 = vmatprep.subr.bf16.mxu0 0
        %1310 = vmatpush2.bf16.msra.mxu0 0
        %1311 = vmatprep.subr.bf16.mxu0 0
        %1312 = vmatpush2.bf16.msra.mxu0 0
        %1313 = vmatprep.subr.bf16.mxu0 0
        %1314 = vmatpush2.bf16.msra.mxu0 0
        %1315 = vmatprep.subr.bf16.mxu0 0
        %1316 = vmatpush2.bf16.msra.mxu0 0
        %1317 = vmatprep.mubr.bf16.mxu0 0
        %1318 = vmatmul.mubr.bf16.gmra.mxu0 %v1104
        %v1319 = vpop.f32.mrf.mxu0
        %v1320 = vadd.f32 %v1145, %v1319
        %v1321 = vpop.f32.mrf.mxu0
        %v1322 = vadd.f32 %v1149, %v1321
        %v1323 = vpop.f32.mrf.mxu0
        %v1324 = vadd.f32 %v1145, %v1323
        %v1325 = vpop.f32.mrf.mxu0
        %v1326 = vadd.f32 %v1149, %v1325
        %1327 = vmatprep.mubr.bf16.mxu0 0
        %1328 = vmatmul.mubr.bf16.gmra.mxu0 %v1105
        %v1329 = vpop.f32.mrf.mxu0
        %v1330 = vadd.f32 %v1145, %v1329
        %v1331 = vpop.f32.mrf.mxu0
        %v1332 = vadd.f32 %v1149, %v1331
        %v1333 = vpop.f32.mrf.mxu0
        %v1334 = vadd.f32 %v1145, %v1333
        %v1335 = vpop.f32.mrf.mxu0
        %v1336 = vadd.f32 %v1149, %v1335
        %1337 = vmatprep.mubr.bf16.mxu0 0
        %1338 = vmatmul.mubr.bf16.gmra.mxu0 %v1106
        %v1339 = vpop.f32.mrf.mxu0
        %v1340 = vadd.f32 %v1145, %v1339
        %v1341 = vpop.f32.mrf.mxu0
        %v1342 = vadd.f32 %v1149, %v1341
        %v1343 = vpop.f32.mrf.mxu0
        %v1344 = vadd.f32 %v1145, %v1343
        %v1345 = vpop.f32.mrf.mxu0
        %v1346 = vadd.f32 %v1149, %v1345
        %1347 = vmatprep.mubr.bf16.mxu0 0
        %1348 = vmatmul.mubr.bf16.gmra.mxu0 %v1107
        %v1349 = vpop.f32.mrf.mxu0
        %v1350 = vadd.f32 %v1145, %v1349
        %v1351 = vpop.f32.mrf.mxu0
        %v1352 = vadd.f32 %v1149, %v1351
        %v1353 = vpop.f32.mrf.mxu0
        %v1354 = vadd.f32 %v1145, %v1353
        %v1355 = vpop.f32.mrf.mxu0
        %v1356 = vadd.f32 %v1149, %v1355
        %1357 = vdwg.mxu0
        %1358 = vmatprep.subr.bf16.mxu0 0
        %1359 = vmatpush1.bf16.msra.mxu0 %v1260
        %1360 = vmatprep.subr.bf16.mxu0 0
        %1361 = vmatpush1.bf16.msra.mxu0 %v1257
        %1362 = vmatprep.subr.bf16.mxu0 0
        %1363 = vmatpush1.bf16.msra.mxu0 %v1254
        %1364 = vmatprep.subr.bf16.mxu0 0
        %1365 = vmatpush1.bf16.msra.mxu0 %v1251
        %1366 = vmatprep.subr.bf16.mxu0 0
        %1367 = vmatpush1.bf16.msra.mxu0 %v1248
        %1368 = vmatprep.subr.bf16.mxu0 0
        %1369 = vmatpush1.bf16.msra.mxu0 %v1245
        %1370 = vmatprep.subr.bf16.mxu0 0
        %1371 = vmatpush1.bf16.msra.mxu0 %v1242
        %1372 = vmatprep.subr.bf16.mxu0 0
        %1373 = vmatpush1.bf16.msra.mxu0 %v1239
        %1374 = vmatprep.subr.bf16.mxu0 0
        %1375 = vmatpush2.bf16.msra.mxu0 0
        %1376 = vmatprep.subr.bf16.mxu0 0
        %1377 = vmatpush2.bf16.msra.mxu0 0
        %1378 = vmatprep.subr.bf16.mxu0 0
        %1379 = vmatpush2.bf16.msra.mxu0 0
        %1380 = vmatprep.subr.bf16.mxu0 0
        %1381 = vmatpush2.bf16.msra.mxu0 0
        %1382 = vmatprep.subr.bf16.mxu0 0
        %1383 = vmatpush2.bf16.msra.mxu0 0
        %1384 = vmatprep.subr.bf16.mxu0 0
        %1385 = vmatpush2.bf16.msra.mxu0 0
        %1386 = vmatprep.subr.bf16.mxu0 0
        %1387 = vmatpush2.bf16.msra.mxu0 0
        %1388 = vmatprep.subr.bf16.mxu0 0
        %1389 = vmatpush2.bf16.msra.mxu0 0
        %1390 = vmatprep.mubr.bf16.mxu0 0
        %1391 = vmatmul.mubr.bf16.gmra.mxu0 %v1104
        %v1392 = vpop.f32.mrf.mxu0
        %v1393 = vadd.f32 %v1153, %v1392
        %v1394 = vpop.f32.mrf.mxu0
        %v1395 = vpop.f32.mrf.mxu0
        %v1396 = vadd.f32 %v1153, %v1395
        %v1397 = vpop.f32.mrf.mxu0
        %1398 = vmatprep.mubr.bf16.mxu0 0
        %1399 = vmatmul.mubr.bf16.gmra.mxu0 %v1105
        %v1400 = vpop.f32.mrf.mxu0
        %v1401 = vadd.f32 %v1153, %v1400
        %v1402 = vpop.f32.mrf.mxu0
        %v1403 = vpop.f32.mrf.mxu0
        %v1404 = vadd.f32 %v1153, %v1403
        %v1405 = vpop.f32.mrf.mxu0
        %1406 = vmatprep.mubr.bf16.mxu0 0
        %1407 = vmatmul.mubr.bf16.gmra.mxu0 %v1106
        %v1408 = vpop.f32.mrf.mxu0
        %v1409 = vadd.f32 %v1153, %v1408
        %v1410 = vpop.f32.mrf.mxu0
        %v1411 = vpop.f32.mrf.mxu0
        %v1412 = vadd.f32 %v1153, %v1411
        %v1413 = vpop.f32.mrf.mxu0
        %1414 = vmatprep.mubr.bf16.mxu0 0
        %1415 = vmatmul.mubr.bf16.gmra.mxu0 %v1107
        %v1416 = vpop.f32.mrf.mxu0
        %v1417 = vadd.f32 %v1153, %v1416
        %v1418 = vpop.f32.mrf.mxu0
        %v1419 = vpop.f32.mrf.mxu0
        %v1420 = vadd.f32 %v1153, %v1419
        %v1421 = vpop.f32.mrf.mxu0
        %1422 = vdwg.mxu0
        %v1423 = vpack.c.bf16 %v1324, %v1320
        %v1424 = vpack.c.bf16 %v1334, %v1330
        %v1425 = vpack.c.bf16 %v1326, %v1322
        %v1426 = vpack.c.bf16 %v1336, %v1332
        %vm1427 = vcmask 261120
        %v1429 = vsel %vm1427, %v1423, 0
        %v1432 = vsel %vm1427, %v1424, 0
        %v1435 = vsel %vm1427, %v1425, 0
        %v1438 = vsel %vm1427, %v1426, 0
        %1440 = vmatprep.subr.bf16.mxu0 0
        %1441 = vmatpush1.bf16.xpose.msra.mxu0 0
        %1442 = vmatprep.subr.bf16.mxu0 0
        %1443 = vmatpush1.bf16.xpose.msra.mxu0 0
        %1444 = vmatprep.subr.bf16.mxu0 0
        %1445 = vmatpush1.bf16.xpose.msra.mxu0 0
        %1446 = vmatprep.subr.bf16.mxu0 0
        %1447 = vmatpush1.bf16.xpose.msra.mxu0 0
        %1448 = vmatprep.subr.bf16.mxu0 0
        %1449 = vmatpush1.bf16.xpose.msra.mxu0 0
        %1450 = vmatprep.subr.bf16.mxu0 0
        %1451 = vmatpush1.bf16.xpose.msra.mxu0 0
        %1452 = vmatprep.subr.bf16.mxu0 0
        %1453 = vmatpush1.bf16.xpose.msra.mxu0 %v1438
        %1454 = vmatprep.subr.bf16.mxu0 0
        %1455 = vmatpush1.bf16.xpose.msra.mxu0 %v1435
        %1456 = vmatprep.subr.bf16.mxu0 0
        %1457 = vmatpush2.bf16.xpose.msra.mxu0 0
        %1458 = vmatprep.subr.bf16.mxu0 0
        %1459 = vmatpush2.bf16.xpose.msra.mxu0 0
        %1460 = vmatprep.subr.bf16.mxu0 0
        %1461 = vmatpush2.bf16.xpose.msra.mxu0 0
        %1462 = vmatprep.subr.bf16.mxu0 0
        %1463 = vmatpush2.bf16.xpose.msra.mxu0 0
        %1464 = vmatprep.subr.bf16.mxu0 0
        %1465 = vmatpush2.bf16.xpose.msra.mxu0 0
        %1466 = vmatprep.subr.bf16.mxu0 0
        %1467 = vmatpush2.bf16.xpose.msra.mxu0 0
        %1468 = vmatprep.subr.bf16.mxu0 0
        %1469 = vmatpush2.bf16.xpose.msra.mxu0 0
        %1470 = vmatprep.subr.bf16.mxu0 0
        %1471 = vmatpush2.bf16.xpose.msra.mxu0 0
        %1472 = vmatprep.mubr.bf16.mxu0 0
        %1473 = vmatmul.mubr.bf16.gmra.mxu0 %v1429
        %v1474 = vpop.f32.mrf.mxu0
        %v1475 = vadd.f32 0.0, %v1474
        %v1476 = vpop.f32.mrf.mxu0
        %v1477 = vpop.f32.mrf.mxu0
        %v1478 = vadd.f32 0.0, %v1477
        %v1479 = vpop.f32.mrf.mxu0
        %1480 = vmatprep.mubr.bf16.mxu0 0
        %1481 = vmatmul.mubr.bf16.gmra.mxu0 %v1432
        %v1482 = vpop.f32.mrf.mxu0
        %v1483 = vadd.f32 0.0, %v1482
        %v1484 = vpop.f32.mrf.mxu0
        %v1485 = vpop.f32.mrf.mxu0
        %v1486 = vadd.f32 0.0, %v1485
        %v1487 = vpop.f32.mrf.mxu0
        %1488 = vdwg.mxu0
        %v1489 = vmul.f32 %v1475, 0.17677669
        %v1490 = vmul.f32 %v1478, 0.17677669
        %v1491 = vmul.f32 %v1483, 0.17677669
        %v1492 = vmul.f32 %v1486, 0.17677669
        %v1493 = vsel %vm1427, %v1489, -inf
        %1494 = vmax.xlane.f32.xlu0 %v1493
        %v1495 = vpop.xlane.xlu0 %1494
        %v1496 = vsel %vm1427, %v1490, -inf
        %1497 = vmax.xlane.f32.xlu0 %v1496
        %v1498 = vpop.xlane.xlu0 %1497
        %v1499 = vsel %vm1427, %v1491, -inf
        %1500 = vmax.xlane.f32.xlu0 %v1499
        %v1501 = vpop.xlane.xlu0 %1500
        %v1502 = vsel %vm1427, %v1492, -inf
        %1503 = vmax.xlane.f32.xlu0 %v1502
        %v1504 = vpop.xlane.xlu0 %1503
        %v1505 = vsub.f32 %v1489, %v1495
        %v1506 = vsub.f32 %v1490, %v1498
        %v1507 = vsub.f32 %v1491, %v1501
        %v1508 = vsub.f32 %v1492, %v1504
        %v1509 = vmul.f32 %v1505, 1.442695
        %v1510 = vpow.pop %v1509
        %v1511 = vmul.f32 %v1506, 1.442695
        %v1512 = vpow.pop %v1511
        %v1513 = vmul.f32 %v1507, 1.442695
        %v1514 = vpow.pop %v1513
        %v1515 = vmul.f32 %v1508, 1.442695
        %v1516 = vpow.pop %v1515
        %v1517 = vsel %vm1427, %v1510, 0.0
        %1518 = vadd.xlane.f32.xlu0 %v1517
        %v1519 = vpop.xlane.xlu0 %1518
        %v1520 = vsel %vm1427, %v1512, 0.0
        %1521 = vadd.xlane.f32.xlu0 %v1520
        %v1522 = vpop.xlane.xlu0 %1521
        %v1523 = vsel %vm1427, %v1514, 0.0
        %1524 = vadd.xlane.f32.xlu0 %v1523
        %v1525 = vpop.xlane.xlu0 %1524
        %v1526 = vsel %vm1427, %v1516, 0.0
        %1527 = vadd.xlane.f32.xlu0 %v1526
        %v1528 = vpop.xlane.xlu0 %1527
        %v1529 = vrcp.pop %v1519
        %v1530 = vrcp.pop %v1522
        %v1531 = vrcp.pop %v1525
        %v1532 = vrcp.pop %v1528
        %v1533 = vmul.f32 %v1510, %v1529
        %v1534 = vmul.f32 %v1512, %v1530
        %v1535 = vmul.f32 %v1514, %v1531
        %v1536 = vmul.f32 %v1516, %v1532
        %v1537 = vpack.c.bf16 %v1534, %v1533
        %v1538 = vpack.c.bf16 %v1536, %v1535
        %v1539 = vpack.c.bf16 %v1396, %v1393
        %v1540 = vpack.c.bf16 %v1404, %v1401
        %v1542 = vsel %vm1427, %v1537, 0
        %v1545 = vsel %vm1427, %v1538, 0
        %1547 = vmatprep.subr.bf16.mxu0 0
        %1548 = vmatpush1.bf16.msra.mxu0 0
        %1549 = vmatprep.subr.bf16.mxu0 0
        %1550 = vmatpush1.bf16.msra.mxu0 0
        %1551 = vmatprep.subr.bf16.mxu0 0
        %1552 = vmatpush1.bf16.msra.mxu0 0
        %1553 = vmatprep.subr.bf16.mxu0 0
        %1554 = vmatpush1.bf16.msra.mxu0 0
        %1555 = vmatprep.subr.bf16.mxu0 0
        %1556 = vmatpush1.bf16.msra.mxu0 0
        %1557 = vmatprep.subr.bf16.mxu0 0
        %1558 = vmatpush1.bf16.msra.mxu0 0
        %1559 = vmatprep.subr.bf16.mxu0 0
        %1560 = vmatpush1.bf16.msra.mxu0 %v1540
        %1561 = vmatprep.subr.bf16.mxu0 0
        %1562 = vmatpush1.bf16.msra.mxu0 %v1539
        %1563 = vmatprep.subr.bf16.mxu0 0
        %1564 = vmatpush2.bf16.msra.mxu0 0
        %1565 = vmatprep.subr.bf16.mxu0 0
        %1566 = vmatpush2.bf16.msra.mxu0 0
        %1567 = vmatprep.subr.bf16.mxu0 0
        %1568 = vmatpush2.bf16.msra.mxu0 0
        %1569 = vmatprep.subr.bf16.mxu0 0
        %1570 = vmatpush2.bf16.msra.mxu0 0
        %1571 = vmatprep.subr.bf16.mxu0 0
        %1572 = vmatpush2.bf16.msra.mxu0 0
        %1573 = vmatprep.subr.bf16.mxu0 0
        %1574 = vmatpush2.bf16.msra.mxu0 0
        %1575 = vmatprep.subr.bf16.mxu0 0
        %1576 = vmatpush2.bf16.msra.mxu0 0
        %1577 = vmatprep.subr.bf16.mxu0 0
        %1578 = vmatpush2.bf16.msra.mxu0 0
        %1579 = vmatprep.mubr.bf16.mxu0 0
        %1580 = vmatmul.mubr.bf16.gmra.mxu0 %v1542
        %v1581 = vpop.f32.mrf.mxu0
        %v1582 = vadd.f32 0.0, %v1581
        %v1583 = vpop.f32.mrf.mxu0
        %v1584 = vpop.f32.mrf.mxu0
        %v1585 = vadd.f32 0.0, %v1584
        %v1586 = vpop.f32.mrf.mxu0
        %1587 = vmatprep.mubr.bf16.mxu0 0
        %1588 = vmatmul.mubr.bf16.gmra.mxu0 %v1545
        %v1589 = vpop.f32.mrf.mxu0
        %v1590 = vadd.f32 0.0, %v1589
        %v1591 = vpop.f32.mrf.mxu0
        %v1592 = vpop.f32.mrf.mxu0
        %v1593 = vadd.f32 0.0, %v1592
        %v1594 = vpop.f32.mrf.mxu0
        %1595 = vdwg.mxu0
        %1596 = vst.msk [vmem:[#allocation3] sm:$0xff] %vm1427, %v1582
        %1597 = vst.msk [vmem:[#allocation3 + $0x8] sm:$0xff] %vm1427, %v1585
        %1598 = vst.msk [vmem:[#allocation3 + $0x10] sm:$0xff] %vm1427, %v1590
        %1599 = vst.msk [vmem:[#allocation3 + $0x18] sm:$0xff] %vm1427, %v1593
        %1602 = vrot.lane.b32.xlu0 %v1423, 96
        %v1603 = vpop.permute.xlu0 %1602
        %1604 = vrot.lane.b32.xlu0 %v1424, 96
        %v1605 = vpop.permute.xlu0 %1604
        %1608 = vrot.lane.b32.xlu0 %v1425, 96
        %v1609 = vpop.permute.xlu0 %1608
        %1610 = vrot.lane.b32.xlu0 %v1426, 96
        %v1611 = vpop.permute.xlu0 %1610
        %v1613 = vsel %vm1427, %v1603, 0
        %v1616 = vsel %vm1427, %v1605, 0
        %v1619 = vsel %vm1427, %v1609, 0
        %v1622 = vsel %vm1427, %v1611, 0
        %1624 = vmatprep.subr.bf16.mxu0 0
        %1625 = vmatpush1.bf16.xpose.msra.mxu0 0
        %1626 = vmatprep.subr.bf16.mxu0 0
        %1627 = vmatpush1.bf16.xpose.msra.mxu0 0
        %1628 = vmatprep.subr.bf16.mxu0 0
        %1629 = vmatpush1.bf16.xpose.msra.mxu0 0
        %1630 = vmatprep.subr.bf16.mxu0 0
        %1631 = vmatpush1.bf16.xpose.msra.mxu0 0
        %1632 = vmatprep.subr.bf16.mxu0 0
        %1633 = vmatpush1.bf16.xpose.msra.mxu0 0
        %1634 = vmatprep.subr.bf16.mxu0 0
        %1635 = vmatpush1.bf16.xpose.msra.mxu0 0
        %1636 = vmatprep.subr.bf16.mxu0 0
        %1637 = vmatpush1.bf16.xpose.msra.mxu0 %v1622
        %1638 = vmatprep.subr.bf16.mxu0 0
        %1639 = vmatpush1.bf16.xpose.msra.mxu0 %v1619
        %1640 = vmatprep.subr.bf16.mxu0 0
        %1641 = vmatpush2.bf16.xpose.msra.mxu0 0
        %1642 = vmatprep.subr.bf16.mxu0 0
        %1643 = vmatpush2.bf16.xpose.msra.mxu0 0
        %1644 = vmatprep.subr.bf16.mxu0 0
        %1645 = vmatpush2.bf16.xpose.msra.mxu0 0
        %1646 = vmatprep.subr.bf16.mxu0 0
        %1647 = vmatpush2.bf16.xpose.msra.mxu0 0
        %1648 = vmatprep.subr.bf16.mxu0 0
        %1649 = vmatpush2.bf16.xpose.msra.mxu0 0
        %1650 = vmatprep.subr.bf16.mxu0 0
        %1651 = vmatpush2.bf16.xpose.msra.mxu0 0
        %1652 = vmatprep.subr.bf16.mxu0 0
        %1653 = vmatpush2.bf16.xpose.msra.mxu0 0
        %1654 = vmatprep.subr.bf16.mxu0 0
        %1655 = vmatpush2.bf16.xpose.msra.mxu0 0
        %1656 = vmatprep.mubr.bf16.mxu0 0
        %1657 = vmatmul.mubr.bf16.gmra.mxu0 %v1613
        %v1658 = vpop.f32.mrf.mxu0
        %v1659 = vadd.f32 0.0, %v1658
        %v1660 = vpop.f32.mrf.mxu0
        %v1661 = vpop.f32.mrf.mxu0
        %v1662 = vadd.f32 0.0, %v1661
        %v1663 = vpop.f32.mrf.mxu0
        %1664 = vmatprep.mubr.bf16.mxu0 0
        %1665 = vmatmul.mubr.bf16.gmra.mxu0 %v1616
        %v1666 = vpop.f32.mrf.mxu0
        %v1667 = vadd.f32 0.0, %v1666
        %v1668 = vpop.f32.mrf.mxu0
        %v1669 = vpop.f32.mrf.mxu0
        %v1670 = vadd.f32 0.0, %v1669
        %v1671 = vpop.f32.mrf.mxu0
        %1672 = vdwg.mxu0
        %v1673 = vmul.f32 %v1659, 0.17677669
        %v1674 = vmul.f32 %v1662, 0.17677669
        %v1675 = vmul.f32 %v1667, 0.17677669
        %v1676 = vmul.f32 %v1670, 0.17677669
        %v1677 = vsel %vm1427, %v1673, -inf
        %1678 = vmax.xlane.f32.xlu0 %v1677
        %v1679 = vpop.xlane.xlu0 %1678
        %v1680 = vsel %vm1427, %v1674, -inf
        %1681 = vmax.xlane.f32.xlu0 %v1680
        %v1682 = vpop.xlane.xlu0 %1681
        %v1683 = vsel %vm1427, %v1675, -inf
        %1684 = vmax.xlane.f32.xlu0 %v1683
        %v1685 = vpop.xlane.xlu0 %1684
        %v1686 = vsel %vm1427, %v1676, -inf
        %1687 = vmax.xlane.f32.xlu0 %v1686
        %v1688 = vpop.xlane.xlu0 %1687
        %v1689 = vsub.f32 %v1673, %v1679
        %v1690 = vsub.f32 %v1674, %v1682
        %v1691 = vsub.f32 %v1675, %v1685
        %v1692 = vsub.f32 %v1676, %v1688
        %v1693 = vmul.f32 %v1689, 1.442695
        %v1694 = vpow.pop %v1693
        %v1695 = vmul.f32 %v1690, 1.442695
        %v1696 = vpow.pop %v1695
        %v1697 = vmul.f32 %v1691, 1.442695
        %v1698 = vpow.pop %v1697
        %v1699 = vmul.f32 %v1692, 1.442695
        %v1700 = vpow.pop %v1699
        %v1701 = vsel %vm1427, %v1694, 0.0
        %1702 = vadd.xlane.f32.xlu0 %v1701
        %v1703 = vpop.xlane.xlu0 %1702
        %v1704 = vsel %vm1427, %v1696, 0.0
        %1705 = vadd.xlane.f32.xlu0 %v1704
        %v1706 = vpop.xlane.xlu0 %1705
        %v1707 = vsel %vm1427, %v1698, 0.0
        %1708 = vadd.xlane.f32.xlu0 %v1707
        %v1709 = vpop.xlane.xlu0 %1708
        %v1710 = vsel %vm1427, %v1700, 0.0
        %1711 = vadd.xlane.f32.xlu0 %v1710
        %v1712 = vpop.xlane.xlu0 %1711
        %v1713 = vrcp.pop %v1703
        %v1714 = vrcp.pop %v1706
        %v1715 = vrcp.pop %v1709
        %v1716 = vrcp.pop %v1712
        %v1717 = vmul.f32 %v1694, %v1713
        %v1718 = vmul.f32 %v1696, %v1714
        %v1719 = vmul.f32 %v1698, %v1715
        %v1720 = vmul.f32 %v1700, %v1716
        %v1721 = vpack.c.bf16 %v1718, %v1717
        %v1722 = vpack.c.bf16 %v1720, %v1719
        %1725 = vrot.lane.b32.xlu0 %v1539, 96
        %v1726 = vpop.permute.xlu0 %1725
        %1727 = vrot.lane.b32.xlu0 %v1540, 96
        %v1728 = vpop.permute.xlu0 %1727
        %v1732 = vsel %vm1427, %v1721, 0
        %v1735 = vsel %vm1427, %v1722, 0
        %1737 = vmatprep.subr.bf16.mxu0 0
        %1738 = vmatpush1.bf16.msra.mxu0 0
        %1739 = vmatprep.subr.bf16.mxu0 0
        %1740 = vmatpush1.bf16.msra.mxu0 0
        %1741 = vmatprep.subr.bf16.mxu0 0
        %1742 = vmatpush1.bf16.msra.mxu0 0
        %1743 = vmatprep.subr.bf16.mxu0 0
        %1744 = vmatpush1.bf16.msra.mxu0 0
        %1745 = vmatprep.subr.bf16.mxu0 0
        %1746 = vmatpush1.bf16.msra.mxu0 0
        %1747 = vmatprep.subr.bf16.mxu0 0
        %1748 = vmatpush1.bf16.msra.mxu0 0
        %1749 = vmatprep.subr.bf16.mxu0 0
        %1750 = vmatpush1.bf16.msra.mxu0 %v1728
        %1751 = vmatprep.subr.bf16.mxu0 0
        %1752 = vmatpush1.bf16.msra.mxu0 %v1726
        %1753 = vmatprep.subr.bf16.mxu0 0
        %1754 = vmatpush2.bf16.msra.mxu0 0
        %1755 = vmatprep.subr.bf16.mxu0 0
        %1756 = vmatpush2.bf16.msra.mxu0 0
        %1757 = vmatprep.subr.bf16.mxu0 0
        %1758 = vmatpush2.bf16.msra.mxu0 0
        %1759 = vmatprep.subr.bf16.mxu0 0
        %1760 = vmatpush2.bf16.msra.mxu0 0
        %1761 = vmatprep.subr.bf16.mxu0 0
        %1762 = vmatpush2.bf16.msra.mxu0 0
        %1763 = vmatprep.subr.bf16.mxu0 0
        %1764 = vmatpush2.bf16.msra.mxu0 0
        %1765 = vmatprep.subr.bf16.mxu0 0
        %1766 = vmatpush2.bf16.msra.mxu0 0
        %1767 = vmatprep.subr.bf16.mxu0 0
        %1768 = vmatpush2.bf16.msra.mxu0 0
        %1769 = vmatprep.mubr.bf16.mxu0 0
        %1770 = vmatmul.mubr.bf16.gmra.mxu0 %v1732
        %v1771 = vpop.f32.mrf.mxu0
        %v1772 = vadd.f32 0.0, %v1771
        %v1773 = vpop.f32.mrf.mxu0
        %v1774 = vpop.f32.mrf.mxu0
        %v1775 = vadd.f32 0.0, %v1774
        %v1776 = vpop.f32.mrf.mxu0
        %1777 = vmatprep.mubr.bf16.mxu0 0
        %1778 = vmatmul.mubr.bf16.gmra.mxu0 %v1735
        %v1779 = vpop.f32.mrf.mxu0
        %v1780 = vadd.f32 0.0, %v1779
        %v1781 = vpop.f32.mrf.mxu0
        %v1782 = vpop.f32.mrf.mxu0
        %v1783 = vadd.f32 0.0, %v1782
        %v1784 = vpop.f32.mrf.mxu0
        %1785 = vdwg.mxu0
        %1790 = vrot.lane.b32.xlu0 %v1772, 32
        %v1791 = vpop.permute.xlu0 %1790
        %1792 = vrot.lane.b32.xlu0 %v1775, 32
        %v1793 = vpop.permute.xlu0 %1792
        %1794 = vrot.lane.b32.xlu0 %v1780, 32
        %v1795 = vpop.permute.xlu0 %1794
        %1796 = vrot.lane.b32.xlu0 %v1783, 32
        %v1797 = vpop.permute.xlu0 %1796
        %vm1802 = vcmask 523520
        %1803 = vst.msk [vmem:[#allocation3] sm:$0xff] %vm1802, %v1791
        %1804 = vst.msk [vmem:[#allocation3 + $0x8] sm:$0xff] %vm1802, %v1793
        %1805 = vst.msk [vmem:[#allocation3 + $0x10] sm:$0xff] %vm1802, %v1795
        %1806 = vst.msk [vmem:[#allocation3 + $0x18] sm:$0xff] %vm1802, %v1797
        %1807 = vrot.lane.b32.xlu0 %v1423, 64
        %v1808 = vpop.permute.xlu0 %1807
        %1809 = vrot.lane.b32.xlu0 %v1424, 64
        %v1810 = vpop.permute.xlu0 %1809
        %1811 = vrot.lane.b32.xlu0 %v1425, 64
        %v1812 = vpop.permute.xlu0 %1811
        %1813 = vrot.lane.b32.xlu0 %v1426, 64
        %v1814 = vpop.permute.xlu0 %1813
        %v1816 = vsel %vm1427, %v1808, 0
        %v1819 = vsel %vm1427, %v1810, 0
        %v1822 = vsel %vm1427, %v1812, 0
        %v1825 = vsel %vm1427, %v1814, 0
        %1827 = vmatprep.subr.bf16.mxu0 0
        %1828 = vmatpush1.bf16.xpose.msra.mxu0 0
        %1829 = vmatprep.subr.bf16.mxu0 0
        %1830 = vmatpush1.bf16.xpose.msra.mxu0 0
        %1831 = vmatprep.subr.bf16.mxu0 0
        %1832 = vmatpush1.bf16.xpose.msra.mxu0 0
        %1833 = vmatprep.subr.bf16.mxu0 0
        %1834 = vmatpush1.bf16.xpose.msra.mxu0 0
        %1835 = vmatprep.subr.bf16.mxu0 0
        %1836 = vmatpush1.bf16.xpose.msra.mxu0 0
        %1837 = vmatprep.subr.bf16.mxu0 0
        %1838 = vmatpush1.bf16.xpose.msra.mxu0 0
        %1839 = vmatprep.subr.bf16.mxu0 0
        %1840 = vmatpush1.bf16.xpose.msra.mxu0 %v1825
        %1841 = vmatprep.subr.bf16.mxu0 0
        %1842 = vmatpush1.bf16.xpose.msra.mxu0 %v1822
        %1843 = vmatprep.subr.bf16.mxu0 0
        %1844 = vmatpush2.bf16.xpose.msra.mxu0 0
        %1845 = vmatprep.subr.bf16.mxu0 0
        %1846 = vmatpush2.bf16.xpose.msra.mxu0 0
        %1847 = vmatprep.subr.bf16.mxu0 0
        %1848 = vmatpush2.bf16.xpose.msra.mxu0 0
        %1849 = vmatprep.subr.bf16.mxu0 0
        %1850 = vmatpush2.bf16.xpose.msra.mxu0 0
        %1851 = vmatprep.subr.bf16.mxu0 0
        %1852 = vmatpush2.bf16.xpose.msra.mxu0 0
        %1853 = vmatprep.subr.bf16.mxu0 0
        %1854 = vmatpush2.bf16.xpose.msra.mxu0 0
        %1855 = vmatprep.subr.bf16.mxu0 0
        %1856 = vmatpush2.bf16.xpose.msra.mxu0 0
        %1857 = vmatprep.subr.bf16.mxu0 0
        %1858 = vmatpush2.bf16.xpose.msra.mxu0 0
        %1859 = vmatprep.mubr.bf16.mxu0 0
        %1860 = vmatmul.mubr.bf16.gmra.mxu0 %v1816
        %v1861 = vpop.f32.mrf.mxu0
        %v1862 = vadd.f32 0.0, %v1861
        %v1863 = vpop.f32.mrf.mxu0
        %v1864 = vpop.f32.mrf.mxu0
        %v1865 = vadd.f32 0.0, %v1864
        %v1866 = vpop.f32.mrf.mxu0
        %1867 = vmatprep.mubr.bf16.mxu0 0
        %1868 = vmatmul.mubr.bf16.gmra.mxu0 %v1819
        %v1869 = vpop.f32.mrf.mxu0
        %v1870 = vadd.f32 0.0, %v1869
        %v1871 = vpop.f32.mrf.mxu0
        %v1872 = vpop.f32.mrf.mxu0
        %v1873 = vadd.f32 0.0, %v1872
        %v1874 = vpop.f32.mrf.mxu0
        %1875 = vdwg.mxu0
        %v1876 = vmul.f32 %v1862, 0.17677669
        %v1877 = vmul.f32 %v1865, 0.17677669
        %v1878 = vmul.f32 %v1870, 0.17677669
        %v1879 = vmul.f32 %v1873, 0.17677669
        %v1880 = vsel %vm1427, %v1876, -inf
        %1881 = vmax.xlane.f32.xlu0 %v1880
        %v1882 = vpop.xlane.xlu0 %1881
        %v1883 = vsel %vm1427, %v1877, -inf
        %1884 = vmax.xlane.f32.xlu0 %v1883
        %v1885 = vpop.xlane.xlu0 %1884
        %v1886 = vsel %vm1427, %v1878, -inf
        %1887 = vmax.xlane.f32.xlu0 %v1886
        %v1888 = vpop.xlane.xlu0 %1887
        %v1889 = vsel %vm1427, %v1879, -inf
        %1890 = vmax.xlane.f32.xlu0 %v1889
        %v1891 = vpop.xlane.xlu0 %1890
        %v1892 = vsub.f32 %v1876, %v1882
        %v1893 = vsub.f32 %v1877, %v1885
        %v1894 = vsub.f32 %v1878, %v1888
        %v1895 = vsub.f32 %v1879, %v1891
        %v1896 = vmul.f32 %v1892, 1.442695
        %v1897 = vpow.pop %v1896
        %v1898 = vmul.f32 %v1893, 1.442695
        %v1899 = vpow.pop %v1898
        %v1900 = vmul.f32 %v1894, 1.442695
        %v1901 = vpow.pop %v1900
        %v1902 = vmul.f32 %v1895, 1.442695
        %v1903 = vpow.pop %v1902
        %v1904 = vsel %vm1427, %v1897, 0.0
        %1905 = vadd.xlane.f32.xlu0 %v1904
        %v1906 = vpop.xlane.xlu0 %1905
        %v1907 = vsel %vm1427, %v1899, 0.0
        %1908 = vadd.xlane.f32.xlu0 %v1907
        %v1909 = vpop.xlane.xlu0 %1908
        %v1910 = vsel %vm1427, %v1901, 0.0
        %1911 = vadd.xlane.f32.xlu0 %v1910
        %v1912 = vpop.xlane.xlu0 %1911
        %v1913 = vsel %vm1427, %v1903, 0.0
        %1914 = vadd.xlane.f32.xlu0 %v1913
        %v1915 = vpop.xlane.xlu0 %1914
        %v1916 = vrcp.pop %v1906
        %v1917 = vrcp.pop %v1909
        %v1918 = vrcp.pop %v1912
        %v1919 = vrcp.pop %v1915
        %v1920 = vmul.f32 %v1897, %v1916
        %v1921 = vmul.f32 %v1899, %v1917
        %v1922 = vmul.f32 %v1901, %v1918
        %v1923 = vmul.f32 %v1903, %v1919
        %v1924 = vpack.c.bf16 %v1921, %v1920
        %v1925 = vpack.c.bf16 %v1923, %v1922
        %1926 = vrot.lane.b32.xlu0 %v1539, 64
        %v1927 = vpop.permute.xlu0 %1926
        %1928 = vrot.lane.b32.xlu0 %v1540, 64
        %v1929 = vpop.permute.xlu0 %1928
        %v1933 = vsel %vm1427, %v1924, 0
        %v1936 = vsel %vm1427, %v1925, 0
        %1938 = vmatprep.subr.bf16.mxu0 0
        %1939 = vmatpush1.bf16.msra.mxu0 0
        %1940 = vmatprep.subr.bf16.mxu0 0
        %1941 = vmatpush1.bf16.msra.mxu0 0
        %1942 = vmatprep.subr.bf16.mxu0 0
        %1943 = vmatpush1.bf16.msra.mxu0 0
        %1944 = vmatprep.subr.bf16.mxu0 0
        %1945 = vmatpush1.bf16.msra.mxu0 0
        %1946 = vmatprep.subr.bf16.mxu0 0
        %1947 = vmatpush1.bf16.msra.mxu0 0
        %1948 = vmatprep.subr.bf16.mxu0 0
        %1949 = vmatpush1.bf16.msra.mxu0 0
        %1950 = vmatprep.subr.bf16.mxu0 0
        %1951 = vmatpush1.bf16.msra.mxu0 %v1929
        %1952 = vmatprep.subr.bf16.mxu0 0
        %1953 = vmatpush1.bf16.msra.mxu0 %v1927
        %1954 = vmatprep.subr.bf16.mxu0 0
        %1955 = vmatpush2.bf16.msra.mxu0 0
        %1956 = vmatprep.subr.bf16.mxu0 0
        %1957 = vmatpush2.bf16.msra.mxu0 0
        %1958 = vmatprep.subr.bf16.mxu0 0
        %1959 = vmatpush2.bf16.msra.mxu0 0
        %1960 = vmatprep.subr.bf16.mxu0 0
        %1961 = vmatpush2.bf16.msra.mxu0 0
        %1962 = vmatprep.subr.bf16.mxu0 0
        %1963 = vmatpush2.bf16.msra.mxu0 0
        %1964 = vmatprep.subr.bf16.mxu0 0
        %1965 = vmatpush2.bf16.msra.mxu0 0
        %1966 = vmatprep.subr.bf16.mxu0 0
        %1967 = vmatpush2.bf16.msra.mxu0 0
        %1968 = vmatprep.subr.bf16.mxu0 0
        %1969 = vmatpush2.bf16.msra.mxu0 0
        %1970 = vmatprep.mubr.bf16.mxu0 0
        %1971 = vmatmul.mubr.bf16.gmra.mxu0 %v1933
        %v1972 = vpop.f32.mrf.mxu0
        %v1973 = vadd.f32 0.0, %v1972
        %v1974 = vpop.f32.mrf.mxu0
        %v1975 = vpop.f32.mrf.mxu0
        %v1976 = vadd.f32 0.0, %v1975
        %v1977 = vpop.f32.mrf.mxu0
        %1978 = vmatprep.mubr.bf16.mxu0 0
        %1979 = vmatmul.mubr.bf16.gmra.mxu0 %v1936
        %v1980 = vpop.f32.mrf.mxu0
        %v1981 = vadd.f32 0.0, %v1980
        %v1982 = vpop.f32.mrf.mxu0
        %v1983 = vpop.f32.mrf.mxu0
        %v1984 = vadd.f32 0.0, %v1983
        %v1985 = vpop.f32.mrf.mxu0
        %1986 = vdwg.mxu0
        %1991 = vrot.lane.b32.xlu0 %v1973, 64
        %v1992 = vpop.permute.xlu0 %1991
        %1993 = vrot.lane.b32.xlu0 %v1976, 64
        %v1994 = vpop.permute.xlu0 %1993
        %1995 = vrot.lane.b32.xlu0 %v1981, 64
        %v1996 = vpop.permute.xlu0 %1995
        %1997 = vrot.lane.b32.xlu0 %v1984, 64
        %v1998 = vpop.permute.xlu0 %1997
        %vm2003 = vcmask 785920
        %2004 = vst.msk [vmem:[#allocation3] sm:$0xff] %vm2003, %v1992
        %2005 = vst.msk [vmem:[#allocation3 + $0x8] sm:$0xff] %vm2003, %v1994
        %2006 = vst.msk [vmem:[#allocation3 + $0x10] sm:$0xff] %vm2003, %v1996
        %2007 = vst.msk [vmem:[#allocation3 + $0x18] sm:$0xff] %vm2003, %v1998
        %2008 = vrot.lane.b32.xlu0 %v1423, 32
        %v2009 = vpop.permute.xlu0 %2008
        %2010 = vrot.lane.b32.xlu0 %v1424, 32
        %v2011 = vpop.permute.xlu0 %2010
        %2012 = vrot.lane.b32.xlu0 %v1425, 32
        %v2013 = vpop.permute.xlu0 %2012
        %2014 = vrot.lane.b32.xlu0 %v1426, 32
        %v2015 = vpop.permute.xlu0 %2014
        %v2017 = vsel %vm1427, %v2009, 0
        %v2020 = vsel %vm1427, %v2011, 0
        %v2023 = vsel %vm1427, %v2013, 0
        %v2026 = vsel %vm1427, %v2015, 0
        %2028 = vmatprep.subr.bf16.mxu0 0
        %2029 = vmatpush1.bf16.xpose.msra.mxu0 0
        %2030 = vmatprep.subr.bf16.mxu0 0
        %2031 = vmatpush1.bf16.xpose.msra.mxu0 0
        %2032 = vmatprep.subr.bf16.mxu0 0
        %2033 = vmatpush1.bf16.xpose.msra.mxu0 0
        %2034 = vmatprep.subr.bf16.mxu0 0
        %2035 = vmatpush1.bf16.xpose.msra.mxu0 0
        %2036 = vmatprep.subr.bf16.mxu0 0
        %2037 = vmatpush1.bf16.xpose.msra.mxu0 0
        %2038 = vmatprep.subr.bf16.mxu0 0
        %2039 = vmatpush1.bf16.xpose.msra.mxu0 0
        %2040 = vmatprep.subr.bf16.mxu0 0
        %2041 = vmatpush1.bf16.xpose.msra.mxu0 %v2026
        %2042 = vmatprep.subr.bf16.mxu0 0
        %2043 = vmatpush1.bf16.xpose.msra.mxu0 %v2023
        %2044 = vmatprep.subr.bf16.mxu0 0
        %2045 = vmatpush2.bf16.xpose.msra.mxu0 0
        %2046 = vmatprep.subr.bf16.mxu0 0
        %2047 = vmatpush2.bf16.xpose.msra.mxu0 0
        %2048 = vmatprep.subr.bf16.mxu0 0
        %2049 = vmatpush2.bf16.xpose.msra.mxu0 0
        %2050 = vmatprep.subr.bf16.mxu0 0
        %2051 = vmatpush2.bf16.xpose.msra.mxu0 0
        %2052 = vmatprep.subr.bf16.mxu0 0
        %2053 = vmatpush2.bf16.xpose.msra.mxu0 0
        %2054 = vmatprep.subr.bf16.mxu0 0
        %2055 = vmatpush2.bf16.xpose.msra.mxu0 0
        %2056 = vmatprep.subr.bf16.mxu0 0
        %2057 = vmatpush2.bf16.xpose.msra.mxu0 0
        %2058 = vmatprep.subr.bf16.mxu0 0
        %2059 = vmatpush2.bf16.xpose.msra.mxu0 0
        %2060 = vmatprep.mubr.bf16.mxu0 0
        %2061 = vmatmul.mubr.bf16.gmra.mxu0 %v2017
        %v2062 = vpop.f32.mrf.mxu0
        %v2063 = vadd.f32 0.0, %v2062
        %v2064 = vpop.f32.mrf.mxu0
        %v2065 = vpop.f32.mrf.mxu0
        %v2066 = vadd.f32 0.0, %v2065
        %v2067 = vpop.f32.mrf.mxu0
        %2068 = vmatprep.mubr.bf16.mxu0 0
        %2069 = vmatmul.mubr.bf16.gmra.mxu0 %v2020
        %v2070 = vpop.f32.mrf.mxu0
        %v2071 = vadd.f32 0.0, %v2070
        %v2072 = vpop.f32.mrf.mxu0
        %v2073 = vpop.f32.mrf.mxu0
        %v2074 = vadd.f32 0.0, %v2073
        %v2075 = vpop.f32.mrf.mxu0
        %2076 = vdwg.mxu0
        %v2077 = vmul.f32 %v2063, 0.17677669
        %v2078 = vmul.f32 %v2066, 0.17677669
        %v2079 = vmul.f32 %v2071, 0.17677669
        %v2080 = vmul.f32 %v2074, 0.17677669
        %v2081 = vsel %vm1427, %v2077, -inf
        %2082 = vmax.xlane.f32.xlu0 %v2081
        %v2083 = vpop.xlane.xlu0 %2082
        %v2084 = vsel %vm1427, %v2078, -inf
        %2085 = vmax.xlane.f32.xlu0 %v2084
        %v2086 = vpop.xlane.xlu0 %2085
        %v2087 = vsel %vm1427, %v2079, -inf
        %2088 = vmax.xlane.f32.xlu0 %v2087
        %v2089 = vpop.xlane.xlu0 %2088
        %v2090 = vsel %vm1427, %v2080, -inf
        %2091 = vmax.xlane.f32.xlu0 %v2090
        %v2092 = vpop.xlane.xlu0 %2091
        %v2093 = vsub.f32 %v2077, %v2083
        %v2094 = vsub.f32 %v2078, %v2086
        %v2095 = vsub.f32 %v2079, %v2089
        %v2096 = vsub.f32 %v2080, %v2092
        %v2097 = vmul.f32 %v2093, 1.442695
        %v2098 = vpow.pop %v2097
        %v2099 = vmul.f32 %v2094, 1.442695
        %v2100 = vpow.pop %v2099
        %v2101 = vmul.f32 %v2095, 1.442695
        %v2102 = vpow.pop %v2101
        %v2103 = vmul.f32 %v2096, 1.442695
        %v2104 = vpow.pop %v2103
        %v2105 = vsel %vm1427, %v2098, 0.0
        %2106 = vadd.xlane.f32.xlu0 %v2105
        %v2107 = vpop.xlane.xlu0 %2106
        %v2108 = vsel %vm1427, %v2100, 0.0
        %2109 = vadd.xlane.f32.xlu0 %v2108
        %v2110 = vpop.xlane.xlu0 %2109
        %v2111 = vsel %vm1427, %v2102, 0.0
        %2112 = vadd.xlane.f32.xlu0 %v2111
        %v2113 = vpop.xlane.xlu0 %2112
        %v2114 = vsel %vm1427, %v2104, 0.0
        %2115 = vadd.xlane.f32.xlu0 %v2114
        %v2116 = vpop.xlane.xlu0 %2115
        %v2117 = vrcp.pop %v2107
        %v2118 = vrcp.pop %v2110
        %v2119 = vrcp.pop %v2113
        %v2120 = vrcp.pop %v2116
        %v2121 = vmul.f32 %v2098, %v2117
        %v2122 = vmul.f32 %v2100, %v2118
        %v2123 = vmul.f32 %v2102, %v2119
        %v2124 = vmul.f32 %v2104, %v2120
        %v2125 = vpack.c.bf16 %v2122, %v2121
        %v2126 = vpack.c.bf16 %v2124, %v2123
        %2127 = vrot.lane.b32.xlu0 %v1539, 32
        %v2128 = vpop.permute.xlu0 %2127
        %2129 = vrot.lane.b32.xlu0 %v1540, 32
        %v2130 = vpop.permute.xlu0 %2129
        %v2134 = vsel %vm1427, %v2125, 0
        %v2137 = vsel %vm1427, %v2126, 0
        %2139 = vmatprep.subr.bf16.mxu0 0
        %2140 = vmatpush1.bf16.msra.mxu0 0
        %2141 = vmatprep.subr.bf16.mxu0 0
        %2142 = vmatpush1.bf16.msra.mxu0 0
        %2143 = vmatprep.subr.bf16.mxu0 0
        %2144 = vmatpush1.bf16.msra.mxu0 0
        %2145 = vmatprep.subr.bf16.mxu0 0
        %2146 = vmatpush1.bf16.msra.mxu0 0
        %2147 = vmatprep.subr.bf16.mxu0 0
        %2148 = vmatpush1.bf16.msra.mxu0 0
        %2149 = vmatprep.subr.bf16.mxu0 0
        %2150 = vmatpush1.bf16.msra.mxu0 0
        %2151 = vmatprep.subr.bf16.mxu0 0
        %2152 = vmatpush1.bf16.msra.mxu0 %v2130
        %2153 = vmatprep.subr.bf16.mxu0 0
        %2154 = vmatpush1.bf16.msra.mxu0 %v2128
        %2155 = vmatprep.subr.bf16.mxu0 0
        %2156 = vmatpush2.bf16.msra.mxu0 0
        %2157 = vmatprep.subr.bf16.mxu0 0
        %2158 = vmatpush2.bf16.msra.mxu0 0
        %2159 = vmatprep.subr.bf16.mxu0 0
        %2160 = vmatpush2.bf16.msra.mxu0 0
        %2161 = vmatprep.subr.bf16.mxu0 0
        %2162 = vmatpush2.bf16.msra.mxu0 0
        %2163 = vmatprep.subr.bf16.mxu0 0
        %2164 = vmatpush2.bf16.msra.mxu0 0
        %2165 = vmatprep.subr.bf16.mxu0 0
        %2166 = vmatpush2.bf16.msra.mxu0 0
        %2167 = vmatprep.subr.bf16.mxu0 0
        %2168 = vmatpush2.bf16.msra.mxu0 0
        %2169 = vmatprep.subr.bf16.mxu0 0
        %2170 = vmatpush2.bf16.msra.mxu0 0
        %2171 = vmatprep.mubr.bf16.mxu0 0
        %2172 = vmatmul.mubr.bf16.gmra.mxu0 %v2134
        %v2173 = vpop.f32.mrf.mxu0
        %v2174 = vadd.f32 0.0, %v2173
        %v2175 = vpop.f32.mrf.mxu0
        %v2176 = vpop.f32.mrf.mxu0
        %v2177 = vadd.f32 0.0, %v2176
        %v2178 = vpop.f32.mrf.mxu0
        %2179 = vmatprep.mubr.bf16.mxu0 0
        %2180 = vmatmul.mubr.bf16.gmra.mxu0 %v2137
        %v2181 = vpop.f32.mrf.mxu0
        %v2182 = vadd.f32 0.0, %v2181
        %v2183 = vpop.f32.mrf.mxu0
        %v2184 = vpop.f32.mrf.mxu0
        %v2185 = vadd.f32 0.0, %v2184
        %v2186 = vpop.f32.mrf.mxu0
        %2187 = vdwg.mxu0
        %2192 = vrot.lane.b32.xlu0 %v2174, 96
        %v2193 = vpop.permute.xlu0 %2192
        %2194 = vrot.lane.b32.xlu0 %v2177, 96
        %v2195 = vpop.permute.xlu0 %2194
        %2196 = vrot.lane.b32.xlu0 %v2182, 96
        %v2197 = vpop.permute.xlu0 %2196
        %2198 = vrot.lane.b32.xlu0 %v2185, 96
        %v2199 = vpop.permute.xlu0 %2198
        %vm2204 = vcmask 1048320
        %2205 = vst.msk [vmem:[#allocation3] sm:$0xff] %vm2204, %v2193
        %2206 = vst.msk [vmem:[#allocation3 + $0x8] sm:$0xff] %vm2204, %v2195
        %2207 = vst.msk [vmem:[#allocation3 + $0x10] sm:$0xff] %vm2204, %v2197
        %2208 = vst.msk [vmem:[#allocation3 + $0x18] sm:$0xff] %vm2204, %v2199
        %v2209 = vpack.c.bf16 %v1344, %v1340
        %v2210 = vpack.c.bf16 %v1354, %v1350
        %v2211 = vpack.c.bf16 %v1346, %v1342
        %v2212 = vpack.c.bf16 %v1356, %v1352
        %v2214 = vsel %vm1427, %v2209, 0
        %v2217 = vsel %vm1427, %v2210, 0
        %v2220 = vsel %vm1427, %v2211, 0
        %v2223 = vsel %vm1427, %v2212, 0
        %2225 = vmatprep.subr.bf16.mxu0 0
        %2226 = vmatpush1.bf16.xpose.msra.mxu0 0
        %2227 = vmatprep.subr.bf16.mxu0 0
        %2228 = vmatpush1.bf16.xpose.msra.mxu0 0
        %2229 = vmatprep.subr.bf16.mxu0 0
        %2230 = vmatpush1.bf16.xpose.msra.mxu0 0
        %2231 = vmatprep.subr.bf16.mxu0 0
        %2232 = vmatpush1.bf16.xpose.msra.mxu0 0
        %2233 = vmatprep.subr.bf16.mxu0 0
        %2234 = vmatpush1.bf16.xpose.msra.mxu0 0
        %2235 = vmatprep.subr.bf16.mxu0 0
        %2236 = vmatpush1.bf16.xpose.msra.mxu0 0
        %2237 = vmatprep.subr.bf16.mxu0 0
        %2238 = vmatpush1.bf16.xpose.msra.mxu0 %v2223
        %2239 = vmatprep.subr.bf16.mxu0 0
        %2240 = vmatpush1.bf16.xpose.msra.mxu0 %v2220
        %2241 = vmatprep.subr.bf16.mxu0 0
        %2242 = vmatpush2.bf16.xpose.msra.mxu0 0
        %2243 = vmatprep.subr.bf16.mxu0 0
        %2244 = vmatpush2.bf16.xpose.msra.mxu0 0
        %2245 = vmatprep.subr.bf16.mxu0 0
        %2246 = vmatpush2.bf16.xpose.msra.mxu0 0
        %2247 = vmatprep.subr.bf16.mxu0 0
        %2248 = vmatpush2.bf16.xpose.msra.mxu0 0
        %2249 = vmatprep.subr.bf16.mxu0 0
        %2250 = vmatpush2.bf16.xpose.msra.mxu0 0
        %2251 = vmatprep.subr.bf16.mxu0 0
        %2252 = vmatpush2.bf16.xpose.msra.mxu0 0
        %2253 = vmatprep.subr.bf16.mxu0 0
        %2254 = vmatpush2.bf16.xpose.msra.mxu0 0
        %2255 = vmatprep.subr.bf16.mxu0 0
        %2256 = vmatpush2.bf16.xpose.msra.mxu0 0
        %2257 = vmatprep.mubr.bf16.mxu0 0
        %2258 = vmatmul.mubr.bf16.gmra.mxu0 %v2214
        %v2259 = vpop.f32.mrf.mxu0
        %v2260 = vadd.f32 0.0, %v2259
        %v2261 = vpop.f32.mrf.mxu0
        %v2262 = vpop.f32.mrf.mxu0
        %v2263 = vadd.f32 0.0, %v2262
        %v2264 = vpop.f32.mrf.mxu0
        %2265 = vmatprep.mubr.bf16.mxu0 0
        %2266 = vmatmul.mubr.bf16.gmra.mxu0 %v2217
        %v2267 = vpop.f32.mrf.mxu0
        %v2268 = vadd.f32 0.0, %v2267
        %v2269 = vpop.f32.mrf.mxu0
        %v2270 = vpop.f32.mrf.mxu0
        %v2271 = vadd.f32 0.0, %v2270
        %v2272 = vpop.f32.mrf.mxu0
        %2273 = vdwg.mxu0
        %v2274 = vmul.f32 %v2260, 0.17677669
        %v2275 = vmul.f32 %v2263, 0.17677669
        %v2276 = vmul.f32 %v2268, 0.17677669
        %v2277 = vmul.f32 %v2271, 0.17677669
        %v2278 = vsel %vm1427, %v2274, -inf
        %2279 = vmax.xlane.f32.xlu0 %v2278
        %v2280 = vpop.xlane.xlu0 %2279
        %v2281 = vsel %vm1427, %v2275, -inf
        %2282 = vmax.xlane.f32.xlu0 %v2281
        %v2283 = vpop.xlane.xlu0 %2282
        %v2284 = vsel %vm1427, %v2276, -inf
        %2285 = vmax.xlane.f32.xlu0 %v2284
        %v2286 = vpop.xlane.xlu0 %2285
        %v2287 = vsel %vm1427, %v2277, -inf
        %2288 = vmax.xlane.f32.xlu0 %v2287
        %v2289 = vpop.xlane.xlu0 %2288
        %v2290 = vsub.f32 %v2274, %v2280
        %v2291 = vsub.f32 %v2275, %v2283
        %v2292 = vsub.f32 %v2276, %v2286
        %v2293 = vsub.f32 %v2277, %v2289
        %v2294 = vmul.f32 %v2290, 1.442695
        %v2295 = vpow.pop %v2294
        %v2296 = vmul.f32 %v2291, 1.442695
        %v2297 = vpow.pop %v2296
        %v2298 = vmul.f32 %v2292, 1.442695
        %v2299 = vpow.pop %v2298
        %v2300 = vmul.f32 %v2293, 1.442695
        %v2301 = vpow.pop %v2300
        %v2302 = vsel %vm1427, %v2295, 0.0
        %2303 = vadd.xlane.f32.xlu0 %v2302
        %v2304 = vpop.xlane.xlu0 %2303
        %v2305 = vsel %vm1427, %v2297, 0.0
        %2306 = vadd.xlane.f32.xlu0 %v2305
        %v2307 = vpop.xlane.xlu0 %2306
        %v2308 = vsel %vm1427, %v2299, 0.0
        %2309 = vadd.xlane.f32.xlu0 %v2308
        %v2310 = vpop.xlane.xlu0 %2309
        %v2311 = vsel %vm1427, %v2301, 0.0
        %2312 = vadd.xlane.f32.xlu0 %v2311
        %v2313 = vpop.xlane.xlu0 %2312
        %v2314 = vrcp.pop %v2304
        %v2315 = vrcp.pop %v2307
        %v2316 = vrcp.pop %v2310
        %v2317 = vrcp.pop %v2313
        %v2318 = vmul.f32 %v2295, %v2314
        %v2319 = vmul.f32 %v2297, %v2315
        %v2320 = vmul.f32 %v2299, %v2316
        %v2321 = vmul.f32 %v2301, %v2317
        %v2322 = vpack.c.bf16 %v2319, %v2318
        %v2323 = vpack.c.bf16 %v2321, %v2320
        %v2324 = vpack.c.bf16 %v1412, %v1409
        %v2325 = vpack.c.bf16 %v1420, %v1417
        %v2327 = vsel %vm1427, %v2322, 0
        %v2330 = vsel %vm1427, %v2323, 0
        %2332 = vmatprep.subr.bf16.mxu0 0
        %2333 = vmatpush1.bf16.msra.mxu0 0
        %2334 = vmatprep.subr.bf16.mxu0 0
        %2335 = vmatpush1.bf16.msra.mxu0 0
        %2336 = vmatprep.subr.bf16.mxu0 0
        %2337 = vmatpush1.bf16.msra.mxu0 0
        %2338 = vmatprep.subr.bf16.mxu0 0
        %2339 = vmatpush1.bf16.msra.mxu0 0
        %2340 = vmatprep.subr.bf16.mxu0 0
        %2341 = vmatpush1.bf16.msra.mxu0 0
        %2342 = vmatprep.subr.bf16.mxu0 0
        %2343 = vmatpush1.bf16.msra.mxu0 0
        %2344 = vmatprep.subr.bf16.mxu0 0
        %2345 = vmatpush1.bf16.msra.mxu0 %v2325
        %2346 = vmatprep.subr.bf16.mxu0 0
        %2347 = vmatpush1.bf16.msra.mxu0 %v2324
        %2348 = vmatprep.subr.bf16.mxu0 0
        %2349 = vmatpush2.bf16.msra.mxu0 0
        %2350 = vmatprep.subr.bf16.mxu0 0
        %2351 = vmatpush2.bf16.msra.mxu0 0
        %2352 = vmatprep.subr.bf16.mxu0 0
        %2353 = vmatpush2.bf16.msra.mxu0 0
        %2354 = vmatprep.subr.bf16.mxu0 0
        %2355 = vmatpush2.bf16.msra.mxu0 0
        %2356 = vmatprep.subr.bf16.mxu0 0
        %2357 = vmatpush2.bf16.msra.mxu0 0
        %2358 = vmatprep.subr.bf16.mxu0 0
        %2359 = vmatpush2.bf16.msra.mxu0 0
        %2360 = vmatprep.subr.bf16.mxu0 0
        %2361 = vmatpush2.bf16.msra.mxu0 0
        %2362 = vmatprep.subr.bf16.mxu0 0
        %2363 = vmatpush2.bf16.msra.mxu0 0
        %2364 = vmatprep.mubr.bf16.mxu0 0
        %2365 = vmatmul.mubr.bf16.gmra.mxu0 %v2327
        %v2366 = vpop.f32.mrf.mxu0
        %v2367 = vadd.f32 0.0, %v2366
        %v2368 = vpop.f32.mrf.mxu0
        %v2369 = vpop.f32.mrf.mxu0
        %v2370 = vadd.f32 0.0, %v2369
        %v2371 = vpop.f32.mrf.mxu0
        %2372 = vmatprep.mubr.bf16.mxu0 0
        %2373 = vmatmul.mubr.bf16.gmra.mxu0 %v2330
        %v2374 = vpop.f32.mrf.mxu0
        %v2375 = vadd.f32 0.0, %v2374
        %v2376 = vpop.f32.mrf.mxu0
        %v2377 = vpop.f32.mrf.mxu0
        %v2378 = vadd.f32 0.0, %v2377
        %v2379 = vpop.f32.mrf.mxu0
        %2380 = vdwg.mxu0
        %2381 = vst.msk [vmem:[#allocation3 + $0x20] sm:$0xff] %vm1427, %v2367
        %2382 = vst.msk [vmem:[#allocation3 + $0x28] sm:$0xff] %vm1427, %v2370
        %2383 = vst.msk [vmem:[#allocation3 + $0x30] sm:$0xff] %vm1427, %v2375
        %2384 = vst.msk [vmem:[#allocation3 + $0x38] sm:$0xff] %vm1427, %v2378
        %2387 = vrot.lane.b32.xlu0 %v2209, 96
        %v2388 = vpop.permute.xlu0 %2387
        %2389 = vrot.lane.b32.xlu0 %v2210, 96
        %v2390 = vpop.permute.xlu0 %2389
        %2393 = vrot.lane.b32.xlu0 %v2211, 96
        %v2394 = vpop.permute.xlu0 %2393
        %2395 = vrot.lane.b32.xlu0 %v2212, 96
        %v2396 = vpop.permute.xlu0 %2395
        %v2398 = vsel %vm1427, %v2388, 0
        %v2401 = vsel %vm1427, %v2390, 0
        %v2404 = vsel %vm1427, %v2394, 0
        %v2407 = vsel %vm1427, %v2396, 0
        %2409 = vmatprep.subr.bf16.mxu0 0
        %2410 = vmatpush1.bf16.xpose.msra.mxu0 0
        %2411 = vmatprep.subr.bf16.mxu0 0
        %2412 = vmatpush1.bf16.xpose.msra.mxu0 0
        %2413 = vmatprep.subr.bf16.mxu0 0
        %2414 = vmatpush1.bf16.xpose.msra.mxu0 0
        %2415 = vmatprep.subr.bf16.mxu0 0
        %2416 = vmatpush1.bf16.xpose.msra.mxu0 0
        %2417 = vmatprep.subr.bf16.mxu0 0
        %2418 = vmatpush1.bf16.xpose.msra.mxu0 0
        %2419 = vmatprep.subr.bf16.mxu0 0
        %2420 = vmatpush1.bf16.xpose.msra.mxu0 0
        %2421 = vmatprep.subr.bf16.mxu0 0
        %2422 = vmatpush1.bf16.xpose.msra.mxu0 %v2407
        %2423 = vmatprep.subr.bf16.mxu0 0
        %2424 = vmatpush1.bf16.xpose.msra.mxu0 %v2404
        %2425 = vmatprep.subr.bf16.mxu0 0
        %2426 = vmatpush2.bf16.xpose.msra.mxu0 0
        %2427 = vmatprep.subr.bf16.mxu0 0
        %2428 = vmatpush2.bf16.xpose.msra.mxu0 0
        %2429 = vmatprep.subr.bf16.mxu0 0
        %2430 = vmatpush2.bf16.xpose.msra.mxu0 0
        %2431 = vmatprep.subr.bf16.mxu0 0
        %2432 = vmatpush2.bf16.xpose.msra.mxu0 0
        %2433 = vmatprep.subr.bf16.mxu0 0
        %2434 = vmatpush2.bf16.xpose.msra.mxu0 0
        %2435 = vmatprep.subr.bf16.mxu0 0
        %2436 = vmatpush2.bf16.xpose.msra.mxu0 0
        %2437 = vmatprep.subr.bf16.mxu0 0
        %2438 = vmatpush2.bf16.xpose.msra.mxu0 0
        %2439 = vmatprep.subr.bf16.mxu0 0
        %2440 = vmatpush2.bf16.xpose.msra.mxu0 0
        %2441 = vmatprep.mubr.bf16.mxu0 0
        %2442 = vmatmul.mubr.bf16.gmra.mxu0 %v2398
        %v2443 = vpop.f32.mrf.mxu0
        %v2444 = vadd.f32 0.0, %v2443
        %v2445 = vpop.f32.mrf.mxu0
        %v2446 = vpop.f32.mrf.mxu0
        %v2447 = vadd.f32 0.0, %v2446
        %v2448 = vpop.f32.mrf.mxu0
        %2449 = vmatprep.mubr.bf16.mxu0 0
        %2450 = vmatmul.mubr.bf16.gmra.mxu0 %v2401
        %v2451 = vpop.f32.mrf.mxu0
        %v2452 = vadd.f32 0.0, %v2451
        %v2453 = vpop.f32.mrf.mxu0
        %v2454 = vpop.f32.mrf.mxu0
        %v2455 = vadd.f32 0.0, %v2454
        %v2456 = vpop.f32.mrf.mxu0
        %2457 = vdwg.mxu0
        %v2458 = vmul.f32 %v2444, 0.17677669
        %v2459 = vmul.f32 %v2447, 0.17677669
        %v2460 = vmul.f32 %v2452, 0.17677669
        %v2461 = vmul.f32 %v2455, 0.17677669
        %v2462 = vsel %vm1427, %v2458, -inf
        %2463 = vmax.xlane.f32.xlu0 %v2462
        %v2464 = vpop.xlane.xlu0 %2463
        %v2465 = vsel %vm1427, %v2459, -inf
        %2466 = vmax.xlane.f32.xlu0 %v2465
        %v2467 = vpop.xlane.xlu0 %2466
        %v2468 = vsel %vm1427, %v2460, -inf
        %2469 = vmax.xlane.f32.xlu0 %v2468
        %v2470 = vpop.xlane.xlu0 %2469
        %v2471 = vsel %vm1427, %v2461, -inf
        %2472 = vmax.xlane.f32.xlu0 %v2471
        %v2473 = vpop.xlane.xlu0 %2472
        %v2474 = vsub.f32 %v2458, %v2464
        %v2475 = vsub.f32 %v2459, %v2467
        %v2476 = vsub.f32 %v2460, %v2470
        %v2477 = vsub.f32 %v2461, %v2473
        %v2478 = vmul.f32 %v2474, 1.442695
        %v2479 = vpow.pop %v2478
        %v2480 = vmul.f32 %v2475, 1.442695
        %v2481 = vpow.pop %v2480
        %v2482 = vmul.f32 %v2476, 1.442695
        %v2483 = vpow.pop %v2482
        %v2484 = vmul.f32 %v2477, 1.442695
        %v2485 = vpow.pop %v2484
        %v2486 = vsel %vm1427, %v2479, 0.0
        %2487 = vadd.xlane.f32.xlu0 %v2486
        %v2488 = vpop.xlane.xlu0 %2487
        %v2489 = vsel %vm1427, %v2481, 0.0
        %2490 = vadd.xlane.f32.xlu0 %v2489
        %v2491 = vpop.xlane.xlu0 %2490
        %v2492 = vsel %vm1427, %v2483, 0.0
        %2493 = vadd.xlane.f32.xlu0 %v2492
        %v2494 = vpop.xlane.xlu0 %2493
        %v2495 = vsel %vm1427, %v2485, 0.0
        %2496 = vadd.xlane.f32.xlu0 %v2495
        %v2497 = vpop.xlane.xlu0 %2496
        %v2498 = vrcp.pop %v2488
        %v2499 = vrcp.pop %v2491
        %v2500 = vrcp.pop %v2494
        %v2501 = vrcp.pop %v2497
        %v2502 = vmul.f32 %v2479, %v2498
        %v2503 = vmul.f32 %v2481, %v2499
        %v2504 = vmul.f32 %v2483, %v2500
        %v2505 = vmul.f32 %v2485, %v2501
        %v2506 = vpack.c.bf16 %v2503, %v2502
        %v2507 = vpack.c.bf16 %v2505, %v2504
        %2510 = vrot.lane.b32.xlu0 %v2324, 96
        %v2511 = vpop.permute.xlu0 %2510
        %2512 = vrot.lane.b32.xlu0 %v2325, 96
        %v2513 = vpop.permute.xlu0 %2512
        %v2517 = vsel %vm1427, %v2506, 0
        %v2520 = vsel %vm1427, %v2507, 0
        %2522 = vmatprep.subr.bf16.mxu0 0
        %2523 = vmatpush1.bf16.msra.mxu0 0
        %2524 = vmatprep.subr.bf16.mxu0 0
        %2525 = vmatpush1.bf16.msra.mxu0 0
        %2526 = vmatprep.subr.bf16.mxu0 0
        %2527 = vmatpush1.bf16.msra.mxu0 0
        %2528 = vmatprep.subr.bf16.mxu0 0
        %2529 = vmatpush1.bf16.msra.mxu0 0
        %2530 = vmatprep.subr.bf16.mxu0 0
        %2531 = vmatpush1.bf16.msra.mxu0 0
        %2532 = vmatprep.subr.bf16.mxu0 0
        %2533 = vmatpush1.bf16.msra.mxu0 0
        %2534 = vmatprep.subr.bf16.mxu0 0
        %2535 = vmatpush1.bf16.msra.mxu0 %v2513
        %2536 = vmatprep.subr.bf16.mxu0 0
        %2537 = vmatpush1.bf16.msra.mxu0 %v2511
        %2538 = vmatprep.subr.bf16.mxu0 0
        %2539 = vmatpush2.bf16.msra.mxu0 0
        %2540 = vmatprep.subr.bf16.mxu0 0
        %2541 = vmatpush2.bf16.msra.mxu0 0
        %2542 = vmatprep.subr.bf16.mxu0 0
        %2543 = vmatpush2.bf16.msra.mxu0 0
        %2544 = vmatprep.subr.bf16.mxu0 0
        %2545 = vmatpush2.bf16.msra.mxu0 0
        %2546 = vmatprep.subr.bf16.mxu0 0
        %2547 = vmatpush2.bf16.msra.mxu0 0
        %2548 = vmatprep.subr.bf16.mxu0 0
        %2549 = vmatpush2.bf16.msra.mxu0 0
        %2550 = vmatprep.subr.bf16.mxu0 0
        %2551 = vmatpush2.bf16.msra.mxu0 0
        %2552 = vmatprep.subr.bf16.mxu0 0
        %2553 = vmatpush2.bf16.msra.mxu0 0
        %2554 = vmatprep.mubr.bf16.mxu0 0
        %2555 = vmatmul.mubr.bf16.gmra.mxu0 %v2517
        %v2556 = vpop.f32.mrf.mxu0
        %v2557 = vadd.f32 0.0, %v2556
        %v2558 = vpop.f32.mrf.mxu0
        %v2559 = vpop.f32.mrf.mxu0
        %v2560 = vadd.f32 0.0, %v2559
        %v2561 = vpop.f32.mrf.mxu0
        %2562 = vmatprep.mubr.bf16.mxu0 0
        %2563 = vmatmul.mubr.bf16.gmra.mxu0 %v2520
        %v2564 = vpop.f32.mrf.mxu0
        %v2565 = vadd.f32 0.0, %v2564
        %v2566 = vpop.f32.mrf.mxu0
        %v2567 = vpop.f32.mrf.mxu0
        %v2568 = vadd.f32 0.0, %v2567
        %v2569 = vpop.f32.mrf.mxu0
        %2570 = vdwg.mxu0
        %2575 = vrot.lane.b32.xlu0 %v2557, 32
        %v2576 = vpop.permute.xlu0 %2575
        %2577 = vrot.lane.b32.xlu0 %v2560, 32
        %v2578 = vpop.permute.xlu0 %2577
        %2579 = vrot.lane.b32.xlu0 %v2565, 32
        %v2580 = vpop.permute.xlu0 %2579
        %2581 = vrot.lane.b32.xlu0 %v2568, 32
        %v2582 = vpop.permute.xlu0 %2581
        %2587 = vst.msk [vmem:[#allocation3 + $0x20] sm:$0xff] %vm1802, %v2576
        %2588 = vst.msk [vmem:[#allocation3 + $0x28] sm:$0xff] %vm1802, %v2578
        %2589 = vst.msk [vmem:[#allocation3 + $0x30] sm:$0xff] %vm1802, %v2580
        %2590 = vst.msk [vmem:[#allocation3 + $0x38] sm:$0xff] %vm1802, %v2582
        %2591 = vrot.lane.b32.xlu0 %v2209, 64
        %v2592 = vpop.permute.xlu0 %2591
        %2593 = vrot.lane.b32.xlu0 %v2210, 64
        %v2594 = vpop.permute.xlu0 %2593
        %2595 = vrot.lane.b32.xlu0 %v2211, 64
        %v2596 = vpop.permute.xlu0 %2595
        %2597 = vrot.lane.b32.xlu0 %v2212, 64
        %v2598 = vpop.permute.xlu0 %2597
        %v2600 = vsel %vm1427, %v2592, 0
        %v2603 = vsel %vm1427, %v2594, 0
        %v2606 = vsel %vm1427, %v2596, 0
        %v2609 = vsel %vm1427, %v2598, 0
        %2611 = vmatprep.subr.bf16.mxu0 0
        %2612 = vmatpush1.bf16.xpose.msra.mxu0 0
        %2613 = vmatprep.subr.bf16.mxu0 0
        %2614 = vmatpush1.bf16.xpose.msra.mxu0 0
        %2615 = vmatprep.subr.bf16.mxu0 0
        %2616 = vmatpush1.bf16.xpose.msra.mxu0 0
        %2617 = vmatprep.subr.bf16.mxu0 0
        %2618 = vmatpush1.bf16.xpose.msra.mxu0 0
        %2619 = vmatprep.subr.bf16.mxu0 0
        %2620 = vmatpush1.bf16.xpose.msra.mxu0 0
        %2621 = vmatprep.subr.bf16.mxu0 0
        %2622 = vmatpush1.bf16.xpose.msra.mxu0 0
        %2623 = vmatprep.subr.bf16.mxu0 0
        %2624 = vmatpush1.bf16.xpose.msra.mxu0 %v2609
        %2625 = vmatprep.subr.bf16.mxu0 0
        %2626 = vmatpush1.bf16.xpose.msra.mxu0 %v2606
        %2627 = vmatprep.subr.bf16.mxu0 0
        %2628 = vmatpush2.bf16.xpose.msra.mxu0 0
        %2629 = vmatprep.subr.bf16.mxu0 0
        %2630 = vmatpush2.bf16.xpose.msra.mxu0 0
        %2631 = vmatprep.subr.bf16.mxu0 0
        %2632 = vmatpush2.bf16.xpose.msra.mxu0 0
        %2633 = vmatprep.subr.bf16.mxu0 0
        %2634 = vmatpush2.bf16.xpose.msra.mxu0 0
        %2635 = vmatprep.subr.bf16.mxu0 0
        %2636 = vmatpush2.bf16.xpose.msra.mxu0 0
        %2637 = vmatprep.subr.bf16.mxu0 0
        %2638 = vmatpush2.bf16.xpose.msra.mxu0 0
        %2639 = vmatprep.subr.bf16.mxu0 0
        %2640 = vmatpush2.bf16.xpose.msra.mxu0 0
        %2641 = vmatprep.subr.bf16.mxu0 0
        %2642 = vmatpush2.bf16.xpose.msra.mxu0 0
        %2643 = vmatprep.mubr.bf16.mxu0 0
        %2644 = vmatmul.mubr.bf16.gmra.mxu0 %v2600
        %v2645 = vpop.f32.mrf.mxu0
        %v2646 = vadd.f32 0.0, %v2645
        %v2647 = vpop.f32.mrf.mxu0
        %v2648 = vpop.f32.mrf.mxu0
        %v2649 = vadd.f32 0.0, %v2648
        %v2650 = vpop.f32.mrf.mxu0
        %2651 = vmatprep.mubr.bf16.mxu0 0
        %2652 = vmatmul.mubr.bf16.gmra.mxu0 %v2603
        %v2653 = vpop.f32.mrf.mxu0
        %v2654 = vadd.f32 0.0, %v2653
        %v2655 = vpop.f32.mrf.mxu0
        %v2656 = vpop.f32.mrf.mxu0
        %v2657 = vadd.f32 0.0, %v2656
        %v2658 = vpop.f32.mrf.mxu0
        %2659 = vdwg.mxu0
        %v2660 = vmul.f32 %v2646, 0.17677669
        %v2661 = vmul.f32 %v2649, 0.17677669
        %v2662 = vmul.f32 %v2654, 0.17677669
        %v2663 = vmul.f32 %v2657, 0.17677669
        %v2664 = vsel %vm1427, %v2660, -inf
        %2665 = vmax.xlane.f32.xlu0 %v2664
        %v2666 = vpop.xlane.xlu0 %2665
        %v2667 = vsel %vm1427, %v2661, -inf
        %2668 = vmax.xlane.f32.xlu0 %v2667
        %v2669 = vpop.xlane.xlu0 %2668
        %v2670 = vsel %vm1427, %v2662, -inf
        %2671 = vmax.xlane.f32.xlu0 %v2670
        %v2672 = vpop.xlane.xlu0 %2671
        %v2673 = vsel %vm1427, %v2663, -inf
        %2674 = vmax.xlane.f32.xlu0 %v2673
        %v2675 = vpop.xlane.xlu0 %2674
        %v2676 = vsub.f32 %v2660, %v2666
        %v2677 = vsub.f32 %v2661, %v2669
        %v2678 = vsub.f32 %v2662, %v2672
        %v2679 = vsub.f32 %v2663, %v2675
        %v2680 = vmul.f32 %v2676, 1.442695
        %v2681 = vpow.pop %v2680
        %v2682 = vmul.f32 %v2677, 1.442695
        %v2683 = vpow.pop %v2682
        %v2684 = vmul.f32 %v2678, 1.442695
        %v2685 = vpow.pop %v2684
        %v2686 = vmul.f32 %v2679, 1.442695
        %v2687 = vpow.pop %v2686
        %v2688 = vsel %vm1427, %v2681, 0.0
        %2689 = vadd.xlane.f32.xlu0 %v2688
        %v2690 = vpop.xlane.xlu0 %2689
        %v2691 = vsel %vm1427, %v2683, 0.0
        %2692 = vadd.xlane.f32.xlu0 %v2691
        %v2693 = vpop.xlane.xlu0 %2692
        %v2694 = vsel %vm1427, %v2685, 0.0
        %2695 = vadd.xlane.f32.xlu0 %v2694
        %v2696 = vpop.xlane.xlu0 %2695
        %v2697 = vsel %vm1427, %v2687, 0.0
        %2698 = vadd.xlane.f32.xlu0 %v2697
        %v2699 = vpop.xlane.xlu0 %2698
        %v2700 = vrcp.pop %v2690
        %v2701 = vrcp.pop %v2693
        %v2702 = vrcp.pop %v2696
        %v2703 = vrcp.pop %v2699
        %v2704 = vmul.f32 %v2681, %v2700
        %v2705 = vmul.f32 %v2683, %v2701
        %v2706 = vmul.f32 %v2685, %v2702
        %v2707 = vmul.f32 %v2687, %v2703
        %v2708 = vpack.c.bf16 %v2705, %v2704
        %v2709 = vpack.c.bf16 %v2707, %v2706
        %2710 = vrot.lane.b32.xlu0 %v2324, 64
        %v2711 = vpop.permute.xlu0 %2710
        %2712 = vrot.lane.b32.xlu0 %v2325, 64
        %v2713 = vpop.permute.xlu0 %2712
        %v2717 = vsel %vm1427, %v2708, 0
        %v2720 = vsel %vm1427, %v2709, 0
        %2722 = vmatprep.subr.bf16.mxu0 0
        %2723 = vmatpush1.bf16.msra.mxu0 0
        %2724 = vmatprep.subr.bf16.mxu0 0
        %2725 = vmatpush1.bf16.msra.mxu0 0
        %2726 = vmatprep.subr.bf16.mxu0 0
        %2727 = vmatpush1.bf16.msra.mxu0 0
        %2728 = vmatprep.subr.bf16.mxu0 0
        %2729 = vmatpush1.bf16.msra.mxu0 0
        %2730 = vmatprep.subr.bf16.mxu0 0
        %2731 = vmatpush1.bf16.msra.mxu0 0
        %2732 = vmatprep.subr.bf16.mxu0 0
        %2733 = vmatpush1.bf16.msra.mxu0 0
        %2734 = vmatprep.subr.bf16.mxu0 0
        %2735 = vmatpush1.bf16.msra.mxu0 %v2713
        %2736 = vmatprep.subr.bf16.mxu0 0
        %2737 = vmatpush1.bf16.msra.mxu0 %v2711
        %2738 = vmatprep.subr.bf16.mxu0 0
        %2739 = vmatpush2.bf16.msra.mxu0 0
        %2740 = vmatprep.subr.bf16.mxu0 0
        %2741 = vmatpush2.bf16.msra.mxu0 0
        %2742 = vmatprep.subr.bf16.mxu0 0
        %2743 = vmatpush2.bf16.msra.mxu0 0
        %2744 = vmatprep.subr.bf16.mxu0 0
        %2745 = vmatpush2.bf16.msra.mxu0 0
        %2746 = vmatprep.subr.bf16.mxu0 0
        %2747 = vmatpush2.bf16.msra.mxu0 0
        %2748 = vmatprep.subr.bf16.mxu0 0
        %2749 = vmatpush2.bf16.msra.mxu0 0
        %2750 = vmatprep.subr.bf16.mxu0 0
        %2751 = vmatpush2.bf16.msra.mxu0 0
        %2752 = vmatprep.subr.bf16.mxu0 0
        %2753 = vmatpush2.bf16.msra.mxu0 0
        %2754 = vmatprep.mubr.bf16.mxu0 0
        %2755 = vmatmul.mubr.bf16.gmra.mxu0 %v2717
        %v2756 = vpop.f32.mrf.mxu0
        %v2757 = vadd.f32 0.0, %v2756
        %v2758 = vpop.f32.mrf.mxu0
        %v2759 = vpop.f32.mrf.mxu0
        %v2760 = vadd.f32 0.0, %v2759
        %v2761 = vpop.f32.mrf.mxu0
        %2762 = vmatprep.mubr.bf16.mxu0 0
        %2763 = vmatmul.mubr.bf16.gmra.mxu0 %v2720
        %v2764 = vpop.f32.mrf.mxu0
        %v2765 = vadd.f32 0.0, %v2764
        %v2766 = vpop.f32.mrf.mxu0
        %v2767 = vpop.f32.mrf.mxu0
        %v2768 = vadd.f32 0.0, %v2767
        %v2769 = vpop.f32.mrf.mxu0
        %2770 = vdwg.mxu0
        %2775 = vrot.lane.b32.xlu0 %v2757, 64
        %v2776 = vpop.permute.xlu0 %2775
        %2777 = vrot.lane.b32.xlu0 %v2760, 64
        %v2778 = vpop.permute.xlu0 %2777
        %2779 = vrot.lane.b32.xlu0 %v2765, 64
        %v2780 = vpop.permute.xlu0 %2779
        %2781 = vrot.lane.b32.xlu0 %v2768, 64
        %v2782 = vpop.permute.xlu0 %2781
        %2787 = vst.msk [vmem:[#allocation3 + $0x20] sm:$0xff] %vm2003, %v2776
        %2788 = vst.msk [vmem:[#allocation3 + $0x28] sm:$0xff] %vm2003, %v2778
        %2789 = vst.msk [vmem:[#allocation3 + $0x30] sm:$0xff] %vm2003, %v2780
        %2790 = vst.msk [vmem:[#allocation3 + $0x38] sm:$0xff] %vm2003, %v2782
        %2791 = vrot.lane.b32.xlu0 %v2209, 32
        %v2792 = vpop.permute.xlu0 %2791
        %2793 = vrot.lane.b32.xlu0 %v2210, 32
        %v2794 = vpop.permute.xlu0 %2793
        %2795 = vrot.lane.b32.xlu0 %v2211, 32
        %v2796 = vpop.permute.xlu0 %2795
        %2797 = vrot.lane.b32.xlu0 %v2212, 32
        %v2798 = vpop.permute.xlu0 %2797
        %v2800 = vsel %vm1427, %v2792, 0
        %v2803 = vsel %vm1427, %v2794, 0
        %v2806 = vsel %vm1427, %v2796, 0
        %v2809 = vsel %vm1427, %v2798, 0
        %2811 = vmatprep.subr.bf16.mxu0 0
        %2812 = vmatpush1.bf16.xpose.msra.mxu0 0
        %2813 = vmatprep.subr.bf16.mxu0 0
        %2814 = vmatpush1.bf16.xpose.msra.mxu0 0
        %2815 = vmatprep.subr.bf16.mxu0 0
        %2816 = vmatpush1.bf16.xpose.msra.mxu0 0
        %2817 = vmatprep.subr.bf16.mxu0 0
        %2818 = vmatpush1.bf16.xpose.msra.mxu0 0
        %2819 = vmatprep.subr.bf16.mxu0 0
        %2820 = vmatpush1.bf16.xpose.msra.mxu0 0
        %2821 = vmatprep.subr.bf16.mxu0 0
        %2822 = vmatpush1.bf16.xpose.msra.mxu0 0
        %2823 = vmatprep.subr.bf16.mxu0 0
        %2824 = vmatpush1.bf16.xpose.msra.mxu0 %v2809
        %2825 = vmatprep.subr.bf16.mxu0 0
        %2826 = vmatpush1.bf16.xpose.msra.mxu0 %v2806
        %2827 = vmatprep.subr.bf16.mxu0 0
        %2828 = vmatpush2.bf16.xpose.msra.mxu0 0
        %2829 = vmatprep.subr.bf16.mxu0 0
        %2830 = vmatpush2.bf16.xpose.msra.mxu0 0
        %2831 = vmatprep.subr.bf16.mxu0 0
        %2832 = vmatpush2.bf16.xpose.msra.mxu0 0
        %2833 = vmatprep.subr.bf16.mxu0 0
        %2834 = vmatpush2.bf16.xpose.msra.mxu0 0
        %2835 = vmatprep.subr.bf16.mxu0 0
        %2836 = vmatpush2.bf16.xpose.msra.mxu0 0
        %2837 = vmatprep.subr.bf16.mxu0 0
        %2838 = vmatpush2.bf16.xpose.msra.mxu0 0
        %2839 = vmatprep.subr.bf16.mxu0 0
        %2840 = vmatpush2.bf16.xpose.msra.mxu0 0
        %2841 = vmatprep.subr.bf16.mxu0 0
        %2842 = vmatpush2.bf16.xpose.msra.mxu0 0
        %2843 = vmatprep.mubr.bf16.mxu0 0
        %2844 = vmatmul.mubr.bf16.gmra.mxu0 %v2800
        %v2845 = vpop.f32.mrf.mxu0
        %v2846 = vadd.f32 0.0, %v2845
        %v2847 = vpop.f32.mrf.mxu0
        %v2848 = vpop.f32.mrf.mxu0
        %v2849 = vadd.f32 0.0, %v2848
        %v2850 = vpop.f32.mrf.mxu0
        %2851 = vmatprep.mubr.bf16.mxu0 0
        %2852 = vmatmul.mubr.bf16.gmra.mxu0 %v2803
        %v2853 = vpop.f32.mrf.mxu0
        %v2854 = vadd.f32 0.0, %v2853
        %v2855 = vpop.f32.mrf.mxu0
        %v2856 = vpop.f32.mrf.mxu0
        %v2857 = vadd.f32 0.0, %v2856
        %v2858 = vpop.f32.mrf.mxu0
        %2859 = vdwg.mxu0
        %v2860 = vmul.f32 %v2846, 0.17677669
        %v2861 = vmul.f32 %v2849, 0.17677669
        %v2862 = vmul.f32 %v2854, 0.17677669
        %v2863 = vmul.f32 %v2857, 0.17677669
        %v2864 = vsel %vm1427, %v2860, -inf
        %2865 = vmax.xlane.f32.xlu0 %v2864
        %v2866 = vpop.xlane.xlu0 %2865
        %v2867 = vsel %vm1427, %v2861, -inf
        %2868 = vmax.xlane.f32.xlu0 %v2867
        %v2869 = vpop.xlane.xlu0 %2868
        %v2870 = vsel %vm1427, %v2862, -inf
        %2871 = vmax.xlane.f32.xlu0 %v2870
        %v2872 = vpop.xlane.xlu0 %2871
        %v2873 = vsel %vm1427, %v2863, -inf
        %2874 = vmax.xlane.f32.xlu0 %v2873
        %v2875 = vpop.xlane.xlu0 %2874
        %v2876 = vsub.f32 %v2860, %v2866
        %v2877 = vsub.f32 %v2861, %v2869
        %v2878 = vsub.f32 %v2862, %v2872
        %v2879 = vsub.f32 %v2863, %v2875
        %v2880 = vmul.f32 %v2876, 1.442695
        %v2881 = vpow.pop %v2880
        %v2882 = vmul.f32 %v2877, 1.442695
        %v2883 = vpow.pop %v2882
        %v2884 = vmul.f32 %v2878, 1.442695
        %v2885 = vpow.pop %v2884
        %v2886 = vmul.f32 %v2879, 1.442695
        %v2887 = vpow.pop %v2886
        %v2888 = vsel %vm1427, %v2881, 0.0
        %2889 = vadd.xlane.f32.xlu0 %v2888
        %v2890 = vpop.xlane.xlu0 %2889
        %v2891 = vsel %vm1427, %v2883, 0.0
        %2892 = vadd.xlane.f32.xlu0 %v2891
        %v2893 = vpop.xlane.xlu0 %2892
        %v2894 = vsel %vm1427, %v2885, 0.0
        %2895 = vadd.xlane.f32.xlu0 %v2894
        %v2896 = vpop.xlane.xlu0 %2895
        %v2897 = vsel %vm1427, %v2887, 0.0
        %2898 = vadd.xlane.f32.xlu0 %v2897
        %v2899 = vpop.xlane.xlu0 %2898
        %v2900 = vrcp.pop %v2890
        %v2901 = vrcp.pop %v2893
        %v2902 = vrcp.pop %v2896
        %v2903 = vrcp.pop %v2899
        %v2904 = vmul.f32 %v2881, %v2900
        %v2905 = vmul.f32 %v2883, %v2901
        %v2906 = vmul.f32 %v2885, %v2902
        %v2907 = vmul.f32 %v2887, %v2903
        %v2908 = vpack.c.bf16 %v2905, %v2904
        %v2909 = vpack.c.bf16 %v2907, %v2906
        %2910 = vrot.lane.b32.xlu0 %v2324, 32
        %v2911 = vpop.permute.xlu0 %2910
        %2912 = vrot.lane.b32.xlu0 %v2325, 32
        %v2913 = vpop.permute.xlu0 %2912
        %v2917 = vsel %vm1427, %v2908, 0
        %v2920 = vsel %vm1427, %v2909, 0
        %2922 = vmatprep.subr.bf16.mxu0 0
        %2923 = vmatpush1.bf16.msra.mxu0 0
        %2924 = vmatprep.subr.bf16.mxu0 0
        %2925 = vmatpush1.bf16.msra.mxu0 0
        %2926 = vmatprep.subr.bf16.mxu0 0
        %2927 = vmatpush1.bf16.msra.mxu0 0
        %2928 = vmatprep.subr.bf16.mxu0 0
        %2929 = vmatpush1.bf16.msra.mxu0 0
        %2930 = vmatprep.subr.bf16.mxu0 0
        %2931 = vmatpush1.bf16.msra.mxu0 0
        %2932 = vmatprep.subr.bf16.mxu0 0
        %2933 = vmatpush1.bf16.msra.mxu0 0
        %2934 = vmatprep.subr.bf16.mxu0 0
        %2935 = vmatpush1.bf16.msra.mxu0 %v2913
        %2936 = vmatprep.subr.bf16.mxu0 0
        %2937 = vmatpush1.bf16.msra.mxu0 %v2911
        %2938 = vmatprep.subr.bf16.mxu0 0
        %2939 = vmatpush2.bf16.msra.mxu0 0
        %2940 = vmatprep.subr.bf16.mxu0 0
        %2941 = vmatpush2.bf16.msra.mxu0 0
        %2942 = vmatprep.subr.bf16.mxu0 0
        %2943 = vmatpush2.bf16.msra.mxu0 0
        %2944 = vmatprep.subr.bf16.mxu0 0
        %2945 = vmatpush2.bf16.msra.mxu0 0
        %2946 = vmatprep.subr.bf16.mxu0 0
        %2947 = vmatpush2.bf16.msra.mxu0 0
        %2948 = vmatprep.subr.bf16.mxu0 0
        %2949 = vmatpush2.bf16.msra.mxu0 0
        %2950 = vmatprep.subr.bf16.mxu0 0
        %2951 = vmatpush2.bf16.msra.mxu0 0
        %2952 = vmatprep.subr.bf16.mxu0 0
        %2953 = vmatpush2.bf16.msra.mxu0 0
        %2954 = vmatprep.mubr.bf16.mxu0 0
        %2955 = vmatmul.mubr.bf16.gmra.mxu0 %v2917
        %v2956 = vpop.f32.mrf.mxu0
        %v2957 = vadd.f32 0.0, %v2956
        %v2958 = vpop.f32.mrf.mxu0
        %v2959 = vpop.f32.mrf.mxu0
        %v2960 = vadd.f32 0.0, %v2959
        %v2961 = vpop.f32.mrf.mxu0
        %2962 = vmatprep.mubr.bf16.mxu0 0
        %2963 = vmatmul.mubr.bf16.gmra.mxu0 %v2920
        %v2964 = vpop.f32.mrf.mxu0
        %v2965 = vadd.f32 0.0, %v2964
        %v2966 = vpop.f32.mrf.mxu0
        %v2967 = vpop.f32.mrf.mxu0
        %v2968 = vadd.f32 0.0, %v2967
        %v2969 = vpop.f32.mrf.mxu0
        %2970 = vdwg.mxu0
        %2975 = vrot.lane.b32.xlu0 %v2957, 96
        %v2976 = vpop.permute.xlu0 %2975
        %2977 = vrot.lane.b32.xlu0 %v2960, 96
        %v2978 = vpop.permute.xlu0 %2977
        %2979 = vrot.lane.b32.xlu0 %v2965, 96
        %v2980 = vpop.permute.xlu0 %2979
        %2981 = vrot.lane.b32.xlu0 %v2968, 96
        %v2982 = vpop.permute.xlu0 %2981
        %2987 = vst.msk [vmem:[#allocation3 + $0x20] sm:$0xff] %vm2204, %v2976
        %2988 = vst.msk [vmem:[#allocation3 + $0x28] sm:$0xff] %vm2204, %v2978
        %2989 = vst.msk [vmem:[#allocation3 + $0x30] sm:$0xff] %vm2204, %v2980
        %2990 = vst.msk [vmem:[#allocation3 + $0x38] sm:$0xff] %vm2204, %v2982
        %v2991 = vld [vmem:[#allocation3] sm:$0xff]
        %v2992 = vld [vmem:[#allocation3 + $0x8] sm:$0xff]
        %v2993 = vld [vmem:[#allocation3 + $0x10] sm:$0xff]
        %v2994 = vld [vmem:[#allocation3 + $0x18] sm:$0xff]
        %v2995 = vld [vmem:[#allocation3 + $0x20] sm:$0xff]
        %v2996 = vld [vmem:[#allocation3 + $0x28] sm:$0xff]
        %v2997 = vld [vmem:[#allocation3 + $0x30] sm:$0xff]
        %v2998 = vld [vmem:[#allocation3 + $0x38] sm:$0xff]
        %v2999 = vpack.c.bf16 %v2992, %v2991
        %v3000 = vpack.c.bf16 %v2994, %v2993
        %v3001 = vpack.c.bf16 %v2996, %v2995
        %v3002 = vpack.c.bf16 %v2998, %v2997
        %v3003 = vld [vmem:[%s740] sm:$0xf]
        %v3004 = vld [vmem:[%s740 + $0x4] sm:$0xf]
        %v3005 = vld [vmem:[%s740 + $0x8] sm:$0xf]
        %v3006 = vld [vmem:[%s740 + $0xc] sm:$0xf]
        %v3007 = vld [vmem:[%s740 + $0x10] sm:$0xf]
        %v3008 = vld [vmem:[%s740 + $0x14] sm:$0xf]
        %v3009 = vld [vmem:[%s740 + $0x18] sm:$0xf]
        %v3010 = vld [vmem:[%s740 + $0x1c] sm:$0xf]
        %v3011 = vld [vmem:[%s740 + $0x20] sm:$0xf]
        %v3012 = vld [vmem:[%s740 + $0x24] sm:$0xf]
        %v3013 = vld [vmem:[%s740 + $0x28] sm:$0xf]
        %v3014 = vld [vmem:[%s740 + $0x2c] sm:$0xf]
        %v3015 = vld [vmem:[%s740 + $0x30] sm:$0xf]
        %v3016 = vld [vmem:[%s740 + $0x34] sm:$0xf]
        %v3017 = vld [vmem:[%s740 + $0x38] sm:$0xf]
        %v3018 = vld [vmem:[%s740 + $0x3c] sm:$0xf]
        %v3019 = vld [vmem:[%s743] sm:$0x1]
        %v3021 = vlaneseq
        %v3022 = vshrl.u32 %v3021, 7
        %v3023 = vsub.s32 0, %v3022
        %v3024 = vrot.slane %v3019, %v3023
        %v3042 = vunpack.c.l.b16 %v3003
        %v3043 = vunpack.c.l.b16 %v3004
        %v3044 = vunpack.c.l.b16 %v3005
        %v3045 = vunpack.c.l.b16 %v3006
        %v3046 = vunpack.c.l.b16 %v3007
        %v3047 = vunpack.c.l.b16 %v3008
        %v3048 = vunpack.c.l.b16 %v3009
        %v3049 = vunpack.c.l.b16 %v3010
        %v3050 = vunpack.c.l.b16 %v3011
        %v3051 = vunpack.c.l.b16 %v3012
        %v3052 = vunpack.c.l.b16 %v3013
        %v3053 = vunpack.c.l.b16 %v3014
        %v3054 = vunpack.c.l.b16 %v3015
        %v3055 = vunpack.c.l.b16 %v3016
        %v3056 = vunpack.c.l.b16 %v3017
        %v3057 = vunpack.c.l.b16 %v3018
        %v3058 = vpack.c.b16 %v3043, %v3042
        %v3059 = vpack.c.b16 %v3045, %v3044
        %v3060 = vpack.c.b16 %v3047, %v3046
        %v3061 = vpack.c.b16 %v3049, %v3048
        %v3062 = vpack.c.b16 %v3051, %v3050
        %v3063 = vpack.c.b16 %v3053, %v3052
        %v3064 = vpack.c.b16 %v3055, %v3054
        %v3065 = vpack.c.b16 %v3057, %v3056
        %3074 = vmatprep.subr.bf16.mxu0 0
        %3075 = vmatpush1.bf16.msra.mxu0 %v3065
        %3076 = vmatprep.subr.bf16.mxu0 0
        %3077 = vmatpush1.bf16.msra.mxu0 %v3064
        %3078 = vmatprep.subr.bf16.mxu0 0
        %3079 = vmatpush1.bf16.msra.mxu0 %v3063
        %3080 = vmatprep.subr.bf16.mxu0 0
        %3081 = vmatpush1.bf16.msra.mxu0 %v3062
        %3082 = vmatprep.subr.bf16.mxu0 0
        %3083 = vmatpush1.bf16.msra.mxu0 %v3061
        %3084 = vmatprep.subr.bf16.mxu0 0
        %3085 = vmatpush1.bf16.msra.mxu0 %v3060
        %3086 = vmatprep.subr.bf16.mxu0 0
        %3087 = vmatpush1.bf16.msra.mxu0 %v3059
        %3088 = vmatprep.subr.bf16.mxu0 0
        %3089 = vmatpush1.bf16.msra.mxu0 %v3058
        %3090 = vmatprep.subr.bf16.mxu0 0
        %3091 = vmatpush2.bf16.msra.mxu0 0
        %3092 = vmatprep.subr.bf16.mxu0 0
        %3093 = vmatpush2.bf16.msra.mxu0 0
        %3094 = vmatprep.subr.bf16.mxu0 0
        %3095 = vmatpush2.bf16.msra.mxu0 0
        %3096 = vmatprep.subr.bf16.mxu0 0
        %3097 = vmatpush2.bf16.msra.mxu0 0
        %3098 = vmatprep.subr.bf16.mxu0 0
        %3099 = vmatpush2.bf16.msra.mxu0 0
        %3100 = vmatprep.subr.bf16.mxu0 0
        %3101 = vmatpush2.bf16.msra.mxu0 0
        %3102 = vmatprep.subr.bf16.mxu0 0
        %3103 = vmatpush2.bf16.msra.mxu0 0
        %3104 = vmatprep.subr.bf16.mxu0 0
        %3105 = vmatpush2.bf16.msra.mxu0 0
        %3106 = vmatprep.mubr.bf16.mxu0 0
        %3107 = vmatmul.mubr.bf16.gmra.mxu0 %v2999
        %v3108 = vpop.f32.mrf.mxu0
        %v3109 = vadd.f32 %v3024, %v3108
        %v3110 = vpop.f32.mrf.mxu0
        %v3111 = vpop.f32.mrf.mxu0
        %v3112 = vadd.f32 %v3024, %v3111
        %v3113 = vpop.f32.mrf.mxu0
        %3114 = vmatprep.mubr.bf16.mxu0 0
        %3115 = vmatmul.mubr.bf16.gmra.mxu0 %v3000
        %v3116 = vpop.f32.mrf.mxu0
        %v3117 = vadd.f32 %v3024, %v3116
        %v3118 = vpop.f32.mrf.mxu0
        %v3119 = vpop.f32.mrf.mxu0
        %v3120 = vadd.f32 %v3024, %v3119
        %v3121 = vpop.f32.mrf.mxu0
        %3122 = vmatprep.mubr.bf16.mxu0 0
        %3123 = vmatmul.mubr.bf16.gmra.mxu0 %v3001
        %v3124 = vpop.f32.mrf.mxu0
        %v3125 = vadd.f32 %v3024, %v3124
        %v3126 = vpop.f32.mrf.mxu0
        %v3127 = vpop.f32.mrf.mxu0
        %v3128 = vadd.f32 %v3024, %v3127
        %v3129 = vpop.f32.mrf.mxu0
        %3130 = vmatprep.mubr.bf16.mxu0 0
        %3131 = vmatmul.mubr.bf16.gmra.mxu0 %v3002
        %v3132 = vpop.f32.mrf.mxu0
        %v3133 = vadd.f32 %v3024, %v3132
        %v3134 = vpop.f32.mrf.mxu0
        %v3135 = vpop.f32.mrf.mxu0
        %v3136 = vadd.f32 %v3024, %v3135
        %v3137 = vpop.f32.mrf.mxu0
        %3138 = vdwg.mxu0
        %v3139 = vadd.f32 %v3109, %v977
        %v3140 = vadd.f32 %v3112, %v978
        %v3141 = vadd.f32 %v3117, %v979
        %v3142 = vadd.f32 %v3120, %v980
        %v3143 = vadd.f32 %v3125, %v981
        %v3144 = vadd.f32 %v3128, %v982
        %v3145 = vadd.f32 %v3133, %v983
        %v3146 = vadd.f32 %v3136, %v984
        %v3147 = vld [vmem:[%s746] sm:$0x1]
        %v3148 = vld [vmem:[%s749] sm:$0x1]
        %3149 = vadd.xlane.f32.xlu0 %v3139
        %v3150 = vpop.xlane.xlu0 %3149
        %3151 = vadd.xlane.f32.xlu0 %v3140
        %v3152 = vpop.xlane.xlu0 %3151
        %3153 = vadd.xlane.f32.xlu0 %v3141
        %v3154 = vpop.xlane.xlu0 %3153
        %3155 = vadd.xlane.f32.xlu0 %v3142
        %v3156 = vpop.xlane.xlu0 %3155
        %3157 = vadd.xlane.f32.xlu0 %v3143
        %v3158 = vpop.xlane.xlu0 %3157
        %3159 = vadd.xlane.f32.xlu0 %v3144
        %v3160 = vpop.xlane.xlu0 %3159
        %3161 = vadd.xlane.f32.xlu0 %v3145
        %v3162 = vpop.xlane.xlu0 %3161
        %3163 = vadd.xlane.f32.xlu0 %v3146
        %v3164 = vpop.xlane.xlu0 %3163
        %v3165 = vmul.f32 %v3150, %v1003
        %v3166 = vmul.f32 %v3152, %v1003
        %v3167 = vmul.f32 %v3154, %v1003
        %v3168 = vmul.f32 %v3156, %v1003
        %v3169 = vmul.f32 %v3158, %v1003
        %v3170 = vmul.f32 %v3160, %v1003
        %v3171 = vmul.f32 %v3162, %v1003
        %v3172 = vmul.f32 %v3164, %v1003
        %v3173 = vsub.f32 %v3139, %v3165
        %v3174 = vsub.f32 %v3140, %v3166
        %v3175 = vsub.f32 %v3141, %v3167
        %v3176 = vsub.f32 %v3142, %v3168
        %v3177 = vsub.f32 %v3143, %v3169
        %v3178 = vsub.f32 %v3144, %v3170
        %v3179 = vsub.f32 %v3145, %v3171
        %v3180 = vsub.f32 %v3146, %v3172
        %v3181 = vmul.f32 %v3173, %v3173
        %v3182 = vmul.f32 %v3174, %v3174
        %v3183 = vmul.f32 %v3175, %v3175
        %v3184 = vmul.f32 %v3176, %v3176
        %v3185 = vmul.f32 %v3177, %v3177
        %v3186 = vmul.f32 %v3178, %v3178
        %v3187 = vmul.f32 %v3179, %v3179
        %v3188 = vmul.f32 %v3180, %v3180
        %3189 = vadd.xlane.f32.xlu0 %v3181
        %v3190 = vpop.xlane.xlu0 %3189
        %3191 = vadd.xlane.f32.xlu0 %v3182
        %v3192 = vpop.xlane.xlu0 %3191
        %3193 = vadd.xlane.f32.xlu0 %v3183
        %v3194 = vpop.xlane.xlu0 %3193
        %3195 = vadd.xlane.f32.xlu0 %v3184
        %v3196 = vpop.xlane.xlu0 %3195
        %3197 = vadd.xlane.f32.xlu0 %v3185
        %v3198 = vpop.xlane.xlu0 %3197
        %3199 = vadd.xlane.f32.xlu0 %v3186
        %v3200 = vpop.xlane.xlu0 %3199
        %3201 = vadd.xlane.f32.xlu0 %v3187
        %v3202 = vpop.xlane.xlu0 %3201
        %3203 = vadd.xlane.f32.xlu0 %v3188
        %v3204 = vpop.xlane.xlu0 %3203
        %v3205 = vmul.f32 %v3190, %v1003
        %v3206 = vmul.f32 %v3192, %v1003
        %v3207 = vmul.f32 %v3194, %v1003
        %v3208 = vmul.f32 %v3196, %v1003
        %v3209 = vmul.f32 %v3198, %v1003
        %v3210 = vmul.f32 %v3200, %v1003
        %v3211 = vmul.f32 %v3202, %v1003
        %v3212 = vmul.f32 %v3204, %v1003
        %v3213 = vadd.f32 %v3205, 1e-06
        %v3214 = vadd.f32 %v3206, 1e-06
        %v3215 = vadd.f32 %v3207, 1e-06
        %v3216 = vadd.f32 %v3208, 1e-06
        %v3217 = vadd.f32 %v3209, 1e-06
        %v3218 = vadd.f32 %v3210, 1e-06
        %v3219 = vadd.f32 %v3211, 1e-06
        %v3220 = vadd.f32 %v3212, 1e-06
        %v3221 = vrsqrt.pop %v3213
        %v3222 = vrsqrt.pop %v3214
        %v3223 = vrsqrt.pop %v3215
        %v3224 = vrsqrt.pop %v3216
        %v3225 = vrsqrt.pop %v3217
        %v3226 = vrsqrt.pop %v3218
        %v3227 = vrsqrt.pop %v3219
        %v3228 = vrsqrt.pop %v3220
        %v3229 = vmul.f32 %v3173, %v3221
        %v3230 = vmul.f32 %v3174, %v3222
        %v3231 = vmul.f32 %v3175, %v3223
        %v3232 = vmul.f32 %v3176, %v3224
        %v3233 = vmul.f32 %v3177, %v3225
        %v3234 = vmul.f32 %v3178, %v3226
        %v3235 = vmul.f32 %v3179, %v3227
        %v3236 = vmul.f32 %v3180, %v3228
        %v3238 = vlaneseq
        %v3239 = vshrl.u32 %v3238, 7
        %v3240 = vsub.s32 0, %v3239
        %v3241 = vrot.slane %v3147, %v3240
        %v3243 = vmul.f32 %v3229, %v3241
        %v3244 = vmul.f32 %v3230, %v3241
        %v3245 = vmul.f32 %v3231, %v3241
        %v3246 = vmul.f32 %v3232, %v3241
        %v3247 = vmul.f32 %v3233, %v3241
        %v3248 = vmul.f32 %v3234, %v3241
        %v3249 = vmul.f32 %v3235, %v3241
        %v3250 = vmul.f32 %v3236, %v3241
        %v3252 = vlaneseq
        %v3253 = vshrl.u32 %v3252, 7
        %v3254 = vsub.s32 0, %v3253
        %v3255 = vrot.slane %v3148, %v3254
        %v3257 = vadd.f32 %v3243, %v3255
        %v3258 = vadd.f32 %v3244, %v3255
        %v3259 = vadd.f32 %v3245, %v3255
        %v3260 = vadd.f32 %v3246, %v3255
        %v3261 = vadd.f32 %v3247, %v3255
        %v3262 = vadd.f32 %v3248, %v3255
        %v3263 = vadd.f32 %v3249, %v3255
        %v3264 = vadd.f32 %v3250, %v3255
        %v3265 = vpack.c.bf16 %v3258, %v3257
        %v3266 = vpack.c.bf16 %v3260, %v3259
        %v3267 = vpack.c.bf16 %v3262, %v3261
        %v3268 = vpack.c.bf16 %v3264, %v3263
        %v3269 = vld [vmem:[%s754] sm:$0xff]
        %v3270 = vld [vmem:[%s754 + $0x8] sm:$0xff]
        %v3271 = vld [vmem:[%s754 + $0x10] sm:$0xff]
        %v3272 = vld [vmem:[%s754 + $0x18] sm:$0xff]
        %v3273 = vld [vmem:[%s754 + $0x20] sm:$0xff]
        %v3274 = vld [vmem:[%s754 + $0x28] sm:$0xff]
        %v3275 = vld [vmem:[%s754 + $0x30] sm:$0xff]
        %v3276 = vld [vmem:[%s754 + $0x38] sm:$0xff]
        %v3277 = vld [vmem:[%s754 + $0x40] sm:$0xff]
        %v3278 = vld [vmem:[%s754 + $0x48] sm:$0xff]
        %v3279 = vld [vmem:[%s754 + $0x50] sm:$0xff]
        %v3280 = vld [vmem:[%s754 + $0x58] sm:$0xff]
        %v3281 = vld [vmem:[%s754 + $0x60] sm:$0xff]
        %v3282 = vld [vmem:[%s754 + $0x68] sm:$0xff]
        %v3283 = vld [vmem:[%s754 + $0x70] sm:$0xff]
        %v3284 = vld [vmem:[%s754 + $0x78] sm:$0xff]
        %v3285 = vld [vmem:[%s758] sm:$0x3]
        %v3287 = vlaneseq
        %v3288 = vshrl.u32 %v3287, 7
        %v3289 = vsub.s32 0, %v3288
        %v3290 = vrot.slane %v3285, %v3289
        %v3291 = vlaneseq
        %v3292 = vshrl.u32 %v3291, 7
        %v3293 = vsub.s32 1, %v3292
        %v3294 = vrot.slane %v3285, %v3293
        %v3313 = vunpack.c.l.b16 %v3269
        %v3314 = vunpack.c.h.b16 %v3269
        %v3315 = vunpack.c.l.b16 %v3270
        %v3316 = vunpack.c.h.b16 %v3270
        %v3317 = vunpack.c.l.b16 %v3271
        %v3318 = vunpack.c.h.b16 %v3271
        %v3319 = vunpack.c.l.b16 %v3272
        %v3320 = vunpack.c.h.b16 %v3272
        %v3321 = vunpack.c.l.b16 %v3273
        %v3322 = vunpack.c.h.b16 %v3273
        %v3323 = vunpack.c.l.b16 %v3274
        %v3324 = vunpack.c.h.b16 %v3274
        %v3325 = vunpack.c.l.b16 %v3275
        %v3326 = vunpack.c.h.b16 %v3275
        %v3327 = vunpack.c.l.b16 %v3276
        %v3328 = vunpack.c.h.b16 %v3276
        %v3329 = vunpack.c.l.b16 %v3277
        %v3330 = vunpack.c.h.b16 %v3277
        %v3331 = vunpack.c.l.b16 %v3278
        %v3332 = vunpack.c.h.b16 %v3278
        %v3333 = vunpack.c.l.b16 %v3279
        %v3334 = vunpack.c.h.b16 %v3279
        %v3335 = vunpack.c.l.b16 %v3280
        %v3336 = vunpack.c.h.b16 %v3280
        %v3337 = vunpack.c.l.b16 %v3281
        %v3338 = vunpack.c.h.b16 %v3281
        %v3339 = vunpack.c.l.b16 %v3282
        %v3340 = vunpack.c.h.b16 %v3282
        %v3341 = vunpack.c.l.b16 %v3283
        %v3342 = vunpack.c.h.b16 %v3283
        %v3343 = vunpack.c.l.b16 %v3284
        %v3344 = vunpack.c.h.b16 %v3284
        %v3345 = vpack.c.b16 %v3315, %v3313
        %v3346 = vpack.c.b16 %v3316, %v3314
        %v3347 = vpack.c.b16 %v3319, %v3317
        %v3348 = vpack.c.b16 %v3320, %v3318
        %v3349 = vpack.c.b16 %v3323, %v3321
        %v3350 = vpack.c.b16 %v3324, %v3322
        %v3351 = vpack.c.b16 %v3327, %v3325
        %v3352 = vpack.c.b16 %v3328, %v3326
        %v3353 = vpack.c.b16 %v3331, %v3329
        %v3354 = vpack.c.b16 %v3332, %v3330
        %v3355 = vpack.c.b16 %v3335, %v3333
        %v3356 = vpack.c.b16 %v3336, %v3334
        %v3357 = vpack.c.b16 %v3339, %v3337
        %v3358 = vpack.c.b16 %v3340, %v3338
        %v3359 = vpack.c.b16 %v3343, %v3341
        %v3360 = vpack.c.b16 %v3344, %v3342
        %3377 = vmatprep.subr.bf16.mxu0 %v3360
        %3378 = vmatpush1.bf16.msra.mxu0 %v3359
        %3379 = vmatprep.subr.bf16.mxu0 %v3358
        %3380 = vmatpush1.bf16.msra.mxu0 %v3357
        %3381 = vmatprep.subr.bf16.mxu0 %v3356
        %3382 = vmatpush1.bf16.msra.mxu0 %v3355
        %3383 = vmatprep.subr.bf16.mxu0 %v3354
        %3384 = vmatpush1.bf16.msra.mxu0 %v3353
        %3385 = vmatprep.subr.bf16.mxu0 %v3352
        %3386 = vmatpush1.bf16.msra.mxu0 %v3351
        %3387 = vmatprep.subr.bf16.mxu0 %v3350
        %3388 = vmatpush1.bf16.msra.mxu0 %v3349
        %3389 = vmatprep.subr.bf16.mxu0 %v3348
        %3390 = vmatpush1.bf16.msra.mxu0 %v3347
        %3391 = vmatprep.subr.bf16.mxu0 %v3346
        %3392 = vmatpush1.bf16.msra.mxu0 %v3345
        %3393 = vmatprep.subr.bf16.mxu0 0
        %3394 = vmatpush2.bf16.msra.mxu0 0
        %3395 = vmatprep.subr.bf16.mxu0 0
        %3396 = vmatpush2.bf16.msra.mxu0 0
        %3397 = vmatprep.subr.bf16.mxu0 0
        %3398 = vmatpush2.bf16.msra.mxu0 0
        %3399 = vmatprep.subr.bf16.mxu0 0
        %3400 = vmatpush2.bf16.msra.mxu0 0
        %3401 = vmatprep.subr.bf16.mxu0 0
        %3402 = vmatpush2.bf16.msra.mxu0 0
        %3403 = vmatprep.subr.bf16.mxu0 0
        %3404 = vmatpush2.bf16.msra.mxu0 0
        %3405 = vmatprep.subr.bf16.mxu0 0
        %3406 = vmatpush2.bf16.msra.mxu0 0
        %3407 = vmatprep.subr.bf16.mxu0 0
        %3408 = vmatpush2.bf16.msra.mxu0 0
        %3409 = vmatprep.mubr.bf16.mxu0 0
        %3410 = vmatmul.mubr.bf16.gmra.mxu0 %v3265
        %v3411 = vpop.f32.mrf.mxu0
        %v3412 = vadd.f32 %v3290, %v3411
        %v3413 = vpop.f32.mrf.mxu0
        %v3414 = vadd.f32 %v3294, %v3413
        %v3415 = vpop.f32.mrf.mxu0
        %v3416 = vadd.f32 %v3290, %v3415
        %v3417 = vpop.f32.mrf.mxu0
        %v3418 = vadd.f32 %v3294, %v3417
        %3419 = vmatprep.mubr.bf16.mxu0 0
        %3420 = vmatmul.mubr.bf16.gmra.mxu0 %v3266
        %v3421 = vpop.f32.mrf.mxu0
        %v3422 = vadd.f32 %v3290, %v3421
        %v3423 = vpop.f32.mrf.mxu0
        %v3424 = vadd.f32 %v3294, %v3423
        %v3425 = vpop.f32.mrf.mxu0
        %v3426 = vadd.f32 %v3290, %v3425
        %v3427 = vpop.f32.mrf.mxu0
        %v3428 = vadd.f32 %v3294, %v3427
        %3429 = vmatprep.mubr.bf16.mxu0 0
        %3430 = vmatmul.mubr.bf16.gmra.mxu0 %v3267
        %v3431 = vpop.f32.mrf.mxu0
        %v3432 = vadd.f32 %v3290, %v3431
        %v3433 = vpop.f32.mrf.mxu0
        %v3434 = vadd.f32 %v3294, %v3433
        %v3435 = vpop.f32.mrf.mxu0
        %v3436 = vadd.f32 %v3290, %v3435
        %v3437 = vpop.f32.mrf.mxu0
        %v3438 = vadd.f32 %v3294, %v3437
        %3439 = vmatprep.mubr.bf16.mxu0 0
        %3440 = vmatmul.mubr.bf16.gmra.mxu0 %v3268
        %v3441 = vpop.f32.mrf.mxu0
        %v3442 = vadd.f32 %v3290, %v3441
        %v3443 = vpop.f32.mrf.mxu0
        %v3444 = vadd.f32 %v3294, %v3443
        %v3445 = vpop.f32.mrf.mxu0
        %v3446 = vadd.f32 %v3290, %v3445
        %v3447 = vpop.f32.mrf.mxu0
        %v3448 = vadd.f32 %v3294, %v3447
        %3449 = vdwg.mxu0
        %v3450 = vmul.f32 %v3412, 0.5
        %v3451 = vmul.f32 %v3414, 0.5
        %v3452 = vmul.f32 %v3416, 0.5
        %v3453 = vmul.f32 %v3418, 0.5
        %v3454 = vmul.f32 %v3422, 0.5
        %v3455 = vmul.f32 %v3424, 0.5
        %v3456 = vmul.f32 %v3426, 0.5
        %v3457 = vmul.f32 %v3428, 0.5
        %v3458 = vmul.f32 %v3432, 0.5
        %v3459 = vmul.f32 %v3434, 0.5
        %v3460 = vmul.f32 %v3436, 0.5
        %v3461 = vmul.f32 %v3438, 0.5
        %v3462 = vmul.f32 %v3442, 0.5
        %v3463 = vmul.f32 %v3444, 0.5
        %v3464 = vmul.f32 %v3446, 0.5
        %v3465 = vmul.f32 %v3448, 0.5
        %v3466 = vmul.f32 %v3412, 0.044715
        %v3467 = vmul.f32 %v3414, 0.044715
        %v3468 = vmul.f32 %v3416, 0.044715
        %v3469 = vmul.f32 %v3418, 0.044715
        %v3470 = vmul.f32 %v3422, 0.044715
        %v3471 = vmul.f32 %v3424, 0.044715
        %v3472 = vmul.f32 %v3426, 0.044715
        %v3473 = vmul.f32 %v3428, 0.044715
        %v3474 = vmul.f32 %v3432, 0.044715
        %v3475 = vmul.f32 %v3434, 0.044715
        %v3476 = vmul.f32 %v3436, 0.044715
        %v3477 = vmul.f32 %v3438, 0.044715
        %v3478 = vmul.f32 %v3442, 0.044715
        %v3479 = vmul.f32 %v3444, 0.044715
        %v3480 = vmul.f32 %v3446, 0.044715
        %v3481 = vmul.f32 %v3448, 0.044715
        %v3482 = vmul.f32 %v3466, %v3412
        %v3483 = vmul.f32 %v3467, %v3414
        %v3484 = vmul.f32 %v3468, %v3416
        %v3485 = vmul.f32 %v3469, %v3418
        %v3486 = vmul.f32 %v3470, %v3422
        %v3487 = vmul.f32 %v3471, %v3424
        %v3488 = vmul.f32 %v3472, %v3426
        %v3489 = vmul.f32 %v3473, %v3428
        %v3490 = vmul.f32 %v3474, %v3432
        %v3491 = vmul.f32 %v3475, %v3434
        %v3492 = vmul.f32 %v3476, %v3436
        %v3493 = vmul.f32 %v3477, %v3438
        %v3494 = vmul.f32 %v3478, %v3442
        %v3495 = vmul.f32 %v3479, %v3444
        %v3496 = vmul.f32 %v3480, %v3446
        %v3497 = vmul.f32 %v3481, %v3448
        %v3498 = vmul.f32 %v3482, %v3412
        %v3499 = vmul.f32 %v3483, %v3414
        %v3500 = vmul.f32 %v3484, %v3416
        %v3501 = vmul.f32 %v3485, %v3418
        %v3502 = vmul.f32 %v3486, %v3422
        %v3503 = vmul.f32 %v3487, %v3424
        %v3504 = vmul.f32 %v3488, %v3426
        %v3505 = vmul.f32 %v3489, %v3428
        %v3506 = vmul.f32 %v3490, %v3432
        %v3507 = vmul.f32 %v3491, %v3434
        %v3508 = vmul.f32 %v3492, %v3436
        %v3509 = vmul.f32 %v3493, %v3438
        %v3510 = vmul.f32 %v3494, %v3442
        %v3511 = vmul.f32 %v3495, %v3444
        %v3512 = vmul.f32 %v3496, %v3446
        %v3513 = vmul.f32 %v3497, %v3448
        %v3514 = vadd.f32 %v3412, %v3498
        %v3515 = vadd.f32 %v3414, %v3499
        %v3516 = vadd.f32 %v3416, %v3500
        %v3517 = vadd.f32 %v3418, %v3501
        %v3518 = vadd.f32 %v3422, %v3502
        %v3519 = vadd.f32 %v3424, %v3503
        %v3520 = vadd.f32 %v3426, %v3504
        %v3521 = vadd.f32 %v3428, %v3505
        %v3522 = vadd.f32 %v3432, %v3506
        %v3523 = vadd.f32 %v3434, %v3507
        %v3524 = vadd.f32 %v3436, %v3508
        %v3525 = vadd.f32 %v3438, %v3509
        %v3526 = vadd.f32 %v3442, %v3510
        %v3527 = vadd.f32 %v3444, %v3511
        %v3528 = vadd.f32 %v3446, %v3512
        %v3529 = vadd.f32 %v3448, %v3513
        %v3530 = vmul.f32 %v3514, 0.7978846
        %v3531 = vmul.f32 %v3515, 0.7978846
        %v3532 = vmul.f32 %v3516, 0.7978846
        %v3533 = vmul.f32 %v3517, 0.7978846
        %v3534 = vmul.f32 %v3518, 0.7978846
        %v3535 = vmul.f32 %v3519, 0.7978846
        %v3536 = vmul.f32 %v3520, 0.7978846
        %v3537 = vmul.f32 %v3521, 0.7978846
        %v3538 = vmul.f32 %v3522, 0.7978846
        %v3539 = vmul.f32 %v3523, 0.7978846
        %v3540 = vmul.f32 %v3524, 0.7978846
        %v3541 = vmul.f32 %v3525, 0.7978846
        %v3542 = vmul.f32 %v3526, 0.7978846
        %v3543 = vmul.f32 %v3527, 0.7978846
        %v3544 = vmul.f32 %v3528, 0.7978846
        %v3545 = vmul.f32 %v3529, 0.7978846
        %v3546 = vtanh.pop %v3530
        %v3547 = vtanh.pop %v3531
        %v3548 = vtanh.pop %v3532
        %v3549 = vtanh.pop %v3533
        %v3550 = vtanh.pop %v3534
        %v3551 = vtanh.pop %v3535
        %v3552 = vtanh.pop %v3536
        %v3553 = vtanh.pop %v3537
        %v3554 = vtanh.pop %v3538
        %v3555 = vtanh.pop %v3539
        %v3556 = vtanh.pop %v3540
        %v3557 = vtanh.pop %v3541
        %v3558 = vtanh.pop %v3542
        %v3559 = vtanh.pop %v3543
        %v3560 = vtanh.pop %v3544
        %v3561 = vtanh.pop %v3545
        %v3562 = vadd.f32 %v3546, 1.0
        %v3563 = vadd.f32 %v3547, 1.0
        %v3564 = vadd.f32 %v3548, 1.0
        %v3565 = vadd.f32 %v3549, 1.0
        %v3566 = vadd.f32 %v3550, 1.0
        %v3567 = vadd.f32 %v3551, 1.0
        %v3568 = vadd.f32 %v3552, 1.0
        %v3569 = vadd.f32 %v3553, 1.0
        %v3570 = vadd.f32 %v3554, 1.0
        %v3571 = vadd.f32 %v3555, 1.0
        %v3572 = vadd.f32 %v3556, 1.0
        %v3573 = vadd.f32 %v3557, 1.0
        %v3574 = vadd.f32 %v3558, 1.0
        %v3575 = vadd.f32 %v3559, 1.0
        %v3576 = vadd.f32 %v3560, 1.0
        %v3577 = vadd.f32 %v3561, 1.0
        %v3578 = vmul.f32 %v3450, %v3562
        %v3579 = vmul.f32 %v3451, %v3563
        %v3580 = vmul.f32 %v3452, %v3564
        %v3581 = vmul.f32 %v3453, %v3565
        %v3582 = vmul.f32 %v3454, %v3566
        %v3583 = vmul.f32 %v3455, %v3567
        %v3584 = vmul.f32 %v3456, %v3568
        %v3585 = vmul.f32 %v3457, %v3569
        %v3586 = vmul.f32 %v3458, %v3570
        %v3587 = vmul.f32 %v3459, %v3571
        %v3588 = vmul.f32 %v3460, %v3572
        %v3589 = vmul.f32 %v3461, %v3573
        %v3590 = vmul.f32 %v3462, %v3574
        %v3591 = vmul.f32 %v3463, %v3575
        %v3592 = vmul.f32 %v3464, %v3576
        %v3593 = vmul.f32 %v3465, %v3577
        %v3594 = vpack.c.bf16 %v3580, %v3578
        %v3595 = vpack.c.bf16 %v3581, %v3579
        %v3596 = vpack.c.bf16 %v3584, %v3582
        %v3597 = vpack.c.bf16 %v3585, %v3583
        %v3598 = vpack.c.bf16 %v3588, %v3586
        %v3599 = vpack.c.bf16 %v3589, %v3587
        %v3600 = vpack.c.bf16 %v3592, %v3590
        %v3601 = vpack.c.bf16 %v3593, %v3591
        %v3602 = vld [vmem:[%s763] sm:$0xf]
        %v3603 = vld [vmem:[%s763 + $0x4] sm:$0xf]
        %v3604 = vld [vmem:[%s763 + $0x8] sm:$0xf]
        %v3605 = vld [vmem:[%s763 + $0xc] sm:$0xf]
        %v3606 = vld [vmem:[%s763 + $0x10] sm:$0xf]
        %v3607 = vld [vmem:[%s763 + $0x14] sm:$0xf]
        %v3608 = vld [vmem:[%s763 + $0x18] sm:$0xf]
        %v3609 = vld [vmem:[%s763 + $0x1c] sm:$0xf]
        %v3610 = vld [vmem:[%s763 + $0x20] sm:$0xf]
        %v3611 = vld [vmem:[%s763 + $0x24] sm:$0xf]
        %v3612 = vld [vmem:[%s763 + $0x28] sm:$0xf]
        %v3613 = vld [vmem:[%s763 + $0x2c] sm:$0xf]
        %v3614 = vld [vmem:[%s763 + $0x30] sm:$0xf]
        %v3615 = vld [vmem:[%s763 + $0x34] sm:$0xf]
        %v3616 = vld [vmem:[%s763 + $0x38] sm:$0xf]
        %v3617 = vld [vmem:[%s763 + $0x3c] sm:$0xf]
        %v3618 = vld [vmem:[%s763 + $0x40] sm:$0xf]
        %v3619 = vld [vmem:[%s763 + $0x44] sm:$0xf]
        %v3620 = vld [vmem:[%s763 + $0x48] sm:$0xf]
        %v3621 = vld [vmem:[%s763 + $0x4c] sm:$0xf]
        %v3622 = vld [vmem:[%s763 + $0x50] sm:$0xf]
        %v3623 = vld [vmem:[%s763 + $0x54] sm:$0xf]
        %v3624 = vld [vmem:[%s763 + $0x58] sm:$0xf]
        %v3625 = vld [vmem:[%s763 + $0x5c] sm:$0xf]
        %v3626 = vld [vmem:[%s763 + $0x60] sm:$0xf]
        %v3627 = vld [vmem:[%s763 + $0x64] sm:$0xf]
        %v3628 = vld [vmem:[%s763 + $0x68] sm:$0xf]
        %v3629 = vld [vmem:[%s763 + $0x6c] sm:$0xf]
        %v3630 = vld [vmem:[%s763 + $0x70] sm:$0xf]
        %v3631 = vld [vmem:[%s763 + $0x74] sm:$0xf]
        %v3632 = vld [vmem:[%s763 + $0x78] sm:$0xf]
        %v3633 = vld [vmem:[%s763 + $0x7c] sm:$0xf]
        %v3634 = vld [vmem:[%s766] sm:$0x1]
        %v3636 = vlaneseq
        %v3637 = vshrl.u32 %v3636, 7
        %v3638 = vsub.s32 0, %v3637
        %v3639 = vrot.slane %v3634, %v3638
        %v3673 = vunpack.c.l.b16 %v3602
        %v3674 = vunpack.c.l.b16 %v3603
        %v3675 = vunpack.c.l.b16 %v3604
        %v3676 = vunpack.c.l.b16 %v3605
        %v3677 = vunpack.c.l.b16 %v3606
        %v3678 = vunpack.c.l.b16 %v3607
        %v3679 = vunpack.c.l.b16 %v3608
        %v3680 = vunpack.c.l.b16 %v3609
        %v3681 = vunpack.c.l.b16 %v3610
        %v3682 = vunpack.c.l.b16 %v3611
        %v3683 = vunpack.c.l.b16 %v3612
        %v3684 = vunpack.c.l.b16 %v3613
        %v3685 = vunpack.c.l.b16 %v3614
        %v3686 = vunpack.c.l.b16 %v3615
        %v3687 = vunpack.c.l.b16 %v3616
        %v3688 = vunpack.c.l.b16 %v3617
        %v3689 = vunpack.c.l.b16 %v3618
        %v3690 = vunpack.c.l.b16 %v3619
        %v3691 = vunpack.c.l.b16 %v3620
        %v3692 = vunpack.c.l.b16 %v3621
        %v3693 = vunpack.c.l.b16 %v3622
        %v3694 = vunpack.c.l.b16 %v3623
        %v3695 = vunpack.c.l.b16 %v3624
        %v3696 = vunpack.c.l.b16 %v3625
        %v3697 = vunpack.c.l.b16 %v3626
        %v3698 = vunpack.c.l.b16 %v3627
        %v3699 = vunpack.c.l.b16 %v3628
        %v3700 = vunpack.c.l.b16 %v3629
        %v3701 = vunpack.c.l.b16 %v3630
        %v3702 = vunpack.c.l.b16 %v3631
        %v3703 = vunpack.c.l.b16 %v3632
        %v3704 = vunpack.c.l.b16 %v3633
        %v3705 = vpack.c.b16 %v3674, %v3673
        %v3706 = vpack.c.b16 %v3676, %v3675
        %v3707 = vpack.c.b16 %v3678, %v3677
        %v3708 = vpack.c.b16 %v3680, %v3679
        %v3709 = vpack.c.b16 %v3682, %v3681
        %v3710 = vpack.c.b16 %v3684, %v3683
        %v3711 = vpack.c.b16 %v3686, %v3685
        %v3712 = vpack.c.b16 %v3688, %v3687
        %v3713 = vpack.c.b16 %v3690, %v3689
        %v3714 = vpack.c.b16 %v3692, %v3691
        %v3715 = vpack.c.b16 %v3694, %v3693
        %v3716 = vpack.c.b16 %v3696, %v3695
        %v3717 = vpack.c.b16 %v3698, %v3697
        %v3718 = vpack.c.b16 %v3700, %v3699
        %v3719 = vpack.c.b16 %v3702, %v3701
        %v3720 = vpack.c.b16 %v3704, %v3703
        %3737 = vmatprep.subr.bf16.mxu0 0
        %3738 = vmatpush1.bf16.msra.mxu0 %v3712
        %3739 = vmatprep.subr.bf16.mxu0 0
        %3740 = vmatpush1.bf16.msra.mxu0 %v3711
        %3741 = vmatprep.subr.bf16.mxu0 0
        %3742 = vmatpush1.bf16.msra.mxu0 %v3710
        %3743 = vmatprep.subr.bf16.mxu0 0
        %3744 = vmatpush1.bf16.msra.mxu0 %v3709
        %3745 = vmatprep.subr.bf16.mxu0 0
        %3746 = vmatpush1.bf16.msra.mxu0 %v3708
        %3747 = vmatprep.subr.bf16.mxu0 0
        %3748 = vmatpush1.bf16.msra.mxu0 %v3707
        %3749 = vmatprep.subr.bf16.mxu0 0
        %3750 = vmatpush1.bf16.msra.mxu0 %v3706
        %3751 = vmatprep.subr.bf16.mxu0 0
        %3752 = vmatpush1.bf16.msra.mxu0 %v3705
        %3753 = vmatprep.subr.bf16.mxu0 0
        %3754 = vmatpush2.bf16.msra.mxu0 %v3720
        %3755 = vmatprep.subr.bf16.mxu0 0
        %3756 = vmatpush2.bf16.msra.mxu0 %v3719
        %3757 = vmatprep.subr.bf16.mxu0 0
        %3758 = vmatpush2.bf16.msra.mxu0 %v3718
        %3759 = vmatprep.subr.bf16.mxu0 0
        %3760 = vmatpush2.bf16.msra.mxu0 %v3717
        %3761 = vmatprep.subr.bf16.mxu0 0
        %3762 = vmatpush2.bf16.msra.mxu0 %v3716
        %3763 = vmatprep.subr.bf16.mxu0 0
        %3764 = vmatpush2.bf16.msra.mxu0 %v3715
        %3765 = vmatprep.subr.bf16.mxu0 0
        %3766 = vmatpush2.bf16.msra.mxu0 %v3714
        %3767 = vmatprep.subr.bf16.mxu0 0
        %3768 = vmatpush2.bf16.msra.mxu0 %v3713
        %3769 = vmatprep.mubr.bf16.mxu0 %v3595
        %3770 = vmatmul.mubr.bf16.gmra.mxu0 %v3594
        %v3771 = vpop.f32.mrf.mxu0
        %v3772 = vadd.f32 %v3639, %v3771
        %v3773 = vpop.f32.mrf.mxu0
        %v3774 = vpop.f32.mrf.mxu0
        %v3775 = vadd.f32 %v3639, %v3774
        %v3776 = vpop.f32.mrf.mxu0
        %3777 = vmatprep.mubr.bf16.mxu0 %v3597
        %3778 = vmatmul.mubr.bf16.gmra.mxu0 %v3596
        %v3779 = vpop.f32.mrf.mxu0
        %v3780 = vadd.f32 %v3639, %v3779
        %v3781 = vpop.f32.mrf.mxu0
        %v3782 = vpop.f32.mrf.mxu0
        %v3783 = vadd.f32 %v3639, %v3782
        %v3784 = vpop.f32.mrf.mxu0
        %3785 = vmatprep.mubr.bf16.mxu0 %v3599
        %3786 = vmatmul.mubr.bf16.gmra.mxu0 %v3598
        %v3787 = vpop.f32.mrf.mxu0
        %v3788 = vadd.f32 %v3639, %v3787
        %v3789 = vpop.f32.mrf.mxu0
        %v3790 = vpop.f32.mrf.mxu0
        %v3791 = vadd.f32 %v3639, %v3790
        %v3792 = vpop.f32.mrf.mxu0
        %3793 = vmatprep.mubr.bf16.mxu0 %v3601
        %3794 = vmatmul.mubr.bf16.gmra.mxu0 %v3600
        %v3795 = vpop.f32.mrf.mxu0
        %v3796 = vadd.f32 %v3639, %v3795
        %v3797 = vpop.f32.mrf.mxu0
        %v3798 = vpop.f32.mrf.mxu0
        %v3799 = vadd.f32 %v3639, %v3798
        %v3800 = vpop.f32.mrf.mxu0
        %3801 = vdwg.mxu0
        %v3802 = vadd.f32 %v3772, %v3139
        %v3803 = vadd.f32 %v3775, %v3140
        %v3804 = vadd.f32 %v3780, %v3141
        %v3805 = vadd.f32 %v3783, %v3142
        %v3806 = vadd.f32 %v3788, %v3143
        %v3807 = vadd.f32 %v3791, %v3144
        %v3808 = vadd.f32 %v3796, %v3145
        %v3809 = vadd.f32 %v3799, %v3146
        %3810 = vst [vmem:[#allocation2] sm:$0xff] %v3802
        %3811 = vst [vmem:[#allocation2 + $0x8] sm:$0xff] %v3803
        %3812 = vst [vmem:[#allocation2 + $0x10] sm:$0xff] %v3804
        %3813 = vst [vmem:[#allocation2 + $0x18] sm:$0xff] %v3805
        %3814 = vst [vmem:[#allocation2 + $0x20] sm:$0xff] %v3806
        %3815 = vst [vmem:[#allocation2 + $0x28] sm:$0xff] %v3807
        %3816 = vst [vmem:[#allocation2 + $0x30] sm:$0xff] %v3808
        %3817 = vst [vmem:[#allocation2 + $0x38] sm:$0xff] %v3809
        %p3818 = scmp.eq.s32.totalorder %s31, 1
        // Predicated region
        $region101: #{passt_forward.5} parent=95 // pred_check
          %p3819 = pneg %p3818
        $region102: #{passt_forward.5} parent=95 // pred_check_branch
          %3821 = sbr.rel (%p3819) target = $region104
        $region103: #{passt_forward.5} parent=95 // pred_region
          %v3823 = vrot.slane %v3806, 7
          %vm3825 = vcmask 1040384
          %v3826 = vsel %vm3825, %v3802, %v3823
          %v3828 = vrot.slane %v3802, 1
          %v3830 = vsel %vm3825, %v3828, %v3806
          %v3831 = vld [vmem:[%s17] sm:$0x1]
          %v3832 = vld [vmem:[%s18] sm:$0x1]
          %vm3833 = vcmask 1041408
          %v3834 = vsel %vm3833, %v3826, 0.0
          %3835 = vadd.xlane.f32.xlu0 %v3834
          %v3836 = vpop.xlane.xlu0 %3835
          %v3837 = vmul.f32 %v3836, %v1003
          %v3838 = vsub.f32 %v3826, %v3837
          %v3839 = vmul.f32 %v3838, %v3838
          %v3840 = vsel %vm3833, %v3839, 0.0
          %3841 = vadd.xlane.f32.xlu0 %v3840
          %v3842 = vpop.xlane.xlu0 %3841
          %v3843 = vmul.f32 %v3842, %v1003
          %v3844 = vadd.f32 %v3843, 1e-06
          %v3845 = vrsqrt.pop %v3844
          %v3846 = vmul.f32 %v3838, %v3845
          %v3848 = vlaneseq
          %v3849 = vshrl.u32 %v3848, 7
          %v3850 = vsub.s32 0, %v3849
          %v3851 = vrot.slane %v3831, %v3850
          %v3853 = vmul.f32 %v3846, %v3851
          %v3855 = vlaneseq
          %v3856 = vshrl.u32 %v3855, 7
          %v3857 = vsub.s32 0, %v3856
          %v3858 = vrot.slane %v3832, %v3857
          %v3860 = vadd.f32 %v3853, %v3858
          %v3861 = vsel %vm3833, %v3830, 0.0
          %3862 = vadd.xlane.f32.xlu0 %v3861
          %v3863 = vpop.xlane.xlu0 %3862
          %v3864 = vmul.f32 %v3863, %v1003
          %v3865 = vsub.f32 %v3830, %v3864
          %v3866 = vmul.f32 %v3865, %v3865
          %v3867 = vsel %vm3833, %v3866, 0.0
          %3868 = vadd.xlane.f32.xlu0 %v3867
          %v3869 = vpop.xlane.xlu0 %3868
          %v3870 = vmul.f32 %v3869, %v1003
          %v3871 = vadd.f32 %v3870, 1e-06
          %v3872 = vrsqrt.pop %v3871
          %v3873 = vmul.f32 %v3865, %v3872
          %v3874 = vmul.f32 %v3873, %v3851
          %v3875 = vadd.f32 %v3874, %v3858
          %v3876 = vadd.f32 %v3860, %v3875
          %v3877 = vmul.f32 %v3876, 0.5
          %3878 = vst [vmem:[#allocation4] sm:$0x3] %v3877
        $region104: #{passt_forward.5} parent=95 // pred_fallthru
          _
        // Predicated region
        $region105: #{passt_forward.5} parent=95 // pred_check
          %p3879 = pneg %p503
        $region106: #{passt_forward.5} parent=95 // pred_check_branch
          %3881 = sbr.rel (%p3879) target = $region108
        $region107: #{passt_forward.5} parent=95 // pred_region
          %s3883 = ssub.s32 32, 32
          %3884 = vsyncadd [#allocation5], %s3883
          %s3886 = sshll.u32 [#allocation4], 4
          %s3887 = int_to_ptr.vmem [resolvable:$true] %s3886
          %3889 = dma.vmem_to_hbm [thread:$0]  %s3887, 32, %s19, [#allocation5]
        $region108: #{passt_forward.5} parent=95 // pred_fallthru
          _
        // Predicated region
        $region109: #{passt_forward.5} parent=95 // pred_check
          %p3890 = pneg %p503
        $region110: #{passt_forward.5} parent=95 // pred_check_branch
          %3892 = sbr.rel (%p3890) target = $region112
        $region111: #{passt_forward.5} parent=95 // pred_region
          %3893 = dma.done [#allocation5], 32
        $region112: #{passt_forward.5} parent=95 // pred_fallthru
          _
      $region96: #{passt_forward.5} parent=5 // pred_fallthru
        _
      %p3894 = scmp.le.s32.totalorder 2, %s26
      // Predicated region
      $region113: #{passt_forward.5} parent=5 // pred_check
        %p3895 = pneg %p3894
      $region114: #{passt_forward.5} parent=5 // pred_check_branch
        %3897 = sbr.rel (%p3895) target = $region116
      $region115: #{passt_forward.5} parent=5 // pred_region
        %s3898 = ssub.s32 %s26, 2
      $region116: #{passt_forward.5} parent=5 // pred_fallthru
        _
    $region6: #{passt_forward.5} parent=1 // loop_footer
      %s30 = sadd.s32 1, %s26
    $region7: #{passt_forward.5} parent=1 // loop_footer_branch
      %25 = sbr.rel target = $region3
    $region8: #{passt_forward.5} parent=1 // loop_exit
      _
    %3899 = vsyncpa [#allocation5], 1
    %s3900 = scalar_lea.sflag [#allocation5], 1
    %3901 = vsyncpa %s3900, 1

</llo_original>
